<compile_context>
chip_gen: v5e
topology: v5e:2x2
jax: 0.10.0
libtpu: 0.0.40
codegen_flags: <defaults>
</compile_context>

<pallas_src>
import functools

import jax
import jax.numpy as jnp
from jax import lax
from jax.experimental import pallas as pl
from jax.experimental.pallas import tpu as pltpu


def _round_up(x, m):
    return ((x + m - 1) // m) * m


# ----------------------------------------------------------------------------
# Fused kernel: batched input projection + LSTM recurrence + batched head.
# Gate block order in the padded weights is [i | f | o | g] (see pad_params).
# ----------------------------------------------------------------------------
def lstm_head_kernel(emb_ref, w_ih_ref, w_hh_ref, b_ref, w_lin_ref, b_lin_ref,
                     out_ref, gx_ref, hs_ref, *, dim_out):
    """One batch block of the fused LSTM + head.

    emb_ref   : (T, TB, Ep)    bf16 time-major padded embeddings
    w_ih_ref  : (Ep, 4*Hp)     bf16, gate blocks [i|f|o|g], padding zero
    w_hh_ref  : (Hp, 4*Hp)     bf16, padded rows / gate columns zero
    b_ref     : (1, 4*Hp)      f32, b_ih + b_hh, zero in padded lanes
    w_lin_ref : (Hp, Dp)       bf16, padded rows / cols zero
    b_lin_ref : (1, Dp)        f32
    out_ref   : (T, TB, Dp)    f32 log_softmax (time-major; reordered outside)
    gx_ref    : (T, TB, 4*Hp)  f32 VMEM scratch — hoisted input projection
    hs_ref    : (T, TB, Hp)    f32 VMEM scratch — per-step hidden states
    """
    seq, tb, ep = emb_ref.shape
    hp = w_hh_ref.shape[0]
    dp = w_lin_ref.shape[1]

    # --- (1) Hoisted input projection: one bf16 MXU matmul over all T*TB rows.
    emb2 = emb_ref[...].reshape(seq * tb, ep)          # tile-aligned fold
    gx = jnp.dot(emb2, w_ih_ref[...], preferred_element_type=jnp.float32)
    gx_ref[...] = (gx + b_ref[...]).reshape(seq, tb, 4 * hp)

    # --- (2) Serial recurrence: only the (TB,Hp)x(Hp,4Hp) matmul + pointwise
    #         gates stay on the time-serial critical path.
    def step(t, carry):
        h_b, c = carry                                 # h carried bf16, c f32
        gates = gx_ref[t] + jnp.dot(h_b, w_hh_ref[...],
                                    preferred_element_type=jnp.float32)
        sig = jax.nn.sigmoid(gates[:, :3 * hp])        # one wide pass: i, f, o
        i_g = sig[:, 0 * hp:1 * hp]
        f_g = sig[:, 1 * hp:2 * hp]
        o_g = sig[:, 2 * hp:3 * hp]
        g_g = jnp.tanh(gates[:, 3 * hp:4 * hp])
        c = f_g * c + i_g * g_g
        h_f = o_g * jnp.tanh(c)
        hs_ref[t] = h_f                                # contiguous leading store
        return h_f.astype(jnp.bfloat16), c

    h0 = jnp.zeros((tb, hp), jnp.bfloat16)
    c0 = jnp.zeros((tb, hp), jnp.float32)
    # Small static T: fully unroll for LLO visibility. For T >> 16 pass a
    # modest int unroll factor instead to bound instruction count / vregs.
    lax.fori_loop(0, seq, step, (h0, c0), unroll=True)

    # --- (3) Batched head: ONE matmul + ONE masked log_softmax + dense store.
    hs = hs_ref[...].reshape(seq * tb, hp).astype(jnp.bfloat16)
    logits = jnp.dot(hs, w_lin_ref[...],
                     preferred_element_type=jnp.float32) + b_lin_ref[...]
    valid = lax.broadcasted_iota(jnp.int32, (1, dp), 1) < dim_out
    logits = jnp.where(valid, logits, -1e30)
    m = jnp.max(logits, axis=1, keepdims=True)
    z = logits - m
    lse = jnp.log(jnp.sum(jnp.exp(z), axis=1, keepdims=True))
    out_ref[...] = (z - lse).reshape(seq, tb, dp)


def lstm_head_forward(emb_tm, w_ih, w_hh, b_lstm, w_lin, b_lin, *, dim_out,
                      batch_block=None):
    seq, bp, ep = emb_tm.shape
    hp = w_hh.shape[0]
    dp = w_lin.shape[1]
    tb = bp if batch_block is None else batch_block
    assert bp % tb == 0 and tb % 16 == 0
    kernel = functools.partial(lstm_head_kernel, dim_out=dim_out)
    # TODO(synk): for non-toy B*T, additionally tile the time axis (an
    # "arbitrary" grid dim carrying h/c in persistent VMEM scratch) so the emb
    # DMA pipelines under the recurrence instead of residing fully in VMEM.
    return pl.pallas_call(
        kernel,
        out_shape=jax.ShapeDtypeStruct((seq, bp, dp), jnp.float32),
        grid_spec=pltpu.PrefetchScalarGridSpec(
            num_scalar_prefetch=0,
            grid=(bp // tb,),
            in_specs=[
                pl.BlockSpec((seq, tb, ep), lambda b: (0, b, 0)),
                pl.BlockSpec((ep, 4 * hp), lambda b: (0, 0)),
                pl.BlockSpec((hp, 4 * hp), lambda b: (0, 0)),
                pl.BlockSpec((1, 4 * hp), lambda b: (0, 0)),
                pl.BlockSpec((hp, dp), lambda b: (0, 0)),
                pl.BlockSpec((1, dp), lambda b: (0, 0)),
            ],
            out_specs=pl.BlockSpec((seq, tb, dp), lambda b: (0, b, 0)),
            scratch_shapes=[
                pltpu.VMEM((seq, tb, 4 * hp), jnp.float32),   # gx
                pltpu.VMEM((seq, tb, hp), jnp.float32),       # hidden states
            ],
        ),
        compiler_params=pltpu.CompilerParams(
            dimension_semantics=("parallel",),        # batch blocks -> v7x TCs
            vmem_limit_bytes=32 * 1024 * 1024,
        ),
    )(emb_tm, w_ih, w_hh, b_lstm, w_lin, b_lin)


# ----------------------------------------------------------------------------
# Full forward: embedding gather (XLA glue) -> fused Pallas kernel -> reorder.
# ----------------------------------------------------------------------------
def lstm_seq_cls_forward(x_ids, params, *, dim_out):
    b, t = x_ids.shape
    bp = _round_up(b, 16)                               # >=16 sublanes for bf16
    ids = jnp.zeros((bp, t), x_ids.dtype).at[:b, :].set(x_ids)
    # TODO(synk): fuse this gather into the kernel (emb_table in pl.ANY + scalar
    # prefetched ids / per-row DMA) once B*T is large enough to be HBM-bound.
    emb_tm = params["emb_table"][ids.T]                 # (T, Bp, Ep) bf16
    out_tm = lstm_head_forward(
        emb_tm, params["w_ih"], params["w_hh"], params["b_lstm"],
        params["w_lin"], params["b_lin"], dim_out=dim_out)       # (T, Bp, Dp)
    out = jnp.transpose(out_tm, (1, 0, 2))[:b]                   # (B, T, Dp)
    # (B, T, Dp) -> (B*T, dim_out): matches PyTorch encodes.reshape(-1, H) order.
    return out.reshape(b * t, -1)[:, :dim_out]


# ----------------------------------------------------------------------------
# Parameters: raw (unpadded, PyTorch-equivalent, f32) + padded kernel layout.
# ----------------------------------------------------------------------------
def init_raw_params(key, max_features, dim_out, embed_dim=300, hidden=100):
    ks = jax.random.split(key, 7)
    s = 0.1
    return {
        "emb_table": s * jax.random.normal(ks[0], (max_features, embed_dim), jnp.float32),
        # PyTorch stores weight_ih (4H, E) / weight_hh (4H, H); we keep the
        # transposed (E, 4H) / (H, 4H) layout, gate order i, f, g, o.
        "w_ih": s * jax.random.normal(ks[1], (embed_dim, 4 * hidden), jnp.float32),
        "w_hh": s * jax.random.normal(ks[2], (hidden, 4 * hidden), jnp.float32),
        "b_lstm": (s * jax.random.normal(ks[3], (4 * hidden,), jnp.float32)
                   + s * jax.random.normal(ks[4], (4 * hidden,), jnp.float32)
                   ).reshape(1, 4 * hidden),
        "w_lin": s * jax.random.normal(ks[5], (hidden, dim_out), jnp.float32),
        "b_lin": s * jax.random.normal(ks[6], (dim_out,), jnp.float32).reshape(1, dim_out),
    }


def pad_params(raw):
    """Repack into lane/sublane-aligned, bf16 (matmul operands) kernel layout.

    Gate blocks are reordered PyTorch [i, f, g, o] -> kernel [i, f, o, g].
    Zero padding keeps the padded hidden lanes exactly zero through the
    recurrence (f=i=o=sigmoid(0)=0.5 but g=tanh(0)=0 and c starts at 0).
    """
    e, four_h = raw["w_ih"].shape
    h = four_h // 4
    d = raw["w_lin"].shape[1]
    ep = _round_up(e, 128)
    hp = _round_up(h, 128)
    dp = _round_up(max(d, 1), 128)

    perm = (0, 1, 3, 2)   # dest gate block k <- source gate perm[k]
    w_ih_p = jnp.zeros((ep, 4 * hp), jnp.float32)
    w_hh_p = jnp.zeros((hp, 4 * hp), jnp.float32)
    b_p = jnp.zeros((1, 4 * hp), jnp.float32)
    for k, src in enumerate(perm):
        w_ih_p = w_ih_p.at[:e, k * hp:k * hp + h].set(raw["w_ih"][:, src * h:(src + 1) * h])
        w_hh_p = w_hh_p.at[:h, k * hp:k * hp + h].set(raw["w_hh"][:, src * h:(src + 1) * h])
        b_p = b_p.at[:, k * hp:k * hp + h].set(raw["b_lstm"][:, src * h:(src + 1) * h])
    w_lin_p = jnp.zeros((hp, dp), jnp.float32).at[:h, :d].set(raw["w_lin"])
    b_lin_p = jnp.zeros((1, dp), jnp.float32).at[:, :d].set(raw["b_lin"])
    emb_p = jnp.zeros((raw["emb_table"].shape[0], ep), jnp.float32
                      ).at[:, :e].set(raw["emb_table"])

    return {
        "emb_table": emb_p.astype(jnp.bfloat16),
        "w_ih": w_ih_p.astype(jnp.bfloat16),
        "w_hh": w_hh_p.astype(jnp.bfloat16),
        "b_lstm": b_p,                        # f32
        "w_lin": w_lin_p.astype(jnp.bfloat16),
        "b_lin": b_lin_p,                     # f32
    }


# ----------------------------------------------------------------------------
# Pure-JAX f32 reference (unpadded) for correctness checking.
# ----------------------------------------------------------------------------
def reference_forward(x_ids, raw):
    emb = raw["emb_table"][x_ids]                    # (B, T, E)
    b, t, _ = emb.shape
    h_dim = raw["w_hh"].shape[0]
    h = jnp.zeros((b, h_dim), jnp.float32)
    c = jnp.zeros((b, h_dim), jnp.float32)
    hs = []
    for ti in range(t):
        gates = emb[:, ti, :] @ raw["w_ih"] + h @ raw["w_hh"] + raw["b_lstm"]
        i_g = jax.nn.sigmoid(gates[:, 0 * h_dim:1 * h_dim])
        f_g = jax.nn.sigmoid(gates[:, 1 * h_dim:2 * h_dim])
        g_g = jnp.tanh(gates[:, 2 * h_dim:3 * h_dim])
        o_g = jax.nn.sigmoid(gates[:, 3 * h_dim:4 * h_dim])
        c = f_g * c + i_g * g_g
        h = o_g * jnp.tanh(c)
        hs.append(h)
    enc = jnp.stack(hs, axis=1).reshape(b * t, h_dim)     # (b, t) row order
    logits = enc @ raw["w_lin"] + raw["b_lin"]
    return jax.nn.log_softmax(logits, axis=1)


if __name__ == "__main__":
    MAX_FEATURES = 50
    DIM_OUT = 4
    B, T = 2, 8

    key = jax.random.PRNGKey(0)
    k_param, k_ids = jax.random.split(key)
    raw = init_raw_params(k_param, MAX_FEATURES, DIM_OUT)
    params = pad_params(raw)
    x_ids = jax.random.randint(k_ids, (B, T), 0, MAX_FEATURES, dtype=jnp.int32)

    fwd = jax.jit(functools.partial(lstm_seq_cls_forward, dim_out=DIM_OUT))
    out = jax.block_until_ready(fwd(x_ids, params))

    assert out.shape == (B * T, DIM_OUT), out.shape
    # log_softmax rows must exponentiate-and-sum to ~1
    assert jnp.allclose(jnp.exp(out).sum(axis=1), 1.0, atol=1e-4)
    # match the unpadded pure-f32 reference (tolerance loosened for bf16 MXU ops)
    ref = reference_forward(x_ids, raw)
    assert jnp.allclose(out, ref, atol=2e-2, rtol=2e-2), \
        float(jnp.max(jnp.abs(out - ref)))
    print("KERNEL_OK")
</pallas_src>

<mosaic_0001>
module attributes {stable_mosaic.version = 11 : i64} {
  func.func @lstm_head_kernel(%arg0: i32, %arg1: memref<8x16x384xbf16, #tpu.memory_space<vmem>>, %arg2: memref<384x512xbf16, #tpu.memory_space<vmem>>, %arg3: memref<128x512xbf16, #tpu.memory_space<vmem>>, %arg4: memref<1x512xf32, #tpu.memory_space<vmem>>, %arg5: memref<128x128xbf16, #tpu.memory_space<vmem>>, %arg6: memref<1x128xf32, #tpu.memory_space<vmem>>, %arg7: memref<8x16x128xf32, #tpu.memory_space<vmem>>, %arg8: memref<8x16x512xf32, #tpu.memory_space<vmem>>, %arg9: memref<8x16x128xf32, #tpu.memory_space<vmem>>) attributes {dimension_semantics = [#tpu.dimension_semantics<parallel>], iteration_bounds = array<i64: 1>, scalar_prefetch = 0 : i64, scratch_operands = 2 : i64, tpu.core_type = #tpu.core_type<tc>, window_params = [{transform_indices = @transform_0, window_bounds = array<i64: 8, 16, 384>}, {pipeline_mode = #tpu.pipeline_mode<synchronous>, transform_indices = @transform_1, window_bounds = array<i64: 384, 512>}, {pipeline_mode = #tpu.pipeline_mode<synchronous>, transform_indices = @transform_2, window_bounds = array<i64: 128, 512>}, {pipeline_mode = #tpu.pipeline_mode<synchronous>, transform_indices = @transform_3, window_bounds = array<i64: 1, 512>}, {pipeline_mode = #tpu.pipeline_mode<synchronous>, transform_indices = @transform_4, window_bounds = array<i64: 128, 128>}, {pipeline_mode = #tpu.pipeline_mode<synchronous>, transform_indices = @transform_5, window_bounds = array<i64: 1, 128>}, {transform_indices = @transform_6, window_bounds = array<i64: 8, 16, 128>}]} {
    %c0 = arith.constant 0 : index
    %c0_0 = arith.constant 0 : index
    %c0_1 = arith.constant 0 : index
    %0 = vector.load %arg1[%c0, %c0_0, %c0_1] : memref<8x16x384xbf16, #tpu.memory_space<vmem>>, vector<8x16x384xbf16>
    %1 = vector.shape_cast %0 : vector<8x16x384xbf16> to vector<128x384xbf16>
    %c0_2 = arith.constant 0 : index
    %c0_3 = arith.constant 0 : index
    %2 = vector.load %arg2[%c0_2, %c0_3] : memref<384x512xbf16, #tpu.memory_space<vmem>>, vector<384x512xbf16>
    %cst = arith.constant dense<0.000000e+00> : vector<128x512xf32>
    %3 = tpu.matmul %1, %2, %cst {dimension_numbers = #tpu.dot_dimension_numbers<[1], [0], [0], [1], [0, 0, 1, 1], [], []>} : vector<128x384xbf16>, vector<384x512xbf16>, vector<128x512xf32> -> vector<128x512xf32>
    %c0_4 = arith.constant 0 : index
    %c0_5 = arith.constant 0 : index
    %4 = vector.load %arg4[%c0_4, %c0_5] : memref<1x512xf32, #tpu.memory_space<vmem>>, vector<1x512xf32>
    %5 = vector.broadcast %4 : vector<1x512xf32> to vector<128x512xf32>
    %6 = arith.addf %3, %5 : vector<128x512xf32>
    %7 = vector.shape_cast %6 : vector<128x512xf32> to vector<8x16x512xf32>
    %c0_6 = arith.constant 0 : index
    %c0_7 = arith.constant 0 : index
    %c0_8 = arith.constant 0 : index
    %8 = vector.load %arg8[%c0_6, %c0_7, %c0_8] : memref<8x16x512xf32, #tpu.memory_space<vmem>>, vector<8x16x512xf32>
    tpu.vector_store %arg8[%c0_6, %c0_7, %c0_8], %7 {strides = array<i32>} : memref<8x16x512xf32, #tpu.memory_space<vmem>>, vector<8x16x512xf32>,
    %cst_9 = arith.constant 0.000000e+00 : bf16
    %9 = vector.broadcast %cst_9 : bf16 to vector<16x128xbf16>
    %cst_10 = arith.constant 0.000000e+00 : f32
    %10 = vector.broadcast %cst_10 : f32 to vector<16x128xf32>
    %c0_i32 = arith.constant 0 : i32
    %11 = arith.index_cast %c0_i32 : i32 to index
    %c0_11 = arith.constant 0 : index
    %c0_12 = arith.constant 0 : index
    %12 = vector.load %arg8[%11, %c0_11, %c0_12] : memref<8x16x512xf32, #tpu.memory_space<vmem>>, vector<1x16x512xf32>
    %13 = vector.shape_cast %12 : vector<1x16x512xf32> to vector<16x512xf32>
    %c0_13 = arith.constant 0 : index
    %c0_14 = arith.constant 0 : index
    %14 = vector.load %arg3[%c0_13, %c0_14] : memref<128x512xbf16, #tpu.memory_space<vmem>>, vector<128x512xbf16>
    %cst_15 = arith.constant dense<0.000000e+00> : vector<16x512xf32>
    %15 = tpu.matmul %9, %14, %cst_15 {dimension_numbers = #tpu.dot_dimension_numbers<[1], [0], [0], [1], [0, 0, 1, 1], [], []>} : vector<16x128xbf16>, vector<128x512xbf16>, vector<16x512xf32> -> vector<16x512xf32>
    %16 = arith.addf %13, %15 : vector<16x512xf32>
    %17 = vector.extract_strided_slice %16 {offsets = [0, 0], sizes = [16, 384], strides = [1, 1]} : vector<16x512xf32> to vector<16x384xf32>
    %18 = arith.negf %17 : vector<16x384xf32>
    %19 = math.exp %18 : vector<16x384xf32>
    %cst_16 = arith.constant 1.000000e+00 : f32
    %20 = vector.broadcast %cst_16 : f32 to vector<16x384xf32>
    %21 = arith.addf %20, %19 : vector<16x384xf32>
    %22 = arith.divf %20, %21 : vector<16x384xf32>
    %23 = vector.extract_strided_slice %22 {offsets = [0, 0], sizes = [16, 128], strides = [1, 1]} : vector<16x384xf32> to vector<16x128xf32>
    %24 = vector.extract_strided_slice %22 {offsets = [0, 128], sizes = [16, 128], strides = [1, 1]} : vector<16x384xf32> to vector<16x128xf32>
    %25 = vector.extract_strided_slice %22 {offsets = [0, 256], sizes = [16, 128], strides = [1, 1]} : vector<16x384xf32> to vector<16x128xf32>
    %26 = vector.extract_strided_slice %16 {offsets = [0, 384], sizes = [16, 128], strides = [1, 1]} : vector<16x512xf32> to vector<16x128xf32>
    %27 = math.tanh %26 : vector<16x128xf32>
    %28 = arith.mulf %24, %10 : vector<16x128xf32>
    %29 = arith.mulf %23, %27 : vector<16x128xf32>
    %30 = arith.addf %28, %29 : vector<16x128xf32>
    %31 = math.tanh %30 : vector<16x128xf32>
    %32 = arith.mulf %25, %31 : vector<16x128xf32>
    %33 = arith.index_cast %c0_i32 : i32 to index
    %c0_17 = arith.constant 0 : index
    %c0_18 = arith.constant 0 : index
    %34 = vector.load %arg9[%33, %c0_17, %c0_18] : memref<8x16x128xf32, #tpu.memory_space<vmem>>, vector<1x16x128xf32>
    %35 = vector.shape_cast %34 : vector<1x16x128xf32> to vector<16x128xf32>
    %36 = vector.shape_cast %32 : vector<16x128xf32> to vector<1x16x128xf32>
    tpu.vector_store %arg9[%33, %c0_17, %c0_18], %36 {strides = array<i32>} : memref<8x16x128xf32, #tpu.memory_space<vmem>>, vector<1x16x128xf32>,
    %37 = arith.truncf %32 : vector<16x128xf32> to vector<16x128xbf16>
    %c1_i32 = arith.constant 1 : i32
    %38 = arith.index_cast %c1_i32 : i32 to index
    %c0_19 = arith.constant 0 : index
    %c0_20 = arith.constant 0 : index
    %39 = vector.load %arg8[%38, %c0_19, %c0_20] : memref<8x16x512xf32, #tpu.memory_space<vmem>>, vector<1x16x512xf32>
    %40 = vector.shape_cast %39 : vector<1x16x512xf32> to vector<16x512xf32>
    %c0_21 = arith.constant 0 : index
    %c0_22 = arith.constant 0 : index
    %41 = vector.load %arg3[%c0_21, %c0_22] : memref<128x512xbf16, #tpu.memory_space<vmem>>, vector<128x512xbf16>
    %cst_23 = arith.constant dense<0.000000e+00> : vector<16x512xf32>
    %42 = tpu.matmul %37, %41, %cst_23 {dimension_numbers = #tpu.dot_dimension_numbers<[1], [0], [0], [1], [0, 0, 1, 1], [], []>} : vector<16x128xbf16>, vector<128x512xbf16>, vector<16x512xf32> -> vector<16x512xf32>
    %43 = arith.addf %40, %42 : vector<16x512xf32>
    %44 = vector.extract_strided_slice %43 {offsets = [0, 0], sizes = [16, 384], strides = [1, 1]} : vector<16x512xf32> to vector<16x384xf32>
    %45 = arith.negf %44 : vector<16x384xf32>
    %46 = math.exp %45 : vector<16x384xf32>
    %cst_24 = arith.constant 1.000000e+00 : f32
    %47 = vector.broadcast %cst_24 : f32 to vector<16x384xf32>
    %48 = arith.addf %47, %46 : vector<16x384xf32>
    %49 = arith.divf %47, %48 : vector<16x384xf32>
    %50 = vector.extract_strided_slice %49 {offsets = [0, 0], sizes = [16, 128], strides = [1, 1]} : vector<16x384xf32> to vector<16x128xf32>
    %51 = vector.extract_strided_slice %49 {offsets = [0, 128], sizes = [16, 128], strides = [1, 1]} : vector<16x384xf32> to vector<16x128xf32>
    %52 = vector.extract_strided_slice %49 {offsets = [0, 256], sizes = [16, 128], strides = [1, 1]} : vector<16x384xf32> to vector<16x128xf32>
    %53 = vector.extract_strided_slice %43 {offsets = [0, 384], sizes = [16, 128], strides = [1, 1]} : vector<16x512xf32> to vector<16x128xf32>
    %54 = math.tanh %53 : vector<16x128xf32>
    %55 = arith.mulf %51, %30 : vector<16x128xf32>
    %56 = arith.mulf %50, %54 : vector<16x128xf32>
    %57 = arith.addf %55, %56 : vector<16x128xf32>
    %58 = math.tanh %57 : vector<16x128xf32>
    %59 = arith.mulf %52, %58 : vector<16x128xf32>
    %60 = arith.index_cast %c1_i32 : i32 to index
    %c0_25 = arith.constant 0 : index
    %c0_26 = arith.constant 0 : index
    %61 = vector.load %arg9[%60, %c0_25, %c0_26] : memref<8x16x128xf32, #tpu.memory_space<vmem>>, vector<1x16x128xf32>
    %62 = vector.shape_cast %61 : vector<1x16x128xf32> to vector<16x128xf32>
    %63 = vector.shape_cast %59 : vector<16x128xf32> to vector<1x16x128xf32>
    tpu.vector_store %arg9[%60, %c0_25, %c0_26], %63 {strides = array<i32>} : memref<8x16x128xf32, #tpu.memory_space<vmem>>, vector<1x16x128xf32>,
    %64 = arith.truncf %59 : vector<16x128xf32> to vector<16x128xbf16>
    %c2_i32 = arith.constant 2 : i32
    %65 = arith.index_cast %c2_i32 : i32 to index
    %c0_27 = arith.constant 0 : index
    %c0_28 = arith.constant 0 : index
    %66 = vector.load %arg8[%65, %c0_27, %c0_28] : memref<8x16x512xf32, #tpu.memory_space<vmem>>, vector<1x16x512xf32>
    %67 = vector.shape_cast %66 : vector<1x16x512xf32> to vector<16x512xf32>
    %c0_29 = arith.constant 0 : index
    %c0_30 = arith.constant 0 : index
    %68 = vector.load %arg3[%c0_29, %c0_30] : memref<128x512xbf16, #tpu.memory_space<vmem>>, vector<128x512xbf16>
    %cst_31 = arith.constant dense<0.000000e+00> : vector<16x512xf32>
    %69 = tpu.matmul %64, %68, %cst_31 {dimension_numbers = #tpu.dot_dimension_numbers<[1], [0], [0], [1], [0, 0, 1, 1], [], []>} : vector<16x128xbf16>, vector<128x512xbf16>, vector<16x512xf32> -> vector<16x512xf32>
    %70 = arith.addf %67, %69 : vector<16x512xf32>
    %71 = vector.extract_strided_slice %70 {offsets = [0, 0], sizes = [16, 384], strides = [1, 1]} : vector<16x512xf32> to vector<16x384xf32>
    %72 = arith.negf %71 : vector<16x384xf32>
    %73 = math.exp %72 : vector<16x384xf32>
    %cst_32 = arith.constant 1.000000e+00 : f32
    %74 = vector.broadcast %cst_32 : f32 to vector<16x384xf32>
    %75 = arith.addf %74, %73 : vector<16x384xf32>
    %76 = arith.divf %74, %75 : vector<16x384xf32>
    %77 = vector.extract_strided_slice %76 {offsets = [0, 0], sizes = [16, 128], strides = [1, 1]} : vector<16x384xf32> to vector<16x128xf32>
    %78 = vector.extract_strided_slice %76 {offsets = [0, 128], sizes = [16, 128], strides = [1, 1]} : vector<16x384xf32> to vector<16x128xf32>
    %79 = vector.extract_strided_slice %76 {offsets = [0, 256], sizes = [16, 128], strides = [1, 1]} : vector<16x384xf32> to vector<16x128xf32>
    %80 = vector.extract_strided_slice %70 {offsets = [0, 384], sizes = [16, 128], strides = [1, 1]} : vector<16x512xf32> to vector<16x128xf32>
    %81 = math.tanh %80 : vector<16x128xf32>
    %82 = arith.mulf %78, %57 : vector<16x128xf32>
    %83 = arith.mulf %77, %81 : vector<16x128xf32>
    %84 = arith.addf %82, %83 : vector<16x128xf32>
    %85 = math.tanh %84 : vector<16x128xf32>
    %86 = arith.mulf %79, %85 : vector<16x128xf32>
    %87 = arith.index_cast %c2_i32 : i32 to index
    %c0_33 = arith.constant 0 : index
    %c0_34 = arith.constant 0 : index
    %88 = vector.load %arg9[%87, %c0_33, %c0_34] : memref<8x16x128xf32, #tpu.memory_space<vmem>>, vector<1x16x128xf32>
    %89 = vector.shape_cast %88 : vector<1x16x128xf32> to vector<16x128xf32>
    %90 = vector.shape_cast %86 : vector<16x128xf32> to vector<1x16x128xf32>
    tpu.vector_store %arg9[%87, %c0_33, %c0_34], %90 {strides = array<i32>} : memref<8x16x128xf32, #tpu.memory_space<vmem>>, vector<1x16x128xf32>,
    %91 = arith.truncf %86 : vector<16x128xf32> to vector<16x128xbf16>
    %c3_i32 = arith.constant 3 : i32
    %92 = arith.index_cast %c3_i32 : i32 to index
    %c0_35 = arith.constant 0 : index
    %c0_36 = arith.constant 0 : index
    %93 = vector.load %arg8[%92, %c0_35, %c0_36] : memref<8x16x512xf32, #tpu.memory_space<vmem>>, vector<1x16x512xf32>
    %94 = vector.shape_cast %93 : vector<1x16x512xf32> to vector<16x512xf32>
    %c0_37 = arith.constant 0 : index
    %c0_38 = arith.constant 0 : index
    %95 = vector.load %arg3[%c0_37, %c0_38] : memref<128x512xbf16, #tpu.memory_space<vmem>>, vector<128x512xbf16>
    %cst_39 = arith.constant dense<0.000000e+00> : vector<16x512xf32>
    %96 = tpu.matmul %91, %95, %cst_39 {dimension_numbers = #tpu.dot_dimension_numbers<[1], [0], [0], [1], [0, 0, 1, 1], [], []>} : vector<16x128xbf16>, vector<128x512xbf16>, vector<16x512xf32> -> vector<16x512xf32>
    %97 = arith.addf %94, %96 : vector<16x512xf32>
    %98 = vector.extract_strided_slice %97 {offsets = [0, 0], sizes = [16, 384], strides = [1, 1]} : vector<16x512xf32> to vector<16x384xf32>
    %99 = arith.negf %98 : vector<16x384xf32>
    %100 = math.exp %99 : vector<16x384xf32>
    %cst_40 = arith.constant 1.000000e+00 : f32
    %101 = vector.broadcast %cst_40 : f32 to vector<16x384xf32>
    %102 = arith.addf %101, %100 : vector<16x384xf32>
    %103 = arith.divf %101, %102 : vector<16x384xf32>
    %104 = vector.extract_strided_slice %103 {offsets = [0, 0], sizes = [16, 128], strides = [1, 1]} : vector<16x384xf32> to vector<16x128xf32>
    %105 = vector.extract_strided_slice %103 {offsets = [0, 128], sizes = [16, 128], strides = [1, 1]} : vector<16x384xf32> to vector<16x128xf32>
    %106 = vector.extract_strided_slice %103 {offsets = [0, 256], sizes = [16, 128], strides = [1, 1]} : vector<16x384xf32> to vector<16x128xf32>
    %107 = vector.extract_strided_slice %97 {offsets = [0, 384], sizes = [16, 128], strides = [1, 1]} : vector<16x512xf32> to vector<16x128xf32>
    %108 = math.tanh %107 : vector<16x128xf32>
    %109 = arith.mulf %105, %84 : vector<16x128xf32>
    %110 = arith.mulf %104, %108 : vector<16x128xf32>
    %111 = arith.addf %109, %110 : vector<16x128xf32>
    %112 = math.tanh %111 : vector<16x128xf32>
    %113 = arith.mulf %106, %112 : vector<16x128xf32>
    %114 = arith.index_cast %c3_i32 : i32 to index
    %c0_41 = arith.constant 0 : index
    %c0_42 = arith.constant 0 : index
    %115 = vector.load %arg9[%114, %c0_41, %c0_42] : memref<8x16x128xf32, #tpu.memory_space<vmem>>, vector<1x16x128xf32>
    %116 = vector.shape_cast %115 : vector<1x16x128xf32> to vector<16x128xf32>
    %117 = vector.shape_cast %113 : vector<16x128xf32> to vector<1x16x128xf32>
    tpu.vector_store %arg9[%114, %c0_41, %c0_42], %117 {strides = array<i32>} : memref<8x16x128xf32, #tpu.memory_space<vmem>>, vector<1x16x128xf32>,
    %118 = arith.truncf %113 : vector<16x128xf32> to vector<16x128xbf16>
    %c4_i32 = arith.constant 4 : i32
    %119 = arith.index_cast %c4_i32 : i32 to index
    %c0_43 = arith.constant 0 : index
    %c0_44 = arith.constant 0 : index
    %120 = vector.load %arg8[%119, %c0_43, %c0_44] : memref<8x16x512xf32, #tpu.memory_space<vmem>>, vector<1x16x512xf32>
    %121 = vector.shape_cast %120 : vector<1x16x512xf32> to vector<16x512xf32>
    %c0_45 = arith.constant 0 : index
    %c0_46 = arith.constant 0 : index
    %122 = vector.load %arg3[%c0_45, %c0_46] : memref<128x512xbf16, #tpu.memory_space<vmem>>, vector<128x512xbf16>
    %cst_47 = arith.constant dense<0.000000e+00> : vector<16x512xf32>
    %123 = tpu.matmul %118, %122, %cst_47 {dimension_numbers = #tpu.dot_dimension_numbers<[1], [0], [0], [1], [0, 0, 1, 1], [], []>} : vector<16x128xbf16>, vector<128x512xbf16>, vector<16x512xf32> -> vector<16x512xf32>
    %124 = arith.addf %121, %123 : vector<16x512xf32>
    %125 = vector.extract_strided_slice %124 {offsets = [0, 0], sizes = [16, 384], strides = [1, 1]} : vector<16x512xf32> to vector<16x384xf32>
    %126 = arith.negf %125 : vector<16x384xf32>
    %127 = math.exp %126 : vector<16x384xf32>
    %cst_48 = arith.constant 1.000000e+00 : f32
    %128 = vector.broadcast %cst_48 : f32 to vector<16x384xf32>
    %129 = arith.addf %128, %127 : vector<16x384xf32>
    %130 = arith.divf %128, %129 : vector<16x384xf32>
    %131 = vector.extract_strided_slice %130 {offsets = [0, 0], sizes = [16, 128], strides = [1, 1]} : vector<16x384xf32> to vector<16x128xf32>
    %132 = vector.extract_strided_slice %130 {offsets = [0, 128], sizes = [16, 128], strides = [1, 1]} : vector<16x384xf32> to vector<16x128xf32>
    %133 = vector.extract_strided_slice %130 {offsets = [0, 256], sizes = [16, 128], strides = [1, 1]} : vector<16x384xf32> to vector<16x128xf32>
    %134 = vector.extract_strided_slice %124 {offsets = [0, 384], sizes = [16, 128], strides = [1, 1]} : vector<16x512xf32> to vector<16x128xf32>
    %135 = math.tanh %134 : vector<16x128xf32>
    %136 = arith.mulf %132, %111 : vector<16x128xf32>
    %137 = arith.mulf %131, %135 : vector<16x128xf32>
    %138 = arith.addf %136, %137 : vector<16x128xf32>
    %139 = math.tanh %138 : vector<16x128xf32>
    %140 = arith.mulf %133, %139 : vector<16x128xf32>
    %141 = arith.index_cast %c4_i32 : i32 to index
    %c0_49 = arith.constant 0 : index
    %c0_50 = arith.constant 0 : index
    %142 = vector.load %arg9[%141, %c0_49, %c0_50] : memref<8x16x128xf32, #tpu.memory_space<vmem>>, vector<1x16x128xf32>
    %143 = vector.shape_cast %142 : vector<1x16x128xf32> to vector<16x128xf32>
    %144 = vector.shape_cast %140 : vector<16x128xf32> to vector<1x16x128xf32>
    tpu.vector_store %arg9[%141, %c0_49, %c0_50], %144 {strides = array<i32>} : memref<8x16x128xf32, #tpu.memory_space<vmem>>, vector<1x16x128xf32>,
    %145 = arith.truncf %140 : vector<16x128xf32> to vector<16x128xbf16>
    %c5_i32 = arith.constant 5 : i32
    %146 = arith.index_cast %c5_i32 : i32 to index
    %c0_51 = arith.constant 0 : index
    %c0_52 = arith.constant 0 : index
    %147 = vector.load %arg8[%146, %c0_51, %c0_52] : memref<8x16x512xf32, #tpu.memory_space<vmem>>, vector<1x16x512xf32>
    %148 = vector.shape_cast %147 : vector<1x16x512xf32> to vector<16x512xf32>
    %c0_53 = arith.constant 0 : index
    %c0_54 = arith.constant 0 : index
    %149 = vector.load %arg3[%c0_53, %c0_54] : memref<128x512xbf16, #tpu.memory_space<vmem>>, vector<128x512xbf16>
    %cst_55 = arith.constant dense<0.000000e+00> : vector<16x512xf32>
    %150 = tpu.matmul %145, %149, %cst_55 {dimension_numbers = #tpu.dot_dimension_numbers<[1], [0], [0], [1], [0, 0, 1, 1], [], []>} : vector<16x128xbf16>, vector<128x512xbf16>, vector<16x512xf32> -> vector<16x512xf32>
    %151 = arith.addf %148, %150 : vector<16x512xf32>
    %152 = vector.extract_strided_slice %151 {offsets = [0, 0], sizes = [16, 384], strides = [1, 1]} : vector<16x512xf32> to vector<16x384xf32>
    %153 = arith.negf %152 : vector<16x384xf32>
    %154 = math.exp %153 : vector<16x384xf32>
    %cst_56 = arith.constant 1.000000e+00 : f32
    %155 = vector.broadcast %cst_56 : f32 to vector<16x384xf32>
    %156 = arith.addf %155, %154 : vector<16x384xf32>
    %157 = arith.divf %155, %156 : vector<16x384xf32>
    %158 = vector.extract_strided_slice %157 {offsets = [0, 0], sizes = [16, 128], strides = [1, 1]} : vector<16x384xf32> to vector<16x128xf32>
    %159 = vector.extract_strided_slice %157 {offsets = [0, 128], sizes = [16, 128], strides = [1, 1]} : vector<16x384xf32> to vector<16x128xf32>
    %160 = vector.extract_strided_slice %157 {offsets = [0, 256], sizes = [16, 128], strides = [1, 1]} : vector<16x384xf32> to vector<16x128xf32>
    %161 = vector.extract_strided_slice %151 {offsets = [0, 384], sizes = [16, 128], strides = [1, 1]} : vector<16x512xf32> to vector<16x128xf32>
    %162 = math.tanh %161 : vector<16x128xf32>
    %163 = arith.mulf %159, %138 : vector<16x128xf32>
    %164 = arith.mulf %158, %162 : vector<16x128xf32>
    %165 = arith.addf %163, %164 : vector<16x128xf32>
    %166 = math.tanh %165 : vector<16x128xf32>
    %167 = arith.mulf %160, %166 : vector<16x128xf32>
    %168 = arith.index_cast %c5_i32 : i32 to index
    %c0_57 = arith.constant 0 : index
    %c0_58 = arith.constant 0 : index
    %169 = vector.load %arg9[%168, %c0_57, %c0_58] : memref<8x16x128xf32, #tpu.memory_space<vmem>>, vector<1x16x128xf32>
    %170 = vector.shape_cast %169 : vector<1x16x128xf32> to vector<16x128xf32>
    %171 = vector.shape_cast %167 : vector<16x128xf32> to vector<1x16x128xf32>
    tpu.vector_store %arg9[%168, %c0_57, %c0_58], %171 {strides = array<i32>} : memref<8x16x128xf32, #tpu.memory_space<vmem>>, vector<1x16x128xf32>,
    %172 = arith.truncf %167 : vector<16x128xf32> to vector<16x128xbf16>
    %c6_i32 = arith.constant 6 : i32
    %173 = arith.index_cast %c6_i32 : i32 to index
    %c0_59 = arith.constant 0 : index
    %c0_60 = arith.constant 0 : index
    %174 = vector.load %arg8[%173, %c0_59, %c0_60] : memref<8x16x512xf32, #tpu.memory_space<vmem>>, vector<1x16x512xf32>
    %175 = vector.shape_cast %174 : vector<1x16x512xf32> to vector<16x512xf32>
    %c0_61 = arith.constant 0 : index
    %c0_62 = arith.constant 0 : index
    %176 = vector.load %arg3[%c0_61, %c0_62] : memref<128x512xbf16, #tpu.memory_space<vmem>>, vector<128x512xbf16>
    %cst_63 = arith.constant dense<0.000000e+00> : vector<16x512xf32>
    %177 = tpu.matmul %172, %176, %cst_63 {dimension_numbers = #tpu.dot_dimension_numbers<[1], [0], [0], [1], [0, 0, 1, 1], [], []>} : vector<16x128xbf16>, vector<128x512xbf16>, vector<16x512xf32> -> vector<16x512xf32>
    %178 = arith.addf %175, %177 : vector<16x512xf32>
    %179 = vector.extract_strided_slice %178 {offsets = [0, 0], sizes = [16, 384], strides = [1, 1]} : vector<16x512xf32> to vector<16x384xf32>
    %180 = arith.negf %179 : vector<16x384xf32>
    %181 = math.exp %180 : vector<16x384xf32>
    %cst_64 = arith.constant 1.000000e+00 : f32
    %182 = vector.broadcast %cst_64 : f32 to vector<16x384xf32>
    %183 = arith.addf %182, %181 : vector<16x384xf32>
    %184 = arith.divf %182, %183 : vector<16x384xf32>
    %185 = vector.extract_strided_slice %184 {offsets = [0, 0], sizes = [16, 128], strides = [1, 1]} : vector<16x384xf32> to vector<16x128xf32>
    %186 = vector.extract_strided_slice %184 {offsets = [0, 128], sizes = [16, 128], strides = [1, 1]} : vector<16x384xf32> to vector<16x128xf32>
    %187 = vector.extract_strided_slice %184 {offsets = [0, 256], sizes = [16, 128], strides = [1, 1]} : vector<16x384xf32> to vector<16x128xf32>
    %188 = vector.extract_strided_slice %178 {offsets = [0, 384], sizes = [16, 128], strides = [1, 1]} : vector<16x512xf32> to vector<16x128xf32>
    %189 = math.tanh %188 : vector<16x128xf32>
    %190 = arith.mulf %186, %165 : vector<16x128xf32>
    %191 = arith.mulf %185, %189 : vector<16x128xf32>
    %192 = arith.addf %190, %191 : vector<16x128xf32>
    %193 = math.tanh %192 : vector<16x128xf32>
    %194 = arith.mulf %187, %193 : vector<16x128xf32>
    %195 = arith.index_cast %c6_i32 : i32 to index
    %c0_65 = arith.constant 0 : index
    %c0_66 = arith.constant 0 : index
    %196 = vector.load %arg9[%195, %c0_65, %c0_66] : memref<8x16x128xf32, #tpu.memory_space<vmem>>, vector<1x16x128xf32>
    %197 = vector.shape_cast %196 : vector<1x16x128xf32> to vector<16x128xf32>
    %198 = vector.shape_cast %194 : vector<16x128xf32> to vector<1x16x128xf32>
    tpu.vector_store %arg9[%195, %c0_65, %c0_66], %198 {strides = array<i32>} : memref<8x16x128xf32, #tpu.memory_space<vmem>>, vector<1x16x128xf32>,
    %199 = arith.truncf %194 : vector<16x128xf32> to vector<16x128xbf16>
    %c7_i32 = arith.constant 7 : i32
    %200 = arith.index_cast %c7_i32 : i32 to index
    %c0_67 = arith.constant 0 : index
    %c0_68 = arith.constant 0 : index
    %201 = vector.load %arg8[%200, %c0_67, %c0_68] : memref<8x16x512xf32, #tpu.memory_space<vmem>>, vector<1x16x512xf32>
    %202 = vector.shape_cast %201 : vector<1x16x512xf32> to vector<16x512xf32>
    %c0_69 = arith.constant 0 : index
    %c0_70 = arith.constant 0 : index
    %203 = vector.load %arg3[%c0_69, %c0_70] : memref<128x512xbf16, #tpu.memory_space<vmem>>, vector<128x512xbf16>
    %cst_71 = arith.constant dense<0.000000e+00> : vector<16x512xf32>
    %204 = tpu.matmul %199, %203, %cst_71 {dimension_numbers = #tpu.dot_dimension_numbers<[1], [0], [0], [1], [0, 0, 1, 1], [], []>} : vector<16x128xbf16>, vector<128x512xbf16>, vector<16x512xf32> -> vector<16x512xf32>
    %205 = arith.addf %202, %204 : vector<16x512xf32>
    %206 = vector.extract_strided_slice %205 {offsets = [0, 0], sizes = [16, 384], strides = [1, 1]} : vector<16x512xf32> to vector<16x384xf32>
    %207 = arith.negf %206 : vector<16x384xf32>
    %208 = math.exp %207 : vector<16x384xf32>
    %cst_72 = arith.constant 1.000000e+00 : f32
    %209 = vector.broadcast %cst_72 : f32 to vector<16x384xf32>
    %210 = arith.addf %209, %208 : vector<16x384xf32>
    %211 = arith.divf %209, %210 : vector<16x384xf32>
    %212 = vector.extract_strided_slice %211 {offsets = [0, 0], sizes = [16, 128], strides = [1, 1]} : vector<16x384xf32> to vector<16x128xf32>
    %213 = vector.extract_strided_slice %211 {offsets = [0, 128], sizes = [16, 128], strides = [1, 1]} : vector<16x384xf32> to vector<16x128xf32>
    %214 = vector.extract_strided_slice %211 {offsets = [0, 256], sizes = [16, 128], strides = [1, 1]} : vector<16x384xf32> to vector<16x128xf32>
    %215 = vector.extract_strided_slice %205 {offsets = [0, 384], sizes = [16, 128], strides = [1, 1]} : vector<16x512xf32> to vector<16x128xf32>
    %216 = math.tanh %215 : vector<16x128xf32>
    %217 = arith.mulf %213, %192 : vector<16x128xf32>
    %218 = arith.mulf %212, %216 : vector<16x128xf32>
    %219 = arith.addf %217, %218 : vector<16x128xf32>
    %220 = math.tanh %219 : vector<16x128xf32>
    %221 = arith.mulf %214, %220 : vector<16x128xf32>
    %222 = arith.index_cast %c7_i32 : i32 to index
    %c0_73 = arith.constant 0 : index
    %c0_74 = arith.constant 0 : index
    %223 = vector.load %arg9[%222, %c0_73, %c0_74] : memref<8x16x128xf32, #tpu.memory_space<vmem>>, vector<1x16x128xf32>
    %224 = vector.shape_cast %223 : vector<1x16x128xf32> to vector<16x128xf32>
    %225 = vector.shape_cast %221 : vector<16x128xf32> to vector<1x16x128xf32>
    tpu.vector_store %arg9[%222, %c0_73, %c0_74], %225 {strides = array<i32>} : memref<8x16x128xf32, #tpu.memory_space<vmem>>, vector<1x16x128xf32>,
    %226 = arith.truncf %221 : vector<16x128xf32> to vector<16x128xbf16>
    %c8_i32 = arith.constant 8 : i32
    %c0_75 = arith.constant 0 : index
    %c0_76 = arith.constant 0 : index
    %c0_77 = arith.constant 0 : index
    %227 = vector.load %arg9[%c0_75, %c0_76, %c0_77] : memref<8x16x128xf32, #tpu.memory_space<vmem>>, vector<8x16x128xf32>
    %228 = vector.shape_cast %227 : vector<8x16x128xf32> to vector<128x128xf32>
    %229 = arith.truncf %228 : vector<128x128xf32> to vector<128x128xbf16>
    %c0_78 = arith.constant 0 : index
    %c0_79 = arith.constant 0 : index
    %230 = vector.load %arg5[%c0_78, %c0_79] : memref<128x128xbf16, #tpu.memory_space<vmem>>, vector<128x128xbf16>
    %cst_80 = arith.constant dense<0.000000e+00> : vector<128x128xf32>
    %231 = tpu.matmul %229, %230, %cst_80 {dimension_numbers = #tpu.dot_dimension_numbers<[1], [0], [0], [1], [0, 0, 1, 1], [], []>} : vector<128x128xbf16>, vector<128x128xbf16>, vector<128x128xf32> -> vector<128x128xf32>
    %c0_81 = arith.constant 0 : index
    %c0_82 = arith.constant 0 : index
    %232 = vector.load %arg6[%c0_81, %c0_82] : memref<1x128xf32, #tpu.memory_space<vmem>>, vector<1x128xf32>
    %233 = vector.broadcast %232 : vector<1x128xf32> to vector<128x128xf32>
    %234 = arith.addf %231, %233 : vector<128x128xf32>
    %235 = tpu.iota {dimensions = array<i32: 1>} : vector<1x128xi32>
    %c4_i32_83 = arith.constant 4 : i32
    %236 = vector.broadcast %c4_i32_83 : i32 to vector<1x128xi32>
    %237 = arith.cmpi slt, %235, %236 : vector<1x128xi32>
    %cst_84 = arith.constant -1.000000e+30 : f32
    %238 = vector.shape_cast %237 : vector<1x128xi1> to vector<1x128xi1>
    %239 = vector.broadcast %238 : vector<1x128xi1> to vector<128x128xi1>
    %240 = vector.broadcast %cst_84 : f32 to vector<128x128xf32>
    %241 = arith.select %239, %234, %240 : vector<128x128xi1>, vector<128x128xf32>
    %cst_85 = arith.constant dense<0xFF800000> : vector<128xf32>
    %242 = vector.multi_reduction <maximumf>, %241, %cst_85 [1] : vector<128x128xf32> to vector<128xf32>
    %243 = vector.shape_cast %242 : vector<128xf32> to vector<128x1xf32>
    %244 = vector.broadcast %243 : vector<128x1xf32> to vector<128x128xf32>
    %245 = arith.subf %241, %244 : vector<128x128xf32>
    %246 = math.exp %245 : vector<128x128xf32>
    %cst_86 = arith.constant dense<0.000000e+00> : vector<128xf32>
    %247 = vector.multi_reduction <add>, %246, %cst_86 [1] : vector<128x128xf32> to vector<128xf32>
    %248 = vector.shape_cast %247 : vector<128xf32> to vector<128x1xf32>
    %249 = math.log %248 : vector<128x1xf32>
    %250 = vector.broadcast %249 : vector<128x1xf32> to vector<128x128xf32>
    %251 = arith.subf %245, %250 : vector<128x128xf32>
    %252 = vector.shape_cast %251 : vector<128x128xf32> to vector<8x16x128xf32>
    %c0_87 = arith.constant 0 : index
    %c0_88 = arith.constant 0 : index
    %c0_89 = arith.constant 0 : index
    %253 = vector.load %arg7[%c0_87, %c0_88, %c0_89] : memref<8x16x128xf32, #tpu.memory_space<vmem>>, vector<8x16x128xf32>
    tpu.vector_store %arg7[%c0_87, %c0_88, %c0_89], %252 {strides = array<i32>} : memref<8x16x128xf32, #tpu.memory_space<vmem>>, vector<8x16x128xf32>,
    return
  }
  func.func @transform_0(%arg0: i32) -> (i32, i32, i32) {
    %c0_i32 = arith.constant 0 : i32
    %c0_i32_0 = arith.constant 0 : i32
    %c0_i32_1 = arith.constant 0 : i32
    return %c0_i32, %arg0, %c0_i32_0 : i32, i32, i32
  }
  func.func @transform_1(%arg0: i32) -> (i32, i32) {
    %c0_i32 = arith.constant 0 : i32
    %c0_i32_0 = arith.constant 0 : i32
    %c0_i32_1 = arith.constant 0 : i32
    return %c0_i32, %c0_i32_0 : i32, i32
  }
  func.func @transform_2(%arg0: i32) -> (i32, i32) {
    %c0_i32 = arith.constant 0 : i32
    %c0_i32_0 = arith.constant 0 : i32
    %c0_i32_1 = arith.constant 0 : i32
    return %c0_i32, %c0_i32_0 : i32, i32
  }
  func.func @transform_3(%arg0: i32) -> (i32, i32) {
    %c0_i32 = arith.constant 0 : i32
    %c0_i32_0 = arith.constant 0 : i32
    %c0_i32_1 = arith.constant 0 : i32
    return %c0_i32, %c0_i32_0 : i32, i32
  }
  func.func @transform_4(%arg0: i32) -> (i32, i32) {
    %c0_i32 = arith.constant 0 : i32
    %c0_i32_0 = arith.constant 0 : i32
    %c0_i32_1 = arith.constant 0 : i32
    return %c0_i32, %c0_i32_0 : i32, i32
  }
  func.func @transform_5(%arg0: i32) -> (i32, i32) {
    %c0_i32 = arith.constant 0 : i32
    %c0_i32_0 = arith.constant 0 : i32
    %c0_i32_1 = arith.constant 0 : i32
    return %c0_i32, %c0_i32_0 : i32, i32
  }
  func.func @transform_6(%arg0: i32) -> (i32, i32, i32) {
    %c0_i32 = arith.constant 0 : i32
    %c0_i32_0 = arith.constant 0 : i32
    %c0_i32_1 = arith.constant 0 : i32
    return %c0_i32, %arg0, %c0_i32_0 : i32, i32, i32
  }
}

</mosaic_0001>

<llo_original>
// kernel: lstm_seq_cls_forward.1
$region0: #{lstm_seq_cls_forward.1}
  #allocation0 [shape = 'u32[]', space=smem, size = 0x4, offset = 0x4, fixed_abs, tag = 'smem constant byte address 0x4 - core index']
  #allocation1 [shape = 'u32[72,128]{1,0:T(1,128)}', space=vmem, size = 0x9000, scoped, tag = 'internal scratch']
  #allocation2 [shape = 'f32[8,16,512]{2,1,0:T(8,128)}', space=vmem, size = 0x40000, scoped, tag = 'scratch operand']
  #allocation3 [shape = 'f32[8,16,128]{2,1,0:T(8,128)}', space=vmem, size = 0x10000, scoped, tag = 'scratch operand']
  %s0 = inlined_call_operand.vmem [shape: bf16[8,16,384], index: 0, kind: input, shape index: {}]
  %s1 = inlined_call_operand.vmem [shape: bf16[384,512], index: 1, kind: input, shape index: {}]
  %s2 = inlined_call_operand.vmem [shape: bf16[128,512], index: 2, kind: input, shape index: {}]
  %s3 = inlined_call_operand.vmem [shape: f32[1,512], index: 3, kind: input, shape index: {}]
  %s4 = inlined_call_operand.vmem [shape: bf16[128,128], index: 4, kind: input, shape index: {}]
  %s5 = inlined_call_operand.vmem [shape: f32[1,128], index: 5, kind: input, shape index: {}]
  %s6 = inlined_call_operand.vmem [shape: f32[8,16,128], index: 6, kind: output, shape index: {}]
  %s7 = sld [smem:[#allocation0]]
  $region34: #{lstm_seq_cls_forward.1} parent=0
    _
  %s9 = ssub.s32 1, %s7
  %s10 = scalar_select 0, %s9, %s7
  // Predicated region
  $region2: #{lstm_seq_cls_forward.1} parent=0 // pred_check
    _
  $region3: #{lstm_seq_cls_forward.1} parent=0 // pred_check_branch
    %12 = sbr.rel (0) target = $region5
  $region4: #{lstm_seq_cls_forward.1} parent=0 // pred_region
    _
  $region5: #{lstm_seq_cls_forward.1} parent=0 // pred_fallthru
    _
  // Predicated region
  $region6: #{lstm_seq_cls_forward.1} parent=0 // pred_check
    _
  $region7: #{lstm_seq_cls_forward.1} parent=0 // pred_check_branch
    %14 = sbr.rel (0) target = $region9
  $region8: #{lstm_seq_cls_forward.1} parent=0 // pred_region
    _
  $region9: #{lstm_seq_cls_forward.1} parent=0 // pred_fallthru
    _
  // Predicated region
  $region10: #{lstm_seq_cls_forward.1} parent=0 // pred_check
    _
  $region11: #{lstm_seq_cls_forward.1} parent=0 // pred_check_branch
    %16 = sbr.rel (0) target = $region13
  $region12: #{lstm_seq_cls_forward.1} parent=0 // pred_region
    _
  $region13: #{lstm_seq_cls_forward.1} parent=0 // pred_fallthru
    _
  // Predicated region
  $region14: #{lstm_seq_cls_forward.1} parent=0 // pred_check
    _
  $region15: #{lstm_seq_cls_forward.1} parent=0 // pred_check_branch
    %18 = sbr.rel (0) target = $region17
  $region16: #{lstm_seq_cls_forward.1} parent=0 // pred_region
    _
  $region17: #{lstm_seq_cls_forward.1} parent=0 // pred_fallthru
    _
  // Predicated region
  $region18: #{lstm_seq_cls_forward.1} parent=0 // pred_check
    _
  $region19: #{lstm_seq_cls_forward.1} parent=0 // pred_check_branch
    %20 = sbr.rel (0) target = $region21
  $region20: #{lstm_seq_cls_forward.1} parent=0 // pred_region
    _
  $region21: #{lstm_seq_cls_forward.1} parent=0 // pred_fallthru
    _
  // Predicated region
  $region22: #{lstm_seq_cls_forward.1} parent=0 // pred_check
    _
  $region23: #{lstm_seq_cls_forward.1} parent=0 // pred_check_branch
    %22 = sbr.rel (0) target = $region25
  $region24: #{lstm_seq_cls_forward.1} parent=0 // pred_region
    _
  $region25: #{lstm_seq_cls_forward.1} parent=0 // pred_fallthru
    _
  %v24 = vld [vmem:[%s0] sm:$0xff]
  %v25 = vld [vmem:[%s0 + $0x8] sm:$0xf]
  %v26 = vld [vmem:[%s0 + $0xc] sm:$0xff]
  %v27 = vld [vmem:[%s0 + $0x14] sm:$0xf]
  %v28 = vld [vmem:[%s0 + $0x18] sm:$0xff]
  %v29 = vld [vmem:[%s0 + $0x20] sm:$0xf]
  %v30 = vld [vmem:[%s0 + $0x24] sm:$0xff]
  %v31 = vld [vmem:[%s0 + $0x2c] sm:$0xf]
  %v32 = vld [vmem:[%s0 + $0x30] sm:$0xff]
  %v33 = vld [vmem:[%s0 + $0x38] sm:$0xf]
  %v34 = vld [vmem:[%s0 + $0x3c] sm:$0xff]
  %v35 = vld [vmem:[%s0 + $0x44] sm:$0xf]
  %v36 = vld [vmem:[%s0 + $0x48] sm:$0xff]
  %v37 = vld [vmem:[%s0 + $0x50] sm:$0xf]
  %v38 = vld [vmem:[%s0 + $0x54] sm:$0xff]
  %v39 = vld [vmem:[%s0 + $0x5c] sm:$0xf]
  %v40 = vld [vmem:[%s0 + $0x60] sm:$0xff]
  %v41 = vld [vmem:[%s0 + $0x68] sm:$0xf]
  %v42 = vld [vmem:[%s0 + $0x6c] sm:$0xff]
  %v43 = vld [vmem:[%s0 + $0x74] sm:$0xf]
  %v44 = vld [vmem:[%s0 + $0x78] sm:$0xff]
  %v45 = vld [vmem:[%s0 + $0x80] sm:$0xf]
  %v46 = vld [vmem:[%s0 + $0x84] sm:$0xff]
  %v47 = vld [vmem:[%s0 + $0x8c] sm:$0xf]
  %v48 = vld [vmem:[%s0 + $0x90] sm:$0xff]
  %v49 = vld [vmem:[%s0 + $0x98] sm:$0xf]
  %v50 = vld [vmem:[%s0 + $0x9c] sm:$0xff]
  %v51 = vld [vmem:[%s0 + $0xa4] sm:$0xf]
  %v52 = vld [vmem:[%s0 + $0xa8] sm:$0xff]
  %v53 = vld [vmem:[%s0 + $0xb0] sm:$0xf]
  %v54 = vld [vmem:[%s0 + $0xb4] sm:$0xff]
  %v55 = vld [vmem:[%s0 + $0xbc] sm:$0xf]
  %v56 = vld [vmem:[%s1] sm:$0xff]
  %v57 = vld [vmem:[%s1 + $0x8] sm:$0xff]
  %v58 = vld [vmem:[%s1 + $0x10] sm:$0xff]
  %v59 = vld [vmem:[%s1 + $0x18] sm:$0xff]
  %v60 = vld [vmem:[%s1 + $0x20] sm:$0xff]
  %v61 = vld [vmem:[%s1 + $0x28] sm:$0xff]
  %v62 = vld [vmem:[%s1 + $0x30] sm:$0xff]
  %v63 = vld [vmem:[%s1 + $0x38] sm:$0xff]
  %v64 = vld [vmem:[%s1 + $0x40] sm:$0xff]
  %v65 = vld [vmem:[%s1 + $0x48] sm:$0xff]
  %v66 = vld [vmem:[%s1 + $0x50] sm:$0xff]
  %v67 = vld [vmem:[%s1 + $0x58] sm:$0xff]
  %v68 = vld [vmem:[%s1 + $0x60] sm:$0xff]
  %v69 = vld [vmem:[%s1 + $0x68] sm:$0xff]
  %v70 = vld [vmem:[%s1 + $0x70] sm:$0xff]
  %v71 = vld [vmem:[%s1 + $0x78] sm:$0xff]
  %v72 = vld [vmem:[%s1 + $0x80] sm:$0xff]
  %v73 = vld [vmem:[%s1 + $0x88] sm:$0xff]
  %v74 = vld [vmem:[%s1 + $0x90] sm:$0xff]
  %v75 = vld [vmem:[%s1 + $0x98] sm:$0xff]
  %v76 = vld [vmem:[%s1 + $0xa0] sm:$0xff]
  %v77 = vld [vmem:[%s1 + $0xa8] sm:$0xff]
  %v78 = vld [vmem:[%s1 + $0xb0] sm:$0xff]
  %v79 = vld [vmem:[%s1 + $0xb8] sm:$0xff]
  %v80 = vld [vmem:[%s1 + $0xc0] sm:$0xff]
  %v81 = vld [vmem:[%s1 + $0xc8] sm:$0xff]
  %v82 = vld [vmem:[%s1 + $0xd0] sm:$0xff]
  %v83 = vld [vmem:[%s1 + $0xd8] sm:$0xff]
  %v84 = vld [vmem:[%s1 + $0xe0] sm:$0xff]
  %v85 = vld [vmem:[%s1 + $0xe8] sm:$0xff]
  %v86 = vld [vmem:[%s1 + $0xf0] sm:$0xff]
  %v87 = vld [vmem:[%s1 + $0xf8] sm:$0xff]
  %v88 = vld [vmem:[%s1 + $0x100] sm:$0xff]
  %v89 = vld [vmem:[%s1 + $0x108] sm:$0xff]
  %v90 = vld [vmem:[%s1 + $0x110] sm:$0xff]
  %v91 = vld [vmem:[%s1 + $0x118] sm:$0xff]
  %v92 = vld [vmem:[%s1 + $0x120] sm:$0xff]
  %v93 = vld [vmem:[%s1 + $0x128] sm:$0xff]
  %v94 = vld [vmem:[%s1 + $0x130] sm:$0xff]
  %v95 = vld [vmem:[%s1 + $0x138] sm:$0xff]
  %v96 = vld [vmem:[%s1 + $0x140] sm:$0xff]
  %v97 = vld [vmem:[%s1 + $0x148] sm:$0xff]
  %v98 = vld [vmem:[%s1 + $0x150] sm:$0xff]
  %v99 = vld [vmem:[%s1 + $0x158] sm:$0xff]
  %v100 = vld [vmem:[%s1 + $0x160] sm:$0xff]
  %v101 = vld [vmem:[%s1 + $0x168] sm:$0xff]
  %v102 = vld [vmem:[%s1 + $0x170] sm:$0xff]
  %v103 = vld [vmem:[%s1 + $0x178] sm:$0xff]
  %v104 = vld [vmem:[%s1 + $0x180] sm:$0xff]
  %v105 = vld [vmem:[%s1 + $0x188] sm:$0xff]
  %v106 = vld [vmem:[%s1 + $0x190] sm:$0xff]
  %v107 = vld [vmem:[%s1 + $0x198] sm:$0xff]
  %v108 = vld [vmem:[%s1 + $0x1a0] sm:$0xff]
  %v109 = vld [vmem:[%s1 + $0x1a8] sm:$0xff]
  %v110 = vld [vmem:[%s1 + $0x1b0] sm:$0xff]
  %v111 = vld [vmem:[%s1 + $0x1b8] sm:$0xff]
  %v112 = vld [vmem:[%s1 + $0x1c0] sm:$0xff]
  %v113 = vld [vmem:[%s1 + $0x1c8] sm:$0xff]
  %v114 = vld [vmem:[%s1 + $0x1d0] sm:$0xff]
  %v115 = vld [vmem:[%s1 + $0x1d8] sm:$0xff]
  %v116 = vld [vmem:[%s1 + $0x1e0] sm:$0xff]
  %v117 = vld [vmem:[%s1 + $0x1e8] sm:$0xff]
  %v118 = vld [vmem:[%s1 + $0x1f0] sm:$0xff]
  %v119 = vld [vmem:[%s1 + $0x1f8] sm:$0xff]
  %v120 = vld [vmem:[%s1 + $0x200] sm:$0xff]
  %v121 = vld [vmem:[%s1 + $0x208] sm:$0xff]
  %v122 = vld [vmem:[%s1 + $0x210] sm:$0xff]
  %v123 = vld [vmem:[%s1 + $0x218] sm:$0xff]
  %v124 = vld [vmem:[%s1 + $0x220] sm:$0xff]
  %v125 = vld [vmem:[%s1 + $0x228] sm:$0xff]
  %v126 = vld [vmem:[%s1 + $0x230] sm:$0xff]
  %v127 = vld [vmem:[%s1 + $0x238] sm:$0xff]
  %v128 = vld [vmem:[%s1 + $0x240] sm:$0xff]
  %v129 = vld [vmem:[%s1 + $0x248] sm:$0xff]
  %v130 = vld [vmem:[%s1 + $0x250] sm:$0xff]
  %v131 = vld [vmem:[%s1 + $0x258] sm:$0xff]
  %v132 = vld [vmem:[%s1 + $0x260] sm:$0xff]
  %v133 = vld [vmem:[%s1 + $0x268] sm:$0xff]
  %v134 = vld [vmem:[%s1 + $0x270] sm:$0xff]
  %v135 = vld [vmem:[%s1 + $0x278] sm:$0xff]
  %v136 = vld [vmem:[%s1 + $0x280] sm:$0xff]
  %v137 = vld [vmem:[%s1 + $0x288] sm:$0xff]
  %v138 = vld [vmem:[%s1 + $0x290] sm:$0xff]
  %v139 = vld [vmem:[%s1 + $0x298] sm:$0xff]
  %v140 = vld [vmem:[%s1 + $0x2a0] sm:$0xff]
  %v141 = vld [vmem:[%s1 + $0x2a8] sm:$0xff]
  %v142 = vld [vmem:[%s1 + $0x2b0] sm:$0xff]
  %v143 = vld [vmem:[%s1 + $0x2b8] sm:$0xff]
  %v144 = vld [vmem:[%s1 + $0x2c0] sm:$0xff]
  %v145 = vld [vmem:[%s1 + $0x2c8] sm:$0xff]
  %v146 = vld [vmem:[%s1 + $0x2d0] sm:$0xff]
  %v147 = vld [vmem:[%s1 + $0x2d8] sm:$0xff]
  %v148 = vld [vmem:[%s1 + $0x2e0] sm:$0xff]
  %v149 = vld [vmem:[%s1 + $0x2e8] sm:$0xff]
  %v150 = vld [vmem:[%s1 + $0x2f0] sm:$0xff]
  %v151 = vld [vmem:[%s1 + $0x2f8] sm:$0xff]
  %v152 = vld [vmem:[%s3] sm:$0xf]
  %v154 = vperm.slane %v152, 0
  %v155 = vperm.slane %v152, 1
  %v156 = vperm.slane %v152, 2
  %v157 = vperm.slane %v152, 3
  %v194 = vunpack.c.l.b16 %v24
  %v195 = vunpack.c.h.b16 %v24
  %v196 = vunpack.c.l.b16 %v25
  %v197 = vunpack.c.l.b16 %v26
  %v198 = vunpack.c.h.b16 %v26
  %v199 = vunpack.c.l.b16 %v27
  %v200 = vunpack.c.l.b16 %v28
  %v201 = vunpack.c.h.b16 %v28
  %v202 = vunpack.c.l.b16 %v29
  %v203 = vunpack.c.l.b16 %v30
  %v204 = vunpack.c.h.b16 %v30
  %v205 = vunpack.c.l.b16 %v31
  %v206 = vunpack.c.l.b16 %v32
  %v207 = vunpack.c.h.b16 %v32
  %v208 = vunpack.c.l.b16 %v33
  %v209 = vunpack.c.l.b16 %v34
  %v210 = vunpack.c.h.b16 %v34
  %v211 = vunpack.c.l.b16 %v35
  %v212 = vunpack.c.l.b16 %v36
  %v213 = vunpack.c.h.b16 %v36
  %v214 = vunpack.c.l.b16 %v37
  %v215 = vunpack.c.l.b16 %v38
  %v216 = vunpack.c.h.b16 %v38
  %v217 = vunpack.c.l.b16 %v39
  %v218 = vunpack.c.l.b16 %v40
  %v219 = vunpack.c.h.b16 %v40
  %v220 = vunpack.c.l.b16 %v41
  %v221 = vunpack.c.l.b16 %v42
  %v222 = vunpack.c.h.b16 %v42
  %v223 = vunpack.c.l.b16 %v43
  %v224 = vunpack.c.l.b16 %v44
  %v225 = vunpack.c.h.b16 %v44
  %v226 = vunpack.c.l.b16 %v45
  %v227 = vunpack.c.l.b16 %v46
  %v228 = vunpack.c.h.b16 %v46
  %v229 = vunpack.c.l.b16 %v47
  %v230 = vunpack.c.l.b16 %v48
  %v231 = vunpack.c.h.b16 %v48
  %v232 = vunpack.c.l.b16 %v49
  %v233 = vunpack.c.l.b16 %v50
  %v234 = vunpack.c.h.b16 %v50
  %v235 = vunpack.c.l.b16 %v51
  %v236 = vunpack.c.l.b16 %v52
  %v237 = vunpack.c.h.b16 %v52
  %v238 = vunpack.c.l.b16 %v53
  %v239 = vunpack.c.l.b16 %v54
  %v240 = vunpack.c.h.b16 %v54
  %v241 = vunpack.c.l.b16 %v55
  %v242 = vpack.c.b16 %v197, %v194
  %v243 = vpack.c.b16 %v198, %v195
  %v244 = vpack.c.b16 %v199, %v196
  %v245 = vpack.c.b16 %v203, %v200
  %v246 = vpack.c.b16 %v204, %v201
  %v247 = vpack.c.b16 %v205, %v202
  %v248 = vpack.c.b16 %v209, %v206
  %v249 = vpack.c.b16 %v210, %v207
  %v250 = vpack.c.b16 %v211, %v208
  %v251 = vpack.c.b16 %v215, %v212
  %v252 = vpack.c.b16 %v216, %v213
  %v253 = vpack.c.b16 %v217, %v214
  %v254 = vpack.c.b16 %v221, %v218
  %v255 = vpack.c.b16 %v222, %v219
  %v256 = vpack.c.b16 %v223, %v220
  %v257 = vpack.c.b16 %v227, %v224
  %v258 = vpack.c.b16 %v228, %v225
  %v259 = vpack.c.b16 %v229, %v226
  %v260 = vpack.c.b16 %v233, %v230
  %v261 = vpack.c.b16 %v234, %v231
  %v262 = vpack.c.b16 %v235, %v232
  %v263 = vpack.c.b16 %v239, %v236
  %v264 = vpack.c.b16 %v240, %v237
  %v265 = vpack.c.b16 %v241, %v238
  %v386 = vunpack.c.l.b16 %v56
  %v387 = vunpack.c.h.b16 %v56
  %v388 = vunpack.c.l.b16 %v57
  %v389 = vunpack.c.h.b16 %v57
  %v390 = vunpack.c.l.b16 %v58
  %v391 = vunpack.c.h.b16 %v58
  %v392 = vunpack.c.l.b16 %v59
  %v393 = vunpack.c.h.b16 %v59
  %v394 = vunpack.c.l.b16 %v60
  %v395 = vunpack.c.h.b16 %v60
  %v396 = vunpack.c.l.b16 %v61
  %v397 = vunpack.c.h.b16 %v61
  %v398 = vunpack.c.l.b16 %v62
  %v399 = vunpack.c.h.b16 %v62
  %v400 = vunpack.c.l.b16 %v63
  %v401 = vunpack.c.h.b16 %v63
  %v402 = vunpack.c.l.b16 %v64
  %v403 = vunpack.c.h.b16 %v64
  %v404 = vunpack.c.l.b16 %v65
  %v405 = vunpack.c.h.b16 %v65
  %v406 = vunpack.c.l.b16 %v66
  %v407 = vunpack.c.h.b16 %v66
  %v408 = vunpack.c.l.b16 %v67
  %v409 = vunpack.c.h.b16 %v67
  %v410 = vunpack.c.l.b16 %v68
  %v411 = vunpack.c.h.b16 %v68
  %v412 = vunpack.c.l.b16 %v69
  %v413 = vunpack.c.h.b16 %v69
  %v414 = vunpack.c.l.b16 %v70
  %v415 = vunpack.c.h.b16 %v70
  %v416 = vunpack.c.l.b16 %v71
  %v417 = vunpack.c.h.b16 %v71
  %v418 = vunpack.c.l.b16 %v72
  %v419 = vunpack.c.h.b16 %v72
  %v420 = vunpack.c.l.b16 %v73
  %v421 = vunpack.c.h.b16 %v73
  %v422 = vunpack.c.l.b16 %v74
  %v423 = vunpack.c.h.b16 %v74
  %v424 = vunpack.c.l.b16 %v75
  %v425 = vunpack.c.h.b16 %v75
  %v426 = vunpack.c.l.b16 %v76
  %v427 = vunpack.c.h.b16 %v76
  %v428 = vunpack.c.l.b16 %v77
  %v429 = vunpack.c.h.b16 %v77
  %v430 = vunpack.c.l.b16 %v78
  %v431 = vunpack.c.h.b16 %v78
  %v432 = vunpack.c.l.b16 %v79
  %v433 = vunpack.c.h.b16 %v79
  %v434 = vunpack.c.l.b16 %v80
  %v435 = vunpack.c.h.b16 %v80
  %v436 = vunpack.c.l.b16 %v81
  %v437 = vunpack.c.h.b16 %v81
  %v438 = vunpack.c.l.b16 %v82
  %v439 = vunpack.c.h.b16 %v82
  %v440 = vunpack.c.l.b16 %v83
  %v441 = vunpack.c.h.b16 %v83
  %v442 = vunpack.c.l.b16 %v84
  %v443 = vunpack.c.h.b16 %v84
  %v444 = vunpack.c.l.b16 %v85
  %v445 = vunpack.c.h.b16 %v85
  %v446 = vunpack.c.l.b16 %v86
  %v447 = vunpack.c.h.b16 %v86
  %v448 = vunpack.c.l.b16 %v87
  %v449 = vunpack.c.h.b16 %v87
  %v450 = vunpack.c.l.b16 %v88
  %v451 = vunpack.c.h.b16 %v88
  %v452 = vunpack.c.l.b16 %v89
  %v453 = vunpack.c.h.b16 %v89
  %v454 = vunpack.c.l.b16 %v90
  %v455 = vunpack.c.h.b16 %v90
  %v456 = vunpack.c.l.b16 %v91
  %v457 = vunpack.c.h.b16 %v91
  %v458 = vunpack.c.l.b16 %v92
  %v459 = vunpack.c.h.b16 %v92
  %v460 = vunpack.c.l.b16 %v93
  %v461 = vunpack.c.h.b16 %v93
  %v462 = vunpack.c.l.b16 %v94
  %v463 = vunpack.c.h.b16 %v94
  %v464 = vunpack.c.l.b16 %v95
  %v465 = vunpack.c.h.b16 %v95
  %v466 = vunpack.c.l.b16 %v96
  %v467 = vunpack.c.h.b16 %v96
  %v468 = vunpack.c.l.b16 %v97
  %v469 = vunpack.c.h.b16 %v97
  %v470 = vunpack.c.l.b16 %v98
  %v471 = vunpack.c.h.b16 %v98
  %v472 = vunpack.c.l.b16 %v99
  %v473 = vunpack.c.h.b16 %v99
  %v474 = vunpack.c.l.b16 %v100
  %v475 = vunpack.c.h.b16 %v100
  %v476 = vunpack.c.l.b16 %v101
  %v477 = vunpack.c.h.b16 %v101
  %v478 = vunpack.c.l.b16 %v102
  %v479 = vunpack.c.h.b16 %v102
  %v480 = vunpack.c.l.b16 %v103
  %v481 = vunpack.c.h.b16 %v103
  %v482 = vunpack.c.l.b16 %v104
  %v483 = vunpack.c.h.b16 %v104
  %v484 = vunpack.c.l.b16 %v105
  %v485 = vunpack.c.h.b16 %v105
  %v486 = vunpack.c.l.b16 %v106
  %v487 = vunpack.c.h.b16 %v106
  %v488 = vunpack.c.l.b16 %v107
  %v489 = vunpack.c.h.b16 %v107
  %v490 = vunpack.c.l.b16 %v108
  %v491 = vunpack.c.h.b16 %v108
  %v492 = vunpack.c.l.b16 %v109
  %v493 = vunpack.c.h.b16 %v109
  %v494 = vunpack.c.l.b16 %v110
  %v495 = vunpack.c.h.b16 %v110
  %v496 = vunpack.c.l.b16 %v111
  %v497 = vunpack.c.h.b16 %v111
  %v498 = vunpack.c.l.b16 %v112
  %v499 = vunpack.c.h.b16 %v112
  %v500 = vunpack.c.l.b16 %v113
  %v501 = vunpack.c.h.b16 %v113
  %v502 = vunpack.c.l.b16 %v114
  %v503 = vunpack.c.h.b16 %v114
  %v504 = vunpack.c.l.b16 %v115
  %v505 = vunpack.c.h.b16 %v115
  %v506 = vunpack.c.l.b16 %v116
  %v507 = vunpack.c.h.b16 %v116
  %v508 = vunpack.c.l.b16 %v117
  %v509 = vunpack.c.h.b16 %v117
  %v510 = vunpack.c.l.b16 %v118
  %v511 = vunpack.c.h.b16 %v118
  %v512 = vunpack.c.l.b16 %v119
  %v513 = vunpack.c.h.b16 %v119
  %v514 = vunpack.c.l.b16 %v120
  %v515 = vunpack.c.h.b16 %v120
  %v516 = vunpack.c.l.b16 %v121
  %v517 = vunpack.c.h.b16 %v121
  %v518 = vunpack.c.l.b16 %v122
  %v519 = vunpack.c.h.b16 %v122
  %v520 = vunpack.c.l.b16 %v123
  %v521 = vunpack.c.h.b16 %v123
  %v522 = vunpack.c.l.b16 %v124
  %v523 = vunpack.c.h.b16 %v124
  %v524 = vunpack.c.l.b16 %v125
  %v525 = vunpack.c.h.b16 %v125
  %v526 = vunpack.c.l.b16 %v126
  %v527 = vunpack.c.h.b16 %v126
  %v528 = vunpack.c.l.b16 %v127
  %v529 = vunpack.c.h.b16 %v127
  %v530 = vunpack.c.l.b16 %v128
  %v531 = vunpack.c.h.b16 %v128
  %v532 = vunpack.c.l.b16 %v129
  %v533 = vunpack.c.h.b16 %v129
  %v534 = vunpack.c.l.b16 %v130
  %v535 = vunpack.c.h.b16 %v130
  %v536 = vunpack.c.l.b16 %v131
  %v537 = vunpack.c.h.b16 %v131
  %v538 = vunpack.c.l.b16 %v132
  %v539 = vunpack.c.h.b16 %v132
  %v540 = vunpack.c.l.b16 %v133
  %v541 = vunpack.c.h.b16 %v133
  %v542 = vunpack.c.l.b16 %v134
  %v543 = vunpack.c.h.b16 %v134
  %v544 = vunpack.c.l.b16 %v135
  %v545 = vunpack.c.h.b16 %v135
  %v546 = vunpack.c.l.b16 %v136
  %v547 = vunpack.c.h.b16 %v136
  %v548 = vunpack.c.l.b16 %v137
  %v549 = vunpack.c.h.b16 %v137
  %v550 = vunpack.c.l.b16 %v138
  %v551 = vunpack.c.h.b16 %v138
  %v552 = vunpack.c.l.b16 %v139
  %v553 = vunpack.c.h.b16 %v139
  %v554 = vunpack.c.l.b16 %v140
  %v555 = vunpack.c.h.b16 %v140
  %v556 = vunpack.c.l.b16 %v141
  %v557 = vunpack.c.h.b16 %v141
  %v558 = vunpack.c.l.b16 %v142
  %v559 = vunpack.c.h.b16 %v142
  %v560 = vunpack.c.l.b16 %v143
  %v561 = vunpack.c.h.b16 %v143
  %v562 = vunpack.c.l.b16 %v144
  %v563 = vunpack.c.h.b16 %v144
  %v564 = vunpack.c.l.b16 %v145
  %v565 = vunpack.c.h.b16 %v145
  %v566 = vunpack.c.l.b16 %v146
  %v567 = vunpack.c.h.b16 %v146
  %v568 = vunpack.c.l.b16 %v147
  %v569 = vunpack.c.h.b16 %v147
  %v570 = vunpack.c.l.b16 %v148
  %v571 = vunpack.c.h.b16 %v148
  %v572 = vunpack.c.l.b16 %v149
  %v573 = vunpack.c.h.b16 %v149
  %v574 = vunpack.c.l.b16 %v150
  %v575 = vunpack.c.h.b16 %v150
  %v576 = vunpack.c.l.b16 %v151
  %v577 = vunpack.c.h.b16 %v151
  %v578 = vpack.c.b16 %v390, %v386
  %v579 = vpack.c.b16 %v391, %v387
  %v580 = vpack.c.b16 %v392, %v388
  %v581 = vpack.c.b16 %v393, %v389
  %v582 = vpack.c.b16 %v398, %v394
  %v583 = vpack.c.b16 %v399, %v395
  %v584 = vpack.c.b16 %v400, %v396
  %v585 = vpack.c.b16 %v401, %v397
  %v586 = vpack.c.b16 %v406, %v402
  %v587 = vpack.c.b16 %v407, %v403
  %v588 = vpack.c.b16 %v408, %v404
  %v589 = vpack.c.b16 %v409, %v405
  %v590 = vpack.c.b16 %v414, %v410
  %v591 = vpack.c.b16 %v415, %v411
  %v592 = vpack.c.b16 %v416, %v412
  %v593 = vpack.c.b16 %v417, %v413
  %v594 = vpack.c.b16 %v422, %v418
  %v595 = vpack.c.b16 %v423, %v419
  %v596 = vpack.c.b16 %v424, %v420
  %v597 = vpack.c.b16 %v425, %v421
  %v598 = vpack.c.b16 %v430, %v426
  %v599 = vpack.c.b16 %v431, %v427
  %v600 = vpack.c.b16 %v432, %v428
  %v601 = vpack.c.b16 %v433, %v429
  %v602 = vpack.c.b16 %v438, %v434
  %v603 = vpack.c.b16 %v439, %v435
  %v604 = vpack.c.b16 %v440, %v436
  %v605 = vpack.c.b16 %v441, %v437
  %v606 = vpack.c.b16 %v446, %v442
  %v607 = vpack.c.b16 %v447, %v443
  %v608 = vpack.c.b16 %v448, %v444
  %v609 = vpack.c.b16 %v449, %v445
  %v610 = vpack.c.b16 %v454, %v450
  %v611 = vpack.c.b16 %v455, %v451
  %v612 = vpack.c.b16 %v456, %v452
  %v613 = vpack.c.b16 %v457, %v453
  %v614 = vpack.c.b16 %v462, %v458
  %v615 = vpack.c.b16 %v463, %v459
  %v616 = vpack.c.b16 %v464, %v460
  %v617 = vpack.c.b16 %v465, %v461
  %v618 = vpack.c.b16 %v470, %v466
  %v619 = vpack.c.b16 %v471, %v467
  %v620 = vpack.c.b16 %v472, %v468
  %v621 = vpack.c.b16 %v473, %v469
  %v622 = vpack.c.b16 %v478, %v474
  %v623 = vpack.c.b16 %v479, %v475
  %v624 = vpack.c.b16 %v480, %v476
  %v625 = vpack.c.b16 %v481, %v477
  %v626 = vpack.c.b16 %v486, %v482
  %v627 = vpack.c.b16 %v487, %v483
  %v628 = vpack.c.b16 %v488, %v484
  %v629 = vpack.c.b16 %v489, %v485
  %v630 = vpack.c.b16 %v494, %v490
  %v631 = vpack.c.b16 %v495, %v491
  %v632 = vpack.c.b16 %v496, %v492
  %v633 = vpack.c.b16 %v497, %v493
  %v634 = vpack.c.b16 %v502, %v498
  %v635 = vpack.c.b16 %v503, %v499
  %v636 = vpack.c.b16 %v504, %v500
  %v637 = vpack.c.b16 %v505, %v501
  %v638 = vpack.c.b16 %v510, %v506
  %v639 = vpack.c.b16 %v511, %v507
  %v640 = vpack.c.b16 %v512, %v508
  %v641 = vpack.c.b16 %v513, %v509
  %v642 = vpack.c.b16 %v518, %v514
  %v643 = vpack.c.b16 %v519, %v515
  %v644 = vpack.c.b16 %v520, %v516
  %v645 = vpack.c.b16 %v521, %v517
  %v646 = vpack.c.b16 %v526, %v522
  %v647 = vpack.c.b16 %v527, %v523
  %v648 = vpack.c.b16 %v528, %v524
  %v649 = vpack.c.b16 %v529, %v525
  %v650 = vpack.c.b16 %v534, %v530
  %v651 = vpack.c.b16 %v535, %v531
  %v652 = vpack.c.b16 %v536, %v532
  %v653 = vpack.c.b16 %v537, %v533
  %v654 = vpack.c.b16 %v542, %v538
  %v655 = vpack.c.b16 %v543, %v539
  %v656 = vpack.c.b16 %v544, %v540
  %v657 = vpack.c.b16 %v545, %v541
  %v658 = vpack.c.b16 %v550, %v546
  %v659 = vpack.c.b16 %v551, %v547
  %v660 = vpack.c.b16 %v552, %v548
  %v661 = vpack.c.b16 %v553, %v549
  %v662 = vpack.c.b16 %v558, %v554
  %v663 = vpack.c.b16 %v559, %v555
  %v664 = vpack.c.b16 %v560, %v556
  %v665 = vpack.c.b16 %v561, %v557
  %v666 = vpack.c.b16 %v566, %v562
  %v667 = vpack.c.b16 %v567, %v563
  %v668 = vpack.c.b16 %v568, %v564
  %v669 = vpack.c.b16 %v569, %v565
  %v670 = vpack.c.b16 %v574, %v570
  %v671 = vpack.c.b16 %v575, %v571
  %v672 = vpack.c.b16 %v576, %v572
  %v673 = vpack.c.b16 %v577, %v573
  %770 = vmatpush.bf16.msra.mxu0 %v606
  %771 = vmatpush.bf16.msra.mxu0 %v602
  %772 = vmatpush.bf16.msra.mxu0 %v598
  %773 = vmatpush.bf16.msra.mxu0 %v594
  %774 = vmatpush.bf16.msra.mxu0 %v590
  %775 = vmatpush.bf16.msra.mxu0 %v586
  %776 = vmatpush.bf16.msra.mxu0 %v582
  %777 = vmatpush.bf16.msra.mxu0 %v578
  %778 = vmatmul.bf16.gmra.mxu0 %v242
  %v779 = vpop.f32.mrf.mxu0
  %v780 = vadd.f32 %v154, %v779
  %v781 = vpop.f32.mrf.mxu0
  %v782 = vadd.f32 %v154, %v781
  %783 = vmatmul.bf16.gmra.mxu0 %v245
  %v784 = vpop.f32.mrf.mxu0
  %v785 = vadd.f32 %v154, %v784
  %v786 = vpop.f32.mrf.mxu0
  %v787 = vadd.f32 %v154, %v786
  %788 = vmatmul.bf16.gmra.mxu0 %v248
  %v789 = vpop.f32.mrf.mxu0
  %v790 = vadd.f32 %v154, %v789
  %v791 = vpop.f32.mrf.mxu0
  %v792 = vadd.f32 %v154, %v791
  %793 = vmatmul.bf16.gmra.mxu0 %v251
  %v794 = vpop.f32.mrf.mxu0
  %v795 = vadd.f32 %v154, %v794
  %v796 = vpop.f32.mrf.mxu0
  %v797 = vadd.f32 %v154, %v796
  %798 = vmatmul.bf16.gmra.mxu0 %v254
  %v799 = vpop.f32.mrf.mxu0
  %v800 = vadd.f32 %v154, %v799
  %v801 = vpop.f32.mrf.mxu0
  %v802 = vadd.f32 %v154, %v801
  %803 = vmatmul.bf16.gmra.mxu0 %v257
  %v804 = vpop.f32.mrf.mxu0
  %v805 = vadd.f32 %v154, %v804
  %v806 = vpop.f32.mrf.mxu0
  %v807 = vadd.f32 %v154, %v806
  %808 = vmatmul.bf16.gmra.mxu0 %v260
  %v809 = vpop.f32.mrf.mxu0
  %v810 = vadd.f32 %v154, %v809
  %v811 = vpop.f32.mrf.mxu0
  %v812 = vadd.f32 %v154, %v811
  %813 = vmatmul.bf16.gmra.mxu0 %v263
  %v814 = vpop.f32.mrf.mxu0
  %v815 = vadd.f32 %v154, %v814
  %v816 = vpop.f32.mrf.mxu0
  %v817 = vadd.f32 %v154, %v816
  %818 = vdwg.mxu0
  %819 = vmatpush.bf16.msra.mxu0 %v638
  %820 = vmatpush.bf16.msra.mxu0 %v634
  %821 = vmatpush.bf16.msra.mxu0 %v630
  %822 = vmatpush.bf16.msra.mxu0 %v626
  %823 = vmatpush.bf16.msra.mxu0 %v622
  %824 = vmatpush.bf16.msra.mxu0 %v618
  %825 = vmatpush.bf16.msra.mxu0 %v614
  %826 = vmatpush.bf16.msra.mxu0 %v610
  %827 = vmatmul.bf16.gmra.mxu0 %v243
  %v828 = vpop.f32.mrf.mxu0
  %v829 = vadd.f32 %v780, %v828
  %v830 = vpop.f32.mrf.mxu0
  %v831 = vadd.f32 %v782, %v830
  %832 = vmatmul.bf16.gmra.mxu0 %v246
  %v833 = vpop.f32.mrf.mxu0
  %v834 = vadd.f32 %v785, %v833
  %v835 = vpop.f32.mrf.mxu0
  %v836 = vadd.f32 %v787, %v835
  %837 = vmatmul.bf16.gmra.mxu0 %v249
  %v838 = vpop.f32.mrf.mxu0
  %v839 = vadd.f32 %v790, %v838
  %v840 = vpop.f32.mrf.mxu0
  %v841 = vadd.f32 %v792, %v840
  %842 = vmatmul.bf16.gmra.mxu0 %v252
  %v843 = vpop.f32.mrf.mxu0
  %v844 = vadd.f32 %v795, %v843
  %v845 = vpop.f32.mrf.mxu0
  %v846 = vadd.f32 %v797, %v845
  %847 = vmatmul.bf16.gmra.mxu0 %v255
  %v848 = vpop.f32.mrf.mxu0
  %v849 = vadd.f32 %v800, %v848
  %v850 = vpop.f32.mrf.mxu0
  %v851 = vadd.f32 %v802, %v850
  %852 = vmatmul.bf16.gmra.mxu0 %v258
  %v853 = vpop.f32.mrf.mxu0
  %v854 = vadd.f32 %v805, %v853
  %v855 = vpop.f32.mrf.mxu0
  %v856 = vadd.f32 %v807, %v855
  %857 = vmatmul.bf16.gmra.mxu0 %v261
  %v858 = vpop.f32.mrf.mxu0
  %v859 = vadd.f32 %v810, %v858
  %v860 = vpop.f32.mrf.mxu0
  %v861 = vadd.f32 %v812, %v860
  %862 = vmatmul.bf16.gmra.mxu0 %v264
  %v863 = vpop.f32.mrf.mxu0
  %v864 = vadd.f32 %v815, %v863
  %v865 = vpop.f32.mrf.mxu0
  %v866 = vadd.f32 %v817, %v865
  %867 = vdwg.mxu0
  %868 = vmatpush.bf16.msra.mxu0 %v670
  %869 = vmatpush.bf16.msra.mxu0 %v666
  %870 = vmatpush.bf16.msra.mxu0 %v662
  %871 = vmatpush.bf16.msra.mxu0 %v658
  %872 = vmatpush.bf16.msra.mxu0 %v654
  %873 = vmatpush.bf16.msra.mxu0 %v650
  %874 = vmatpush.bf16.msra.mxu0 %v646
  %875 = vmatpush.bf16.msra.mxu0 %v642
  %876 = vmatmul.bf16.gmra.mxu0 %v244
  %v877 = vpop.f32.mrf.mxu0
  %v878 = vadd.f32 %v829, %v877
  %v879 = vpop.f32.mrf.mxu0
  %v880 = vadd.f32 %v831, %v879
  %881 = vmatmul.bf16.gmra.mxu0 %v247
  %v882 = vpop.f32.mrf.mxu0
  %v883 = vadd.f32 %v834, %v882
  %v884 = vpop.f32.mrf.mxu0
  %v885 = vadd.f32 %v836, %v884
  %886 = vmatmul.bf16.gmra.mxu0 %v250
  %v887 = vpop.f32.mrf.mxu0
  %v888 = vadd.f32 %v839, %v887
  %v889 = vpop.f32.mrf.mxu0
  %v890 = vadd.f32 %v841, %v889
  %891 = vmatmul.bf16.gmra.mxu0 %v253
  %v892 = vpop.f32.mrf.mxu0
  %v893 = vadd.f32 %v844, %v892
  %v894 = vpop.f32.mrf.mxu0
  %v895 = vadd.f32 %v846, %v894
  %896 = vmatmul.bf16.gmra.mxu0 %v256
  %v897 = vpop.f32.mrf.mxu0
  %v898 = vadd.f32 %v849, %v897
  %v899 = vpop.f32.mrf.mxu0
  %v900 = vadd.f32 %v851, %v899
  %901 = vmatmul.bf16.gmra.mxu0 %v259
  %v902 = vpop.f32.mrf.mxu0
  %v903 = vadd.f32 %v854, %v902
  %v904 = vpop.f32.mrf.mxu0
  %v905 = vadd.f32 %v856, %v904
  %906 = vmatmul.bf16.gmra.mxu0 %v262
  %v907 = vpop.f32.mrf.mxu0
  %v908 = vadd.f32 %v859, %v907
  %v909 = vpop.f32.mrf.mxu0
  %v910 = vadd.f32 %v861, %v909
  %911 = vmatmul.bf16.gmra.mxu0 %v265
  %v912 = vpop.f32.mrf.mxu0
  %v913 = vadd.f32 %v864, %v912
  %v914 = vpop.f32.mrf.mxu0
  %v915 = vadd.f32 %v866, %v914
  %916 = vdwg.mxu0
  %917 = vmatpush.bf16.msra.mxu0 %v607
  %918 = vmatpush.bf16.msra.mxu0 %v603
  %919 = vmatpush.bf16.msra.mxu0 %v599
  %920 = vmatpush.bf16.msra.mxu0 %v595
  %921 = vmatpush.bf16.msra.mxu0 %v591
  %922 = vmatpush.bf16.msra.mxu0 %v587
  %923 = vmatpush.bf16.msra.mxu0 %v583
  %924 = vmatpush.bf16.msra.mxu0 %v579
  %925 = vmatmul.bf16.gmra.mxu0 %v242
  %v926 = vpop.f32.mrf.mxu0
  %v927 = vadd.f32 %v155, %v926
  %v928 = vpop.f32.mrf.mxu0
  %v929 = vadd.f32 %v155, %v928
  %930 = vmatmul.bf16.gmra.mxu0 %v245
  %v931 = vpop.f32.mrf.mxu0
  %v932 = vadd.f32 %v155, %v931
  %v933 = vpop.f32.mrf.mxu0
  %v934 = vadd.f32 %v155, %v933
  %935 = vmatmul.bf16.gmra.mxu0 %v248
  %v936 = vpop.f32.mrf.mxu0
  %v937 = vadd.f32 %v155, %v936
  %v938 = vpop.f32.mrf.mxu0
  %v939 = vadd.f32 %v155, %v938
  %940 = vmatmul.bf16.gmra.mxu0 %v251
  %v941 = vpop.f32.mrf.mxu0
  %v942 = vadd.f32 %v155, %v941
  %v943 = vpop.f32.mrf.mxu0
  %v944 = vadd.f32 %v155, %v943
  %945 = vmatmul.bf16.gmra.mxu0 %v254
  %v946 = vpop.f32.mrf.mxu0
  %v947 = vadd.f32 %v155, %v946
  %v948 = vpop.f32.mrf.mxu0
  %v949 = vadd.f32 %v155, %v948
  %950 = vmatmul.bf16.gmra.mxu0 %v257
  %v951 = vpop.f32.mrf.mxu0
  %v952 = vadd.f32 %v155, %v951
  %v953 = vpop.f32.mrf.mxu0
  %v954 = vadd.f32 %v155, %v953
  %955 = vmatmul.bf16.gmra.mxu0 %v260
  %v956 = vpop.f32.mrf.mxu0
  %v957 = vadd.f32 %v155, %v956
  %v958 = vpop.f32.mrf.mxu0
  %v959 = vadd.f32 %v155, %v958
  %960 = vmatmul.bf16.gmra.mxu0 %v263
  %v961 = vpop.f32.mrf.mxu0
  %v962 = vadd.f32 %v155, %v961
  %v963 = vpop.f32.mrf.mxu0
  %v964 = vadd.f32 %v155, %v963
  %965 = vdwg.mxu0
  %966 = vmatpush.bf16.msra.mxu0 %v639
  %967 = vmatpush.bf16.msra.mxu0 %v635
  %968 = vmatpush.bf16.msra.mxu0 %v631
  %969 = vmatpush.bf16.msra.mxu0 %v627
  %970 = vmatpush.bf16.msra.mxu0 %v623
  %971 = vmatpush.bf16.msra.mxu0 %v619
  %972 = vmatpush.bf16.msra.mxu0 %v615
  %973 = vmatpush.bf16.msra.mxu0 %v611
  %974 = vmatmul.bf16.gmra.mxu0 %v243
  %v975 = vpop.f32.mrf.mxu0
  %v976 = vadd.f32 %v927, %v975
  %v977 = vpop.f32.mrf.mxu0
  %v978 = vadd.f32 %v929, %v977
  %979 = vmatmul.bf16.gmra.mxu0 %v246
  %v980 = vpop.f32.mrf.mxu0
  %v981 = vadd.f32 %v932, %v980
  %v982 = vpop.f32.mrf.mxu0
  %v983 = vadd.f32 %v934, %v982
  %984 = vmatmul.bf16.gmra.mxu0 %v249
  %v985 = vpop.f32.mrf.mxu0
  %v986 = vadd.f32 %v937, %v985
  %v987 = vpop.f32.mrf.mxu0
  %v988 = vadd.f32 %v939, %v987
  %989 = vmatmul.bf16.gmra.mxu0 %v252
  %v990 = vpop.f32.mrf.mxu0
  %v991 = vadd.f32 %v942, %v990
  %v992 = vpop.f32.mrf.mxu0
  %v993 = vadd.f32 %v944, %v992
  %994 = vmatmul.bf16.gmra.mxu0 %v255
  %v995 = vpop.f32.mrf.mxu0
  %v996 = vadd.f32 %v947, %v995
  %v997 = vpop.f32.mrf.mxu0
  %v998 = vadd.f32 %v949, %v997
  %999 = vmatmul.bf16.gmra.mxu0 %v258
  %v1000 = vpop.f32.mrf.mxu0
  %v1001 = vadd.f32 %v952, %v1000
  %v1002 = vpop.f32.mrf.mxu0
  %v1003 = vadd.f32 %v954, %v1002
  %1004 = vmatmul.bf16.gmra.mxu0 %v261
  %v1005 = vpop.f32.mrf.mxu0
  %v1006 = vadd.f32 %v957, %v1005
  %v1007 = vpop.f32.mrf.mxu0
  %v1008 = vadd.f32 %v959, %v1007
  %1009 = vmatmul.bf16.gmra.mxu0 %v264
  %v1010 = vpop.f32.mrf.mxu0
  %v1011 = vadd.f32 %v962, %v1010
  %v1012 = vpop.f32.mrf.mxu0
  %v1013 = vadd.f32 %v964, %v1012
  %1014 = vdwg.mxu0
  %1015 = vmatpush.bf16.msra.mxu0 %v671
  %1016 = vmatpush.bf16.msra.mxu0 %v667
  %1017 = vmatpush.bf16.msra.mxu0 %v663
  %1018 = vmatpush.bf16.msra.mxu0 %v659
  %1019 = vmatpush.bf16.msra.mxu0 %v655
  %1020 = vmatpush.bf16.msra.mxu0 %v651
  %1021 = vmatpush.bf16.msra.mxu0 %v647
  %1022 = vmatpush.bf16.msra.mxu0 %v643
  %1023 = vmatmul.bf16.gmra.mxu0 %v244
  %v1024 = vpop.f32.mrf.mxu0
  %v1025 = vadd.f32 %v976, %v1024
  %v1026 = vpop.f32.mrf.mxu0
  %v1027 = vadd.f32 %v978, %v1026
  %1028 = vmatmul.bf16.gmra.mxu0 %v247
  %v1029 = vpop.f32.mrf.mxu0
  %v1030 = vadd.f32 %v981, %v1029
  %v1031 = vpop.f32.mrf.mxu0
  %v1032 = vadd.f32 %v983, %v1031
  %1033 = vmatmul.bf16.gmra.mxu0 %v250
  %v1034 = vpop.f32.mrf.mxu0
  %v1035 = vadd.f32 %v986, %v1034
  %v1036 = vpop.f32.mrf.mxu0
  %v1037 = vadd.f32 %v988, %v1036
  %1038 = vmatmul.bf16.gmra.mxu0 %v253
  %v1039 = vpop.f32.mrf.mxu0
  %v1040 = vadd.f32 %v991, %v1039
  %v1041 = vpop.f32.mrf.mxu0
  %v1042 = vadd.f32 %v993, %v1041
  %1043 = vmatmul.bf16.gmra.mxu0 %v256
  %v1044 = vpop.f32.mrf.mxu0
  %v1045 = vadd.f32 %v996, %v1044
  %v1046 = vpop.f32.mrf.mxu0
  %v1047 = vadd.f32 %v998, %v1046
  %1048 = vmatmul.bf16.gmra.mxu0 %v259
  %v1049 = vpop.f32.mrf.mxu0
  %v1050 = vadd.f32 %v1001, %v1049
  %v1051 = vpop.f32.mrf.mxu0
  %v1052 = vadd.f32 %v1003, %v1051
  %1053 = vmatmul.bf16.gmra.mxu0 %v262
  %v1054 = vpop.f32.mrf.mxu0
  %v1055 = vadd.f32 %v1006, %v1054
  %v1056 = vpop.f32.mrf.mxu0
  %v1057 = vadd.f32 %v1008, %v1056
  %1058 = vmatmul.bf16.gmra.mxu0 %v265
  %v1059 = vpop.f32.mrf.mxu0
  %v1060 = vadd.f32 %v1011, %v1059
  %v1061 = vpop.f32.mrf.mxu0
  %v1062 = vadd.f32 %v1013, %v1061
  %1063 = vdwg.mxu0
  %1064 = vmatpush.bf16.msra.mxu0 %v608
  %1065 = vmatpush.bf16.msra.mxu0 %v604
  %1066 = vmatpush.bf16.msra.mxu0 %v600
  %1067 = vmatpush.bf16.msra.mxu0 %v596
  %1068 = vmatpush.bf16.msra.mxu0 %v592
  %1069 = vmatpush.bf16.msra.mxu0 %v588
  %1070 = vmatpush.bf16.msra.mxu0 %v584
  %1071 = vmatpush.bf16.msra.mxu0 %v580
  %1072 = vmatmul.bf16.gmra.mxu0 %v242
  %v1073 = vpop.f32.mrf.mxu0
  %v1074 = vadd.f32 %v156, %v1073
  %v1075 = vpop.f32.mrf.mxu0
  %v1076 = vadd.f32 %v156, %v1075
  %1077 = vmatmul.bf16.gmra.mxu0 %v245
  %v1078 = vpop.f32.mrf.mxu0
  %v1079 = vadd.f32 %v156, %v1078
  %v1080 = vpop.f32.mrf.mxu0
  %v1081 = vadd.f32 %v156, %v1080
  %1082 = vmatmul.bf16.gmra.mxu0 %v248
  %v1083 = vpop.f32.mrf.mxu0
  %v1084 = vadd.f32 %v156, %v1083
  %v1085 = vpop.f32.mrf.mxu0
  %v1086 = vadd.f32 %v156, %v1085
  %1087 = vmatmul.bf16.gmra.mxu0 %v251
  %v1088 = vpop.f32.mrf.mxu0
  %v1089 = vadd.f32 %v156, %v1088
  %v1090 = vpop.f32.mrf.mxu0
  %v1091 = vadd.f32 %v156, %v1090
  %1092 = vmatmul.bf16.gmra.mxu0 %v254
  %v1093 = vpop.f32.mrf.mxu0
  %v1094 = vadd.f32 %v156, %v1093
  %v1095 = vpop.f32.mrf.mxu0
  %v1096 = vadd.f32 %v156, %v1095
  %1097 = vmatmul.bf16.gmra.mxu0 %v257
  %v1098 = vpop.f32.mrf.mxu0
  %v1099 = vadd.f32 %v156, %v1098
  %v1100 = vpop.f32.mrf.mxu0
  %v1101 = vadd.f32 %v156, %v1100
  %1102 = vmatmul.bf16.gmra.mxu0 %v260
  %v1103 = vpop.f32.mrf.mxu0
  %v1104 = vadd.f32 %v156, %v1103
  %v1105 = vpop.f32.mrf.mxu0
  %v1106 = vadd.f32 %v156, %v1105
  %1107 = vmatmul.bf16.gmra.mxu0 %v263
  %v1108 = vpop.f32.mrf.mxu0
  %v1109 = vadd.f32 %v156, %v1108
  %v1110 = vpop.f32.mrf.mxu0
  %v1111 = vadd.f32 %v156, %v1110
  %1112 = vdwg.mxu0
  %1113 = vmatpush.bf16.msra.mxu0 %v640
  %1114 = vmatpush.bf16.msra.mxu0 %v636
  %1115 = vmatpush.bf16.msra.mxu0 %v632
  %1116 = vmatpush.bf16.msra.mxu0 %v628
  %1117 = vmatpush.bf16.msra.mxu0 %v624
  %1118 = vmatpush.bf16.msra.mxu0 %v620
  %1119 = vmatpush.bf16.msra.mxu0 %v616
  %1120 = vmatpush.bf16.msra.mxu0 %v612
  %1121 = vmatmul.bf16.gmra.mxu0 %v243
  %v1122 = vpop.f32.mrf.mxu0
  %v1123 = vadd.f32 %v1074, %v1122
  %v1124 = vpop.f32.mrf.mxu0
  %v1125 = vadd.f32 %v1076, %v1124
  %1126 = vmatmul.bf16.gmra.mxu0 %v246
  %v1127 = vpop.f32.mrf.mxu0
  %v1128 = vadd.f32 %v1079, %v1127
  %v1129 = vpop.f32.mrf.mxu0
  %v1130 = vadd.f32 %v1081, %v1129
  %1131 = vmatmul.bf16.gmra.mxu0 %v249
  %v1132 = vpop.f32.mrf.mxu0
  %v1133 = vadd.f32 %v1084, %v1132
  %v1134 = vpop.f32.mrf.mxu0
  %v1135 = vadd.f32 %v1086, %v1134
  %1136 = vmatmul.bf16.gmra.mxu0 %v252
  %v1137 = vpop.f32.mrf.mxu0
  %v1138 = vadd.f32 %v1089, %v1137
  %v1139 = vpop.f32.mrf.mxu0
  %v1140 = vadd.f32 %v1091, %v1139
  %1141 = vmatmul.bf16.gmra.mxu0 %v255
  %v1142 = vpop.f32.mrf.mxu0
  %v1143 = vadd.f32 %v1094, %v1142
  %v1144 = vpop.f32.mrf.mxu0
  %v1145 = vadd.f32 %v1096, %v1144
  %1146 = vmatmul.bf16.gmra.mxu0 %v258
  %v1147 = vpop.f32.mrf.mxu0
  %v1148 = vadd.f32 %v1099, %v1147
  %v1149 = vpop.f32.mrf.mxu0
  %v1150 = vadd.f32 %v1101, %v1149
  %1151 = vmatmul.bf16.gmra.mxu0 %v261
  %v1152 = vpop.f32.mrf.mxu0
  %v1153 = vadd.f32 %v1104, %v1152
  %v1154 = vpop.f32.mrf.mxu0
  %v1155 = vadd.f32 %v1106, %v1154
  %1156 = vmatmul.bf16.gmra.mxu0 %v264
  %v1157 = vpop.f32.mrf.mxu0
  %v1158 = vadd.f32 %v1109, %v1157
  %v1159 = vpop.f32.mrf.mxu0
  %v1160 = vadd.f32 %v1111, %v1159
  %1161 = vdwg.mxu0
  %1162 = vmatpush.bf16.msra.mxu0 %v672
  %1163 = vmatpush.bf16.msra.mxu0 %v668
  %1164 = vmatpush.bf16.msra.mxu0 %v664
  %1165 = vmatpush.bf16.msra.mxu0 %v660
  %1166 = vmatpush.bf16.msra.mxu0 %v656
  %1167 = vmatpush.bf16.msra.mxu0 %v652
  %1168 = vmatpush.bf16.msra.mxu0 %v648
  %1169 = vmatpush.bf16.msra.mxu0 %v644
  %1170 = vmatmul.bf16.gmra.mxu0 %v244
  %v1171 = vpop.f32.mrf.mxu0
  %v1172 = vadd.f32 %v1123, %v1171
  %v1173 = vpop.f32.mrf.mxu0
  %v1174 = vadd.f32 %v1125, %v1173
  %1175 = vmatmul.bf16.gmra.mxu0 %v247
  %v1176 = vpop.f32.mrf.mxu0
  %v1177 = vadd.f32 %v1128, %v1176
  %v1178 = vpop.f32.mrf.mxu0
  %v1179 = vadd.f32 %v1130, %v1178
  %1180 = vmatmul.bf16.gmra.mxu0 %v250
  %v1181 = vpop.f32.mrf.mxu0
  %v1182 = vadd.f32 %v1133, %v1181
  %v1183 = vpop.f32.mrf.mxu0
  %v1184 = vadd.f32 %v1135, %v1183
  %1185 = vmatmul.bf16.gmra.mxu0 %v253
  %v1186 = vpop.f32.mrf.mxu0
  %v1187 = vadd.f32 %v1138, %v1186
  %v1188 = vpop.f32.mrf.mxu0
  %v1189 = vadd.f32 %v1140, %v1188
  %1190 = vmatmul.bf16.gmra.mxu0 %v256
  %v1191 = vpop.f32.mrf.mxu0
  %v1192 = vadd.f32 %v1143, %v1191
  %v1193 = vpop.f32.mrf.mxu0
  %v1194 = vadd.f32 %v1145, %v1193
  %1195 = vmatmul.bf16.gmra.mxu0 %v259
  %v1196 = vpop.f32.mrf.mxu0
  %v1197 = vadd.f32 %v1148, %v1196
  %v1198 = vpop.f32.mrf.mxu0
  %v1199 = vadd.f32 %v1150, %v1198
  %1200 = vmatmul.bf16.gmra.mxu0 %v262
  %v1201 = vpop.f32.mrf.mxu0
  %v1202 = vadd.f32 %v1153, %v1201
  %v1203 = vpop.f32.mrf.mxu0
  %v1204 = vadd.f32 %v1155, %v1203
  %1205 = vmatmul.bf16.gmra.mxu0 %v265
  %v1206 = vpop.f32.mrf.mxu0
  %v1207 = vadd.f32 %v1158, %v1206
  %v1208 = vpop.f32.mrf.mxu0
  %v1209 = vadd.f32 %v1160, %v1208
  %1210 = vdwg.mxu0
  %1211 = vmatpush.bf16.msra.mxu0 %v609
  %1212 = vmatpush.bf16.msra.mxu0 %v605
  %1213 = vmatpush.bf16.msra.mxu0 %v601
  %1214 = vmatpush.bf16.msra.mxu0 %v597
  %1215 = vmatpush.bf16.msra.mxu0 %v593
  %1216 = vmatpush.bf16.msra.mxu0 %v589
  %1217 = vmatpush.bf16.msra.mxu0 %v585
  %1218 = vmatpush.bf16.msra.mxu0 %v581
  %1219 = vmatmul.bf16.gmra.mxu0 %v242
  %v1220 = vpop.f32.mrf.mxu0
  %v1221 = vadd.f32 %v157, %v1220
  %v1222 = vpop.f32.mrf.mxu0
  %v1223 = vadd.f32 %v157, %v1222
  %1224 = vmatmul.bf16.gmra.mxu0 %v245
  %v1225 = vpop.f32.mrf.mxu0
  %v1226 = vadd.f32 %v157, %v1225
  %v1227 = vpop.f32.mrf.mxu0
  %v1228 = vadd.f32 %v157, %v1227
  %1229 = vmatmul.bf16.gmra.mxu0 %v248
  %v1230 = vpop.f32.mrf.mxu0
  %v1231 = vadd.f32 %v157, %v1230
  %v1232 = vpop.f32.mrf.mxu0
  %v1233 = vadd.f32 %v157, %v1232
  %1234 = vmatmul.bf16.gmra.mxu0 %v251
  %v1235 = vpop.f32.mrf.mxu0
  %v1236 = vadd.f32 %v157, %v1235
  %v1237 = vpop.f32.mrf.mxu0
  %v1238 = vadd.f32 %v157, %v1237
  %1239 = vmatmul.bf16.gmra.mxu0 %v254
  %v1240 = vpop.f32.mrf.mxu0
  %v1241 = vadd.f32 %v157, %v1240
  %v1242 = vpop.f32.mrf.mxu0
  %v1243 = vadd.f32 %v157, %v1242
  %1244 = vmatmul.bf16.gmra.mxu0 %v257
  %v1245 = vpop.f32.mrf.mxu0
  %v1246 = vadd.f32 %v157, %v1245
  %v1247 = vpop.f32.mrf.mxu0
  %v1248 = vadd.f32 %v157, %v1247
  %1249 = vmatmul.bf16.gmra.mxu0 %v260
  %v1250 = vpop.f32.mrf.mxu0
  %v1251 = vadd.f32 %v157, %v1250
  %v1252 = vpop.f32.mrf.mxu0
  %v1253 = vadd.f32 %v157, %v1252
  %1254 = vmatmul.bf16.gmra.mxu0 %v263
  %v1255 = vpop.f32.mrf.mxu0
  %v1256 = vadd.f32 %v157, %v1255
  %v1257 = vpop.f32.mrf.mxu0
  %v1258 = vadd.f32 %v157, %v1257
  %1259 = vdwg.mxu0
  %1260 = vmatpush.bf16.msra.mxu0 %v641
  %1261 = vmatpush.bf16.msra.mxu0 %v637
  %1262 = vmatpush.bf16.msra.mxu0 %v633
  %1263 = vmatpush.bf16.msra.mxu0 %v629
  %1264 = vmatpush.bf16.msra.mxu0 %v625
  %1265 = vmatpush.bf16.msra.mxu0 %v621
  %1266 = vmatpush.bf16.msra.mxu0 %v617
  %1267 = vmatpush.bf16.msra.mxu0 %v613
  %1268 = vmatmul.bf16.gmra.mxu0 %v243
  %v1269 = vpop.f32.mrf.mxu0
  %v1270 = vadd.f32 %v1221, %v1269
  %v1271 = vpop.f32.mrf.mxu0
  %v1272 = vadd.f32 %v1223, %v1271
  %1273 = vmatmul.bf16.gmra.mxu0 %v246
  %v1274 = vpop.f32.mrf.mxu0
  %v1275 = vadd.f32 %v1226, %v1274
  %v1276 = vpop.f32.mrf.mxu0
  %v1277 = vadd.f32 %v1228, %v1276
  %1278 = vmatmul.bf16.gmra.mxu0 %v249
  %v1279 = vpop.f32.mrf.mxu0
  %v1280 = vadd.f32 %v1231, %v1279
  %v1281 = vpop.f32.mrf.mxu0
  %v1282 = vadd.f32 %v1233, %v1281
  %1283 = vmatmul.bf16.gmra.mxu0 %v252
  %v1284 = vpop.f32.mrf.mxu0
  %v1285 = vadd.f32 %v1236, %v1284
  %v1286 = vpop.f32.mrf.mxu0
  %v1287 = vadd.f32 %v1238, %v1286
  %1288 = vmatmul.bf16.gmra.mxu0 %v255
  %v1289 = vpop.f32.mrf.mxu0
  %v1290 = vadd.f32 %v1241, %v1289
  %v1291 = vpop.f32.mrf.mxu0
  %v1292 = vadd.f32 %v1243, %v1291
  %1293 = vmatmul.bf16.gmra.mxu0 %v258
  %v1294 = vpop.f32.mrf.mxu0
  %v1295 = vadd.f32 %v1246, %v1294
  %v1296 = vpop.f32.mrf.mxu0
  %v1297 = vadd.f32 %v1248, %v1296
  %1298 = vmatmul.bf16.gmra.mxu0 %v261
  %v1299 = vpop.f32.mrf.mxu0
  %v1300 = vadd.f32 %v1251, %v1299
  %v1301 = vpop.f32.mrf.mxu0
  %v1302 = vadd.f32 %v1253, %v1301
  %1303 = vmatmul.bf16.gmra.mxu0 %v264
  %v1304 = vpop.f32.mrf.mxu0
  %v1305 = vadd.f32 %v1256, %v1304
  %v1306 = vpop.f32.mrf.mxu0
  %v1307 = vadd.f32 %v1258, %v1306
  %1308 = vdwg.mxu0
  %1309 = vmatpush.bf16.msra.mxu0 %v673
  %1310 = vmatpush.bf16.msra.mxu0 %v669
  %1311 = vmatpush.bf16.msra.mxu0 %v665
  %1312 = vmatpush.bf16.msra.mxu0 %v661
  %1313 = vmatpush.bf16.msra.mxu0 %v657
  %1314 = vmatpush.bf16.msra.mxu0 %v653
  %1315 = vmatpush.bf16.msra.mxu0 %v649
  %1316 = vmatpush.bf16.msra.mxu0 %v645
  %1317 = vmatmul.bf16.gmra.mxu0 %v244
  %v1318 = vpop.f32.mrf.mxu0
  %v1319 = vadd.f32 %v1270, %v1318
  %v1320 = vpop.f32.mrf.mxu0
  %v1321 = vadd.f32 %v1272, %v1320
  %1322 = vmatmul.bf16.gmra.mxu0 %v247
  %v1323 = vpop.f32.mrf.mxu0
  %v1324 = vadd.f32 %v1275, %v1323
  %v1325 = vpop.f32.mrf.mxu0
  %v1326 = vadd.f32 %v1277, %v1325
  %1327 = vmatmul.bf16.gmra.mxu0 %v250
  %v1328 = vpop.f32.mrf.mxu0
  %v1329 = vadd.f32 %v1280, %v1328
  %v1330 = vpop.f32.mrf.mxu0
  %v1331 = vadd.f32 %v1282, %v1330
  %1332 = vmatmul.bf16.gmra.mxu0 %v253
  %v1333 = vpop.f32.mrf.mxu0
  %v1334 = vadd.f32 %v1285, %v1333
  %v1335 = vpop.f32.mrf.mxu0
  %v1336 = vadd.f32 %v1287, %v1335
  %1337 = vmatmul.bf16.gmra.mxu0 %v256
  %v1338 = vpop.f32.mrf.mxu0
  %v1339 = vadd.f32 %v1290, %v1338
  %v1340 = vpop.f32.mrf.mxu0
  %v1341 = vadd.f32 %v1292, %v1340
  %1342 = vmatmul.bf16.gmra.mxu0 %v259
  %v1343 = vpop.f32.mrf.mxu0
  %v1344 = vadd.f32 %v1295, %v1343
  %v1345 = vpop.f32.mrf.mxu0
  %v1346 = vadd.f32 %v1297, %v1345
  %1347 = vmatmul.bf16.gmra.mxu0 %v262
  %v1348 = vpop.f32.mrf.mxu0
  %v1349 = vadd.f32 %v1300, %v1348
  %v1350 = vpop.f32.mrf.mxu0
  %v1351 = vadd.f32 %v1302, %v1350
  %1352 = vmatmul.bf16.gmra.mxu0 %v265
  %v1353 = vpop.f32.mrf.mxu0
  %v1354 = vadd.f32 %v1305, %v1353
  %v1355 = vpop.f32.mrf.mxu0
  %v1356 = vadd.f32 %v1307, %v1355
  %1357 = vdwg.mxu0
  %1358 = vst [vmem:[#allocation2] sm:$0xff] %v878
  %1359 = vst [vmem:[#allocation2 + $0x8] sm:$0xff] %v1025
  %1360 = vst [vmem:[#allocation2 + $0x10] sm:$0xff] %v1172
  %1361 = vst [vmem:[#allocation2 + $0x18] sm:$0xff] %v1319
  %1362 = vst [vmem:[#allocation2 + $0x20] sm:$0xff] %v880
  %1363 = vst [vmem:[#allocation2 + $0x28] sm:$0xff] %v1027
  %1364 = vst [vmem:[#allocation2 + $0x30] sm:$0xff] %v1174
  %1365 = vst [vmem:[#allocation2 + $0x38] sm:$0xff] %v1321
  %1366 = vst [vmem:[#allocation2 + $0x40] sm:$0xff] %v883
  %1367 = vst [vmem:[#allocation2 + $0x48] sm:$0xff] %v1030
  %1368 = vst [vmem:[#allocation2 + $0x50] sm:$0xff] %v1177
  %1369 = vst [vmem:[#allocation2 + $0x58] sm:$0xff] %v1324
  %1370 = vst [vmem:[#allocation2 + $0x60] sm:$0xff] %v885
  %1371 = vst [vmem:[#allocation2 + $0x68] sm:$0xff] %v1032
  %1372 = vst [vmem:[#allocation2 + $0x70] sm:$0xff] %v1179
  %1373 = vst [vmem:[#allocation2 + $0x78] sm:$0xff] %v1326
  %1374 = vst [vmem:[#allocation2 + $0x80] sm:$0xff] %v888
  %1375 = vst [vmem:[#allocation2 + $0x88] sm:$0xff] %v1035
  %1376 = vst [vmem:[#allocation2 + $0x90] sm:$0xff] %v1182
  %1377 = vst [vmem:[#allocation2 + $0x98] sm:$0xff] %v1329
  %1378 = vst [vmem:[#allocation2 + $0xa0] sm:$0xff] %v890
  %1379 = vst [vmem:[#allocation2 + $0xa8] sm:$0xff] %v1037
  %1380 = vst [vmem:[#allocation2 + $0xb0] sm:$0xff] %v1184
  %1381 = vst [vmem:[#allocation2 + $0xb8] sm:$0xff] %v1331
  %1382 = vst [vmem:[#allocation2 + $0xc0] sm:$0xff] %v893
  %1383 = vst [vmem:[#allocation2 + $0xc8] sm:$0xff] %v1040
  %1384 = vst [vmem:[#allocation2 + $0xd0] sm:$0xff] %v1187
  %1385 = vst [vmem:[#allocation2 + $0xd8] sm:$0xff] %v1334
  %1386 = vst [vmem:[#allocation2 + $0xe0] sm:$0xff] %v895
  %1387 = vst [vmem:[#allocation2 + $0xe8] sm:$0xff] %v1042
  %1388 = vst [vmem:[#allocation2 + $0xf0] sm:$0xff] %v1189
  %1389 = vst [vmem:[#allocation2 + $0xf8] sm:$0xff] %v1336
  %1390 = vst [vmem:[#allocation2 + $0x100] sm:$0xff] %v898
  %1391 = vst [vmem:[#allocation2 + $0x108] sm:$0xff] %v1045
  %1392 = vst [vmem:[#allocation2 + $0x110] sm:$0xff] %v1192
  %1393 = vst [vmem:[#allocation2 + $0x118] sm:$0xff] %v1339
  %1394 = vst [vmem:[#allocation2 + $0x120] sm:$0xff] %v900
  %1395 = vst [vmem:[#allocation2 + $0x128] sm:$0xff] %v1047
  %1396 = vst [vmem:[#allocation2 + $0x130] sm:$0xff] %v1194
  %1397 = vst [vmem:[#allocation2 + $0x138] sm:$0xff] %v1341
  %1398 = vst [vmem:[#allocation2 + $0x140] sm:$0xff] %v903
  %1399 = vst [vmem:[#allocation2 + $0x148] sm:$0xff] %v1050
  %1400 = vst [vmem:[#allocation2 + $0x150] sm:$0xff] %v1197
  %1401 = vst [vmem:[#allocation2 + $0x158] sm:$0xff] %v1344
  %1402 = vst [vmem:[#allocation2 + $0x160] sm:$0xff] %v905
  %1403 = vst [vmem:[#allocation2 + $0x168] sm:$0xff] %v1052
  %1404 = vst [vmem:[#allocation2 + $0x170] sm:$0xff] %v1199
  %1405 = vst [vmem:[#allocation2 + $0x178] sm:$0xff] %v1346
  %1406 = vst [vmem:[#allocation2 + $0x180] sm:$0xff] %v908
  %1407 = vst [vmem:[#allocation2 + $0x188] sm:$0xff] %v1055
  %1408 = vst [vmem:[#allocation2 + $0x190] sm:$0xff] %v1202
  %1409 = vst [vmem:[#allocation2 + $0x198] sm:$0xff] %v1349
  %1410 = vst [vmem:[#allocation2 + $0x1a0] sm:$0xff] %v910
  %1411 = vst [vmem:[#allocation2 + $0x1a8] sm:$0xff] %v1057
  %1412 = vst [vmem:[#allocation2 + $0x1b0] sm:$0xff] %v1204
  %1413 = vst [vmem:[#allocation2 + $0x1b8] sm:$0xff] %v1351
  %1414 = vst [vmem:[#allocation2 + $0x1c0] sm:$0xff] %v913
  %1415 = vst [vmem:[#allocation2 + $0x1c8] sm:$0xff] %v1060
  %1416 = vst [vmem:[#allocation2 + $0x1d0] sm:$0xff] %v1207
  %1417 = vst [vmem:[#allocation2 + $0x1d8] sm:$0xff] %v1354
  %1418 = vst [vmem:[#allocation2 + $0x1e0] sm:$0xff] %v915
  %1419 = vst [vmem:[#allocation2 + $0x1e8] sm:$0xff] %v1062
  %1420 = vst [vmem:[#allocation2 + $0x1f0] sm:$0xff] %v1209
  %1421 = vst [vmem:[#allocation2 + $0x1f8] sm:$0xff] %v1356
  %v1422 = vld [vmem:[#allocation2] sm:$0xff]
  %v1423 = vld [vmem:[#allocation2 + $0x8] sm:$0xff]
  %v1424 = vld [vmem:[#allocation2 + $0x10] sm:$0xff]
  %v1425 = vld [vmem:[#allocation2 + $0x18] sm:$0xff]
  %v1426 = vld [vmem:[#allocation2 + $0x20] sm:$0xff]
  %v1427 = vld [vmem:[#allocation2 + $0x28] sm:$0xff]
  %v1428 = vld [vmem:[#allocation2 + $0x30] sm:$0xff]
  %v1429 = vld [vmem:[#allocation2 + $0x38] sm:$0xff]
  %v1430 = vld [vmem:[%s2] sm:$0xff]
  %v1431 = vld [vmem:[%s2 + $0x8] sm:$0xff]
  %v1432 = vld [vmem:[%s2 + $0x10] sm:$0xff]
  %v1433 = vld [vmem:[%s2 + $0x18] sm:$0xff]
  %v1434 = vld [vmem:[%s2 + $0x20] sm:$0xff]
  %v1435 = vld [vmem:[%s2 + $0x28] sm:$0xff]
  %v1436 = vld [vmem:[%s2 + $0x30] sm:$0xff]
  %v1437 = vld [vmem:[%s2 + $0x38] sm:$0xff]
  %v1438 = vld [vmem:[%s2 + $0x40] sm:$0xff]
  %v1439 = vld [vmem:[%s2 + $0x48] sm:$0xff]
  %v1440 = vld [vmem:[%s2 + $0x50] sm:$0xff]
  %v1441 = vld [vmem:[%s2 + $0x58] sm:$0xff]
  %v1442 = vld [vmem:[%s2 + $0x60] sm:$0xff]
  %v1443 = vld [vmem:[%s2 + $0x68] sm:$0xff]
  %v1444 = vld [vmem:[%s2 + $0x70] sm:$0xff]
  %v1445 = vld [vmem:[%s2 + $0x78] sm:$0xff]
  %v1446 = vld [vmem:[%s2 + $0x80] sm:$0xff]
  %v1447 = vld [vmem:[%s2 + $0x88] sm:$0xff]
  %v1448 = vld [vmem:[%s2 + $0x90] sm:$0xff]
  %v1449 = vld [vmem:[%s2 + $0x98] sm:$0xff]
  %v1450 = vld [vmem:[%s2 + $0xa0] sm:$0xff]
  %v1451 = vld [vmem:[%s2 + $0xa8] sm:$0xff]
  %v1452 = vld [vmem:[%s2 + $0xb0] sm:$0xff]
  %v1453 = vld [vmem:[%s2 + $0xb8] sm:$0xff]
  %v1454 = vld [vmem:[%s2 + $0xc0] sm:$0xff]
  %v1455 = vld [vmem:[%s2 + $0xc8] sm:$0xff]
  %v1456 = vld [vmem:[%s2 + $0xd0] sm:$0xff]
  %v1457 = vld [vmem:[%s2 + $0xd8] sm:$0xff]
  %v1458 = vld [vmem:[%s2 + $0xe0] sm:$0xff]
  %v1459 = vld [vmem:[%s2 + $0xe8] sm:$0xff]
  %v1460 = vld [vmem:[%s2 + $0xf0] sm:$0xff]
  %v1461 = vld [vmem:[%s2 + $0xf8] sm:$0xff]
  %v1494 = vunpack.c.l.b16 %v1430
  %v1495 = vunpack.c.h.b16 %v1430
  %v1496 = vunpack.c.l.b16 %v1431
  %v1497 = vunpack.c.h.b16 %v1431
  %v1498 = vunpack.c.l.b16 %v1432
  %v1499 = vunpack.c.h.b16 %v1432
  %v1500 = vunpack.c.l.b16 %v1433
  %v1501 = vunpack.c.h.b16 %v1433
  %v1502 = vunpack.c.l.b16 %v1434
  %v1503 = vunpack.c.h.b16 %v1434
  %v1504 = vunpack.c.l.b16 %v1435
  %v1505 = vunpack.c.h.b16 %v1435
  %v1506 = vunpack.c.l.b16 %v1436
  %v1507 = vunpack.c.h.b16 %v1436
  %v1508 = vunpack.c.l.b16 %v1437
  %v1509 = vunpack.c.h.b16 %v1437
  %v1510 = vunpack.c.l.b16 %v1438
  %v1511 = vunpack.c.h.b16 %v1438
  %v1512 = vunpack.c.l.b16 %v1439
  %v1513 = vunpack.c.h.b16 %v1439
  %v1514 = vunpack.c.l.b16 %v1440
  %v1515 = vunpack.c.h.b16 %v1440
  %v1516 = vunpack.c.l.b16 %v1441
  %v1517 = vunpack.c.h.b16 %v1441
  %v1518 = vunpack.c.l.b16 %v1442
  %v1519 = vunpack.c.h.b16 %v1442
  %v1520 = vunpack.c.l.b16 %v1443
  %v1521 = vunpack.c.h.b16 %v1443
  %v1522 = vunpack.c.l.b16 %v1444
  %v1523 = vunpack.c.h.b16 %v1444
  %v1524 = vunpack.c.l.b16 %v1445
  %v1525 = vunpack.c.h.b16 %v1445
  %v1526 = vunpack.c.l.b16 %v1446
  %v1527 = vunpack.c.h.b16 %v1446
  %v1528 = vunpack.c.l.b16 %v1447
  %v1529 = vunpack.c.h.b16 %v1447
  %v1530 = vunpack.c.l.b16 %v1448
  %v1531 = vunpack.c.h.b16 %v1448
  %v1532 = vunpack.c.l.b16 %v1449
  %v1533 = vunpack.c.h.b16 %v1449
  %v1534 = vunpack.c.l.b16 %v1450
  %v1535 = vunpack.c.h.b16 %v1450
  %v1536 = vunpack.c.l.b16 %v1451
  %v1537 = vunpack.c.h.b16 %v1451
  %v1538 = vunpack.c.l.b16 %v1452
  %v1539 = vunpack.c.h.b16 %v1452
  %v1540 = vunpack.c.l.b16 %v1453
  %v1541 = vunpack.c.h.b16 %v1453
  %v1542 = vunpack.c.l.b16 %v1454
  %v1543 = vunpack.c.h.b16 %v1454
  %v1544 = vunpack.c.l.b16 %v1455
  %v1545 = vunpack.c.h.b16 %v1455
  %v1546 = vunpack.c.l.b16 %v1456
  %v1547 = vunpack.c.h.b16 %v1456
  %v1548 = vunpack.c.l.b16 %v1457
  %v1549 = vunpack.c.h.b16 %v1457
  %v1550 = vunpack.c.l.b16 %v1458
  %v1551 = vunpack.c.h.b16 %v1458
  %v1552 = vunpack.c.l.b16 %v1459
  %v1553 = vunpack.c.h.b16 %v1459
  %v1554 = vunpack.c.l.b16 %v1460
  %v1555 = vunpack.c.h.b16 %v1460
  %v1556 = vunpack.c.l.b16 %v1461
  %v1557 = vunpack.c.h.b16 %v1461
  %v1558 = vpack.c.b16 %v1498, %v1494
  %v1559 = vpack.c.b16 %v1499, %v1495
  %v1560 = vpack.c.b16 %v1500, %v1496
  %v1561 = vpack.c.b16 %v1501, %v1497
  %v1562 = vpack.c.b16 %v1506, %v1502
  %v1563 = vpack.c.b16 %v1507, %v1503
  %v1564 = vpack.c.b16 %v1508, %v1504
  %v1565 = vpack.c.b16 %v1509, %v1505
  %v1566 = vpack.c.b16 %v1514, %v1510
  %v1567 = vpack.c.b16 %v1515, %v1511
  %v1568 = vpack.c.b16 %v1516, %v1512
  %v1569 = vpack.c.b16 %v1517, %v1513
  %v1570 = vpack.c.b16 %v1522, %v1518
  %v1571 = vpack.c.b16 %v1523, %v1519
  %v1572 = vpack.c.b16 %v1524, %v1520
  %v1573 = vpack.c.b16 %v1525, %v1521
  %v1574 = vpack.c.b16 %v1530, %v1526
  %v1575 = vpack.c.b16 %v1531, %v1527
  %v1576 = vpack.c.b16 %v1532, %v1528
  %v1577 = vpack.c.b16 %v1533, %v1529
  %v1578 = vpack.c.b16 %v1538, %v1534
  %v1579 = vpack.c.b16 %v1539, %v1535
  %v1580 = vpack.c.b16 %v1540, %v1536
  %v1581 = vpack.c.b16 %v1541, %v1537
  %v1582 = vpack.c.b16 %v1546, %v1542
  %v1583 = vpack.c.b16 %v1547, %v1543
  %v1584 = vpack.c.b16 %v1548, %v1544
  %v1585 = vpack.c.b16 %v1549, %v1545
  %v1586 = vpack.c.b16 %v1554, %v1550
  %v1587 = vpack.c.b16 %v1555, %v1551
  %v1588 = vpack.c.b16 %v1556, %v1552
  %v1589 = vpack.c.b16 %v1557, %v1553
  %1622 = vmatpush.bf16.msra.mxu0 %v1586
  %1623 = vmatpush.bf16.msra.mxu0 %v1582
  %1624 = vmatpush.bf16.msra.mxu0 %v1578
  %1625 = vmatpush.bf16.msra.mxu0 %v1574
  %1626 = vmatpush.bf16.msra.mxu0 %v1570
  %1627 = vmatpush.bf16.msra.mxu0 %v1566
  %1628 = vmatpush.bf16.msra.mxu0 %v1562
  %1629 = vmatpush.bf16.msra.mxu0 %v1558
  %1630 = vmatmul.bf16.gmra.mxu0 0
  %v1631 = vpop.f32.mrf.mxu0
  %v1632 = vadd.f32 0.0, %v1631
  %v1633 = vpop.f32.mrf.mxu0
  %v1634 = vadd.f32 0.0, %v1633
  %1635 = vdwg.mxu0
  %1636 = vmatpush.bf16.msra.mxu0 %v1587
  %1637 = vmatpush.bf16.msra.mxu0 %v1583
  %1638 = vmatpush.bf16.msra.mxu0 %v1579
  %1639 = vmatpush.bf16.msra.mxu0 %v1575
  %1640 = vmatpush.bf16.msra.mxu0 %v1571
  %1641 = vmatpush.bf16.msra.mxu0 %v1567
  %1642 = vmatpush.bf16.msra.mxu0 %v1563
  %1643 = vmatpush.bf16.msra.mxu0 %v1559
  %1644 = vmatmul.bf16.gmra.mxu0 0
  %v1645 = vpop.f32.mrf.mxu0
  %v1646 = vadd.f32 0.0, %v1645
  %v1647 = vpop.f32.mrf.mxu0
  %v1648 = vadd.f32 0.0, %v1647
  %1649 = vdwg.mxu0
  %1650 = vmatpush.bf16.msra.mxu0 %v1588
  %1651 = vmatpush.bf16.msra.mxu0 %v1584
  %1652 = vmatpush.bf16.msra.mxu0 %v1580
  %1653 = vmatpush.bf16.msra.mxu0 %v1576
  %1654 = vmatpush.bf16.msra.mxu0 %v1572
  %1655 = vmatpush.bf16.msra.mxu0 %v1568
  %1656 = vmatpush.bf16.msra.mxu0 %v1564
  %1657 = vmatpush.bf16.msra.mxu0 %v1560
  %1658 = vmatmul.bf16.gmra.mxu0 0
  %v1659 = vpop.f32.mrf.mxu0
  %v1660 = vadd.f32 0.0, %v1659
  %v1661 = vpop.f32.mrf.mxu0
  %v1662 = vadd.f32 0.0, %v1661
  %1663 = vdwg.mxu0
  %1664 = vmatpush.bf16.msra.mxu0 %v1589
  %1665 = vmatpush.bf16.msra.mxu0 %v1585
  %1666 = vmatpush.bf16.msra.mxu0 %v1581
  %1667 = vmatpush.bf16.msra.mxu0 %v1577
  %1668 = vmatpush.bf16.msra.mxu0 %v1573
  %1669 = vmatpush.bf16.msra.mxu0 %v1569
  %1670 = vmatpush.bf16.msra.mxu0 %v1565
  %1671 = vmatpush.bf16.msra.mxu0 %v1561
  %1672 = vmatmul.bf16.gmra.mxu0 0
  %v1673 = vpop.f32.mrf.mxu0
  %v1674 = vadd.f32 0.0, %v1673
  %v1675 = vpop.f32.mrf.mxu0
  %v1676 = vadd.f32 0.0, %v1675
  %1677 = vdwg.mxu0
  %v1678 = vadd.f32 %v1422, %v1632
  %v1679 = vadd.f32 %v1423, %v1646
  %v1680 = vadd.f32 %v1424, %v1660
  %v1681 = vadd.f32 %v1425, %v1674
  %v1682 = vadd.f32 %v1426, %v1634
  %v1683 = vadd.f32 %v1427, %v1648
  %v1684 = vadd.f32 %v1428, %v1662
  %v1685 = vadd.f32 %v1429, %v1676
  %v1686 = vxor.u32 %v1678, 2147483648
  %v1687 = vxor.u32 %v1679, 2147483648
  %v1688 = vxor.u32 %v1680, 2147483648
  %v1689 = vxor.u32 %v1682, 2147483648
  %v1690 = vxor.u32 %v1683, 2147483648
  %v1691 = vxor.u32 %v1684, 2147483648
  %v1692 = vmul.f32 %v1686, 1.442695
  %v1693 = vpow.pop %v1692
  %v1694 = vmul.f32 %v1687, 1.442695
  %v1695 = vpow.pop %v1694
  %v1696 = vmul.f32 %v1688, 1.442695
  %v1697 = vpow.pop %v1696
  %v1698 = vmul.f32 %v1689, 1.442695
  %v1699 = vpow.pop %v1698
  %v1700 = vmul.f32 %v1690, 1.442695
  %v1701 = vpow.pop %v1700
  %v1702 = vmul.f32 %v1691, 1.442695
  %v1703 = vpow.pop %v1702
  %v1704 = vadd.f32 %v1693, 1.0
  %v1705 = vadd.f32 %v1695, 1.0
  %v1706 = vadd.f32 %v1697, 1.0
  %v1707 = vadd.f32 %v1699, 1.0
  %v1708 = vadd.f32 %v1701, 1.0
  %v1709 = vadd.f32 %v1703, 1.0
  %v1710 = vrcp.pop %v1704
  %v1711 = vmul.f32 %v1704, %v1710
  %v1712 = vsub.f32 1.0, %v1711
  %v1713 = vmul.f32 %v1710, %v1712
  %v1714 = vadd.f32 %v1710, %v1713
  %vm1715 = vweird.f32 %v1704
  %vm1716 = vweird.f32 %v1710
  %vm1717 = vmor %vm1715, %vm1716
  %v1718 = vsel %vm1717, %v1710, %v1714
  %v1719 = vand.u32 2147483647, %v1704
  %vm1720 = vcmp.eq.f32.partialorder %v1719, 8.507059e+37
  %v1721 = vand.u32 %v1704, 2147483648
  %v1722 = vor.u32 1.1754944e-38, %v1721
  %v1723 = vsel %vm1720, %v1722, %v1718
  %v1724 = vmul.f32 1.0, %v1723
  %v1725 = vrcp.pop %v1705
  %v1726 = vmul.f32 %v1705, %v1725
  %v1727 = vsub.f32 1.0, %v1726
  %v1728 = vmul.f32 %v1725, %v1727
  %v1729 = vadd.f32 %v1725, %v1728
  %vm1730 = vweird.f32 %v1705
  %vm1731 = vweird.f32 %v1725
  %vm1732 = vmor %vm1730, %vm1731
  %v1733 = vsel %vm1732, %v1725, %v1729
  %v1734 = vand.u32 2147483647, %v1705
  %vm1735 = vcmp.eq.f32.partialorder %v1734, 8.507059e+37
  %v1736 = vand.u32 %v1705, 2147483648
  %v1737 = vor.u32 1.1754944e-38, %v1736
  %v1738 = vsel %vm1735, %v1737, %v1733
  %v1739 = vmul.f32 1.0, %v1738
  %v1740 = vrcp.pop %v1706
  %v1741 = vmul.f32 %v1706, %v1740
  %v1742 = vsub.f32 1.0, %v1741
  %v1743 = vmul.f32 %v1740, %v1742
  %v1744 = vadd.f32 %v1740, %v1743
  %vm1745 = vweird.f32 %v1706
  %vm1746 = vweird.f32 %v1740
  %vm1747 = vmor %vm1745, %vm1746
  %v1748 = vsel %vm1747, %v1740, %v1744
  %v1749 = vand.u32 2147483647, %v1706
  %vm1750 = vcmp.eq.f32.partialorder %v1749, 8.507059e+37
  %v1751 = vand.u32 %v1706, 2147483648
  %v1752 = vor.u32 1.1754944e-38, %v1751
  %v1753 = vsel %vm1750, %v1752, %v1748
  %v1754 = vmul.f32 1.0, %v1753
  %v1755 = vrcp.pop %v1707
  %v1756 = vmul.f32 %v1707, %v1755
  %v1757 = vsub.f32 1.0, %v1756
  %v1758 = vmul.f32 %v1755, %v1757
  %v1759 = vadd.f32 %v1755, %v1758
  %vm1760 = vweird.f32 %v1707
  %vm1761 = vweird.f32 %v1755
  %vm1762 = vmor %vm1760, %vm1761
  %v1763 = vsel %vm1762, %v1755, %v1759
  %v1764 = vand.u32 2147483647, %v1707
  %vm1765 = vcmp.eq.f32.partialorder %v1764, 8.507059e+37
  %v1766 = vand.u32 %v1707, 2147483648
  %v1767 = vor.u32 1.1754944e-38, %v1766
  %v1768 = vsel %vm1765, %v1767, %v1763
  %v1769 = vmul.f32 1.0, %v1768
  %v1770 = vrcp.pop %v1708
  %v1771 = vmul.f32 %v1708, %v1770
  %v1772 = vsub.f32 1.0, %v1771
  %v1773 = vmul.f32 %v1770, %v1772
  %v1774 = vadd.f32 %v1770, %v1773
  %vm1775 = vweird.f32 %v1708
  %vm1776 = vweird.f32 %v1770
  %vm1777 = vmor %vm1775, %vm1776
  %v1778 = vsel %vm1777, %v1770, %v1774
  %v1779 = vand.u32 2147483647, %v1708
  %vm1780 = vcmp.eq.f32.partialorder %v1779, 8.507059e+37
  %v1781 = vand.u32 %v1708, 2147483648
  %v1782 = vor.u32 1.1754944e-38, %v1781
  %v1783 = vsel %vm1780, %v1782, %v1778
  %v1784 = vmul.f32 1.0, %v1783
  %v1785 = vrcp.pop %v1709
  %v1786 = vmul.f32 %v1709, %v1785
  %v1787 = vsub.f32 1.0, %v1786
  %v1788 = vmul.f32 %v1785, %v1787
  %v1789 = vadd.f32 %v1785, %v1788
  %vm1790 = vweird.f32 %v1709
  %vm1791 = vweird.f32 %v1785
  %vm1792 = vmor %vm1790, %vm1791
  %v1793 = vsel %vm1792, %v1785, %v1789
  %v1794 = vand.u32 2147483647, %v1709
  %vm1795 = vcmp.eq.f32.partialorder %v1794, 8.507059e+37
  %v1796 = vand.u32 %v1709, 2147483648
  %v1797 = vor.u32 1.1754944e-38, %v1796
  %v1798 = vsel %vm1795, %v1797, %v1793
  %v1799 = vmul.f32 1.0, %v1798
  %v1800 = vtanh.pop %v1681
  %v1801 = vtanh.pop %v1685
  %v1802 = vmul.f32 %v1739, 0.0
  %v1803 = vmul.f32 %v1784, 0.0
  %v1804 = vmul.f32 %v1724, %v1800
  %v1805 = vmul.f32 %v1769, %v1801
  %v1806 = vadd.f32 %v1802, %v1804
  %v1807 = vadd.f32 %v1803, %v1805
  %v1808 = vtanh.pop %v1806
  %v1809 = vtanh.pop %v1807
  %v1810 = vmul.f32 %v1754, %v1808
  %v1811 = vmul.f32 %v1799, %v1809
  %1812 = vst [vmem:[#allocation3] sm:$0xff] %v1810
  %1813 = vst [vmem:[#allocation3 + $0x8] sm:$0xff] %v1811
  %v1814 = vpack.c.bf16 %v1811, %v1810
  %s1815 = scalar_lea.vmem [#allocation2], 64
  %v1816 = vld [vmem:[%s1815] sm:$0xff]
  %v1817 = vld [vmem:[%s1815 + $0x8] sm:$0xff]
  %v1818 = vld [vmem:[%s1815 + $0x10] sm:$0xff]
  %v1819 = vld [vmem:[%s1815 + $0x18] sm:$0xff]
  %v1820 = vld [vmem:[%s1815 + $0x20] sm:$0xff]
  %v1821 = vld [vmem:[%s1815 + $0x28] sm:$0xff]
  %v1822 = vld [vmem:[%s1815 + $0x30] sm:$0xff]
  %v1823 = vld [vmem:[%s1815 + $0x38] sm:$0xff]
  %v1824 = vld [vmem:[%s2] sm:$0xff]
  %v1825 = vld [vmem:[%s2 + $0x8] sm:$0xff]
  %v1826 = vld [vmem:[%s2 + $0x10] sm:$0xff]
  %v1827 = vld [vmem:[%s2 + $0x18] sm:$0xff]
  %v1828 = vld [vmem:[%s2 + $0x20] sm:$0xff]
  %v1829 = vld [vmem:[%s2 + $0x28] sm:$0xff]
  %v1830 = vld [vmem:[%s2 + $0x30] sm:$0xff]
  %v1831 = vld [vmem:[%s2 + $0x38] sm:$0xff]
  %v1832 = vld [vmem:[%s2 + $0x40] sm:$0xff]
  %v1833 = vld [vmem:[%s2 + $0x48] sm:$0xff]
  %v1834 = vld [vmem:[%s2 + $0x50] sm:$0xff]
  %v1835 = vld [vmem:[%s2 + $0x58] sm:$0xff]
  %v1836 = vld [vmem:[%s2 + $0x60] sm:$0xff]
  %v1837 = vld [vmem:[%s2 + $0x68] sm:$0xff]
  %v1838 = vld [vmem:[%s2 + $0x70] sm:$0xff]
  %v1839 = vld [vmem:[%s2 + $0x78] sm:$0xff]
  %v1840 = vld [vmem:[%s2 + $0x80] sm:$0xff]
  %v1841 = vld [vmem:[%s2 + $0x88] sm:$0xff]
  %v1842 = vld [vmem:[%s2 + $0x90] sm:$0xff]
  %v1843 = vld [vmem:[%s2 + $0x98] sm:$0xff]
  %v1844 = vld [vmem:[%s2 + $0xa0] sm:$0xff]
  %v1845 = vld [vmem:[%s2 + $0xa8] sm:$0xff]
  %v1846 = vld [vmem:[%s2 + $0xb0] sm:$0xff]
  %v1847 = vld [vmem:[%s2 + $0xb8] sm:$0xff]
  %v1848 = vld [vmem:[%s2 + $0xc0] sm:$0xff]
  %v1849 = vld [vmem:[%s2 + $0xc8] sm:$0xff]
  %v1850 = vld [vmem:[%s2 + $0xd0] sm:$0xff]
  %v1851 = vld [vmem:[%s2 + $0xd8] sm:$0xff]
  %v1852 = vld [vmem:[%s2 + $0xe0] sm:$0xff]
  %v1853 = vld [vmem:[%s2 + $0xe8] sm:$0xff]
  %v1854 = vld [vmem:[%s2 + $0xf0] sm:$0xff]
  %v1855 = vld [vmem:[%s2 + $0xf8] sm:$0xff]
  %v1888 = vunpack.c.l.b16 %v1824
  %v1889 = vunpack.c.h.b16 %v1824
  %v1890 = vunpack.c.l.b16 %v1825
  %v1891 = vunpack.c.h.b16 %v1825
  %v1892 = vunpack.c.l.b16 %v1826
  %v1893 = vunpack.c.h.b16 %v1826
  %v1894 = vunpack.c.l.b16 %v1827
  %v1895 = vunpack.c.h.b16 %v1827
  %v1896 = vunpack.c.l.b16 %v1828
  %v1897 = vunpack.c.h.b16 %v1828
  %v1898 = vunpack.c.l.b16 %v1829
  %v1899 = vunpack.c.h.b16 %v1829
  %v1900 = vunpack.c.l.b16 %v1830
  %v1901 = vunpack.c.h.b16 %v1830
  %v1902 = vunpack.c.l.b16 %v1831
  %v1903 = vunpack.c.h.b16 %v1831
  %v1904 = vunpack.c.l.b16 %v1832
  %v1905 = vunpack.c.h.b16 %v1832
  %v1906 = vunpack.c.l.b16 %v1833
  %v1907 = vunpack.c.h.b16 %v1833
  %v1908 = vunpack.c.l.b16 %v1834
  %v1909 = vunpack.c.h.b16 %v1834
  %v1910 = vunpack.c.l.b16 %v1835
  %v1911 = vunpack.c.h.b16 %v1835
  %v1912 = vunpack.c.l.b16 %v1836
  %v1913 = vunpack.c.h.b16 %v1836
  %v1914 = vunpack.c.l.b16 %v1837
  %v1915 = vunpack.c.h.b16 %v1837
  %v1916 = vunpack.c.l.b16 %v1838
  %v1917 = vunpack.c.h.b16 %v1838
  %v1918 = vunpack.c.l.b16 %v1839
  %v1919 = vunpack.c.h.b16 %v1839
  %v1920 = vunpack.c.l.b16 %v1840
  %v1921 = vunpack.c.h.b16 %v1840
  %v1922 = vunpack.c.l.b16 %v1841
  %v1923 = vunpack.c.h.b16 %v1841
  %v1924 = vunpack.c.l.b16 %v1842
  %v1925 = vunpack.c.h.b16 %v1842
  %v1926 = vunpack.c.l.b16 %v1843
  %v1927 = vunpack.c.h.b16 %v1843
  %v1928 = vunpack.c.l.b16 %v1844
  %v1929 = vunpack.c.h.b16 %v1844
  %v1930 = vunpack.c.l.b16 %v1845
  %v1931 = vunpack.c.h.b16 %v1845
  %v1932 = vunpack.c.l.b16 %v1846
  %v1933 = vunpack.c.h.b16 %v1846
  %v1934 = vunpack.c.l.b16 %v1847
  %v1935 = vunpack.c.h.b16 %v1847
  %v1936 = vunpack.c.l.b16 %v1848
  %v1937 = vunpack.c.h.b16 %v1848
  %v1938 = vunpack.c.l.b16 %v1849
  %v1939 = vunpack.c.h.b16 %v1849
  %v1940 = vunpack.c.l.b16 %v1850
  %v1941 = vunpack.c.h.b16 %v1850
  %v1942 = vunpack.c.l.b16 %v1851
  %v1943 = vunpack.c.h.b16 %v1851
  %v1944 = vunpack.c.l.b16 %v1852
  %v1945 = vunpack.c.h.b16 %v1852
  %v1946 = vunpack.c.l.b16 %v1853
  %v1947 = vunpack.c.h.b16 %v1853
  %v1948 = vunpack.c.l.b16 %v1854
  %v1949 = vunpack.c.h.b16 %v1854
  %v1950 = vunpack.c.l.b16 %v1855
  %v1951 = vunpack.c.h.b16 %v1855
  %v1952 = vpack.c.b16 %v1892, %v1888
  %v1953 = vpack.c.b16 %v1893, %v1889
  %v1954 = vpack.c.b16 %v1894, %v1890
  %v1955 = vpack.c.b16 %v1895, %v1891
  %v1956 = vpack.c.b16 %v1900, %v1896
  %v1957 = vpack.c.b16 %v1901, %v1897
  %v1958 = vpack.c.b16 %v1902, %v1898
  %v1959 = vpack.c.b16 %v1903, %v1899
  %v1960 = vpack.c.b16 %v1908, %v1904
  %v1961 = vpack.c.b16 %v1909, %v1905
  %v1962 = vpack.c.b16 %v1910, %v1906
  %v1963 = vpack.c.b16 %v1911, %v1907
  %v1964 = vpack.c.b16 %v1916, %v1912
  %v1965 = vpack.c.b16 %v1917, %v1913
  %v1966 = vpack.c.b16 %v1918, %v1914
  %v1967 = vpack.c.b16 %v1919, %v1915
  %v1968 = vpack.c.b16 %v1924, %v1920
  %v1969 = vpack.c.b16 %v1925, %v1921
  %v1970 = vpack.c.b16 %v1926, %v1922
  %v1971 = vpack.c.b16 %v1927, %v1923
  %v1972 = vpack.c.b16 %v1932, %v1928
  %v1973 = vpack.c.b16 %v1933, %v1929
  %v1974 = vpack.c.b16 %v1934, %v1930
  %v1975 = vpack.c.b16 %v1935, %v1931
  %v1976 = vpack.c.b16 %v1940, %v1936
  %v1977 = vpack.c.b16 %v1941, %v1937
  %v1978 = vpack.c.b16 %v1942, %v1938
  %v1979 = vpack.c.b16 %v1943, %v1939
  %v1980 = vpack.c.b16 %v1948, %v1944
  %v1981 = vpack.c.b16 %v1949, %v1945
  %v1982 = vpack.c.b16 %v1950, %v1946
  %v1983 = vpack.c.b16 %v1951, %v1947
  %2016 = vmatpush.bf16.msra.mxu0 %v1980
  %2017 = vmatpush.bf16.msra.mxu0 %v1976
  %2018 = vmatpush.bf16.msra.mxu0 %v1972
  %2019 = vmatpush.bf16.msra.mxu0 %v1968
  %2020 = vmatpush.bf16.msra.mxu0 %v1964
  %2021 = vmatpush.bf16.msra.mxu0 %v1960
  %2022 = vmatpush.bf16.msra.mxu0 %v1956
  %2023 = vmatpush.bf16.msra.mxu0 %v1952
  %2024 = vmatmul.bf16.gmra.mxu0 %v1814
  %v2025 = vpop.f32.mrf.mxu0
  %v2026 = vadd.f32 0.0, %v2025
  %v2027 = vpop.f32.mrf.mxu0
  %v2028 = vadd.f32 0.0, %v2027
  %2029 = vdwg.mxu0
  %2030 = vmatpush.bf16.msra.mxu0 %v1981
  %2031 = vmatpush.bf16.msra.mxu0 %v1977
  %2032 = vmatpush.bf16.msra.mxu0 %v1973
  %2033 = vmatpush.bf16.msra.mxu0 %v1969
  %2034 = vmatpush.bf16.msra.mxu0 %v1965
  %2035 = vmatpush.bf16.msra.mxu0 %v1961
  %2036 = vmatpush.bf16.msra.mxu0 %v1957
  %2037 = vmatpush.bf16.msra.mxu0 %v1953
  %2038 = vmatmul.bf16.gmra.mxu0 %v1814
  %v2039 = vpop.f32.mrf.mxu0
  %v2040 = vadd.f32 0.0, %v2039
  %v2041 = vpop.f32.mrf.mxu0
  %v2042 = vadd.f32 0.0, %v2041
  %2043 = vdwg.mxu0
  %2044 = vmatpush.bf16.msra.mxu0 %v1982
  %2045 = vmatpush.bf16.msra.mxu0 %v1978
  %2046 = vmatpush.bf16.msra.mxu0 %v1974
  %2047 = vmatpush.bf16.msra.mxu0 %v1970
  %2048 = vmatpush.bf16.msra.mxu0 %v1966
  %2049 = vmatpush.bf16.msra.mxu0 %v1962
  %2050 = vmatpush.bf16.msra.mxu0 %v1958
  %2051 = vmatpush.bf16.msra.mxu0 %v1954
  %2052 = vmatmul.bf16.gmra.mxu0 %v1814
  %v2053 = vpop.f32.mrf.mxu0
  %v2054 = vadd.f32 0.0, %v2053
  %v2055 = vpop.f32.mrf.mxu0
  %v2056 = vadd.f32 0.0, %v2055
  %2057 = vdwg.mxu0
  %2058 = vmatpush.bf16.msra.mxu0 %v1983
  %2059 = vmatpush.bf16.msra.mxu0 %v1979
  %2060 = vmatpush.bf16.msra.mxu0 %v1975
  %2061 = vmatpush.bf16.msra.mxu0 %v1971
  %2062 = vmatpush.bf16.msra.mxu0 %v1967
  %2063 = vmatpush.bf16.msra.mxu0 %v1963
  %2064 = vmatpush.bf16.msra.mxu0 %v1959
  %2065 = vmatpush.bf16.msra.mxu0 %v1955
  %2066 = vmatmul.bf16.gmra.mxu0 %v1814
  %v2067 = vpop.f32.mrf.mxu0
  %v2068 = vadd.f32 0.0, %v2067
  %v2069 = vpop.f32.mrf.mxu0
  %v2070 = vadd.f32 0.0, %v2069
  %2071 = vdwg.mxu0
  %v2072 = vadd.f32 %v1816, %v2026
  %v2073 = vadd.f32 %v1817, %v2040
  %v2074 = vadd.f32 %v1818, %v2054
  %v2075 = vadd.f32 %v1819, %v2068
  %v2076 = vadd.f32 %v1820, %v2028
  %v2077 = vadd.f32 %v1821, %v2042
  %v2078 = vadd.f32 %v1822, %v2056
  %v2079 = vadd.f32 %v1823, %v2070
  %v2080 = vxor.u32 %v2072, 2147483648
  %v2081 = vxor.u32 %v2073, 2147483648
  %v2082 = vxor.u32 %v2074, 2147483648
  %v2083 = vxor.u32 %v2076, 2147483648
  %v2084 = vxor.u32 %v2077, 2147483648
  %v2085 = vxor.u32 %v2078, 2147483648
  %v2086 = vmul.f32 %v2080, 1.442695
  %v2087 = vpow.pop %v2086
  %v2088 = vmul.f32 %v2081, 1.442695
  %v2089 = vpow.pop %v2088
  %v2090 = vmul.f32 %v2082, 1.442695
  %v2091 = vpow.pop %v2090
  %v2092 = vmul.f32 %v2083, 1.442695
  %v2093 = vpow.pop %v2092
  %v2094 = vmul.f32 %v2084, 1.442695
  %v2095 = vpow.pop %v2094
  %v2096 = vmul.f32 %v2085, 1.442695
  %v2097 = vpow.pop %v2096
  %v2098 = vadd.f32 %v2087, 1.0
  %v2099 = vadd.f32 %v2089, 1.0
  %v2100 = vadd.f32 %v2091, 1.0
  %v2101 = vadd.f32 %v2093, 1.0
  %v2102 = vadd.f32 %v2095, 1.0
  %v2103 = vadd.f32 %v2097, 1.0
  %v2104 = vrcp.pop %v2098
  %v2105 = vmul.f32 %v2098, %v2104
  %v2106 = vsub.f32 1.0, %v2105
  %v2107 = vmul.f32 %v2104, %v2106
  %v2108 = vadd.f32 %v2104, %v2107
  %vm2109 = vweird.f32 %v2098
  %vm2110 = vweird.f32 %v2104
  %vm2111 = vmor %vm2109, %vm2110
  %v2112 = vsel %vm2111, %v2104, %v2108
  %v2113 = vand.u32 2147483647, %v2098
  %vm2114 = vcmp.eq.f32.partialorder %v2113, 8.507059e+37
  %v2115 = vand.u32 %v2098, 2147483648
  %v2116 = vor.u32 1.1754944e-38, %v2115
  %v2117 = vsel %vm2114, %v2116, %v2112
  %v2118 = vmul.f32 1.0, %v2117
  %v2119 = vrcp.pop %v2099
  %v2120 = vmul.f32 %v2099, %v2119
  %v2121 = vsub.f32 1.0, %v2120
  %v2122 = vmul.f32 %v2119, %v2121
  %v2123 = vadd.f32 %v2119, %v2122
  %vm2124 = vweird.f32 %v2099
  %vm2125 = vweird.f32 %v2119
  %vm2126 = vmor %vm2124, %vm2125
  %v2127 = vsel %vm2126, %v2119, %v2123
  %v2128 = vand.u32 2147483647, %v2099
  %vm2129 = vcmp.eq.f32.partialorder %v2128, 8.507059e+37
  %v2130 = vand.u32 %v2099, 2147483648
  %v2131 = vor.u32 1.1754944e-38, %v2130
  %v2132 = vsel %vm2129, %v2131, %v2127
  %v2133 = vmul.f32 1.0, %v2132
  %v2134 = vrcp.pop %v2100
  %v2135 = vmul.f32 %v2100, %v2134
  %v2136 = vsub.f32 1.0, %v2135
  %v2137 = vmul.f32 %v2134, %v2136
  %v2138 = vadd.f32 %v2134, %v2137
  %vm2139 = vweird.f32 %v2100
  %vm2140 = vweird.f32 %v2134
  %vm2141 = vmor %vm2139, %vm2140
  %v2142 = vsel %vm2141, %v2134, %v2138
  %v2143 = vand.u32 2147483647, %v2100
  %vm2144 = vcmp.eq.f32.partialorder %v2143, 8.507059e+37
  %v2145 = vand.u32 %v2100, 2147483648
  %v2146 = vor.u32 1.1754944e-38, %v2145
  %v2147 = vsel %vm2144, %v2146, %v2142
  %v2148 = vmul.f32 1.0, %v2147
  %v2149 = vrcp.pop %v2101
  %v2150 = vmul.f32 %v2101, %v2149
  %v2151 = vsub.f32 1.0, %v2150
  %v2152 = vmul.f32 %v2149, %v2151
  %v2153 = vadd.f32 %v2149, %v2152
  %vm2154 = vweird.f32 %v2101
  %vm2155 = vweird.f32 %v2149
  %vm2156 = vmor %vm2154, %vm2155
  %v2157 = vsel %vm2156, %v2149, %v2153
  %v2158 = vand.u32 2147483647, %v2101
  %vm2159 = vcmp.eq.f32.partialorder %v2158, 8.507059e+37
  %v2160 = vand.u32 %v2101, 2147483648
  %v2161 = vor.u32 1.1754944e-38, %v2160
  %v2162 = vsel %vm2159, %v2161, %v2157
  %v2163 = vmul.f32 1.0, %v2162
  %v2164 = vrcp.pop %v2102
  %v2165 = vmul.f32 %v2102, %v2164
  %v2166 = vsub.f32 1.0, %v2165
  %v2167 = vmul.f32 %v2164, %v2166
  %v2168 = vadd.f32 %v2164, %v2167
  %vm2169 = vweird.f32 %v2102
  %vm2170 = vweird.f32 %v2164
  %vm2171 = vmor %vm2169, %vm2170
  %v2172 = vsel %vm2171, %v2164, %v2168
  %v2173 = vand.u32 2147483647, %v2102
  %vm2174 = vcmp.eq.f32.partialorder %v2173, 8.507059e+37
  %v2175 = vand.u32 %v2102, 2147483648
  %v2176 = vor.u32 1.1754944e-38, %v2175
  %v2177 = vsel %vm2174, %v2176, %v2172
  %v2178 = vmul.f32 1.0, %v2177
  %v2179 = vrcp.pop %v2103
  %v2180 = vmul.f32 %v2103, %v2179
  %v2181 = vsub.f32 1.0, %v2180
  %v2182 = vmul.f32 %v2179, %v2181
  %v2183 = vadd.f32 %v2179, %v2182
  %vm2184 = vweird.f32 %v2103
  %vm2185 = vweird.f32 %v2179
  %vm2186 = vmor %vm2184, %vm2185
  %v2187 = vsel %vm2186, %v2179, %v2183
  %v2188 = vand.u32 2147483647, %v2103
  %vm2189 = vcmp.eq.f32.partialorder %v2188, 8.507059e+37
  %v2190 = vand.u32 %v2103, 2147483648
  %v2191 = vor.u32 1.1754944e-38, %v2190
  %v2192 = vsel %vm2189, %v2191, %v2187
  %v2193 = vmul.f32 1.0, %v2192
  %v2194 = vtanh.pop %v2075
  %v2195 = vtanh.pop %v2079
  %v2196 = vmul.f32 %v2133, %v1806
  %v2197 = vmul.f32 %v2178, %v1807
  %v2198 = vmul.f32 %v2118, %v2194
  %v2199 = vmul.f32 %v2163, %v2195
  %v2200 = vadd.f32 %v2196, %v2198
  %v2201 = vadd.f32 %v2197, %v2199
  %v2202 = vtanh.pop %v2200
  %v2203 = vtanh.pop %v2201
  %v2204 = vmul.f32 %v2148, %v2202
  %v2205 = vmul.f32 %v2193, %v2203
  %s2206 = scalar_lea.vmem [#allocation3], 16
  %2207 = vst [vmem:[%s2206] sm:$0xff] %v2204
  %2208 = vst [vmem:[%s2206 + $0x8] sm:$0xff] %v2205
  %v2209 = vpack.c.bf16 %v2205, %v2204
  %s2210 = scalar_lea.vmem [#allocation2], 128
  %v2211 = vld [vmem:[%s2210] sm:$0xff]
  %v2212 = vld [vmem:[%s2210 + $0x8] sm:$0xff]
  %v2213 = vld [vmem:[%s2210 + $0x10] sm:$0xff]
  %v2214 = vld [vmem:[%s2210 + $0x18] sm:$0xff]
  %v2215 = vld [vmem:[%s2210 + $0x20] sm:$0xff]
  %v2216 = vld [vmem:[%s2210 + $0x28] sm:$0xff]
  %v2217 = vld [vmem:[%s2210 + $0x30] sm:$0xff]
  %v2218 = vld [vmem:[%s2210 + $0x38] sm:$0xff]
  %v2219 = vld [vmem:[%s2] sm:$0xff]
  %v2220 = vld [vmem:[%s2 + $0x8] sm:$0xff]
  %v2221 = vld [vmem:[%s2 + $0x10] sm:$0xff]
  %v2222 = vld [vmem:[%s2 + $0x18] sm:$0xff]
  %v2223 = vld [vmem:[%s2 + $0x20] sm:$0xff]
  %v2224 = vld [vmem:[%s2 + $0x28] sm:$0xff]
  %v2225 = vld [vmem:[%s2 + $0x30] sm:$0xff]
  %v2226 = vld [vmem:[%s2 + $0x38] sm:$0xff]
  %v2227 = vld [vmem:[%s2 + $0x40] sm:$0xff]
  %v2228 = vld [vmem:[%s2 + $0x48] sm:$0xff]
  %v2229 = vld [vmem:[%s2 + $0x50] sm:$0xff]
  %v2230 = vld [vmem:[%s2 + $0x58] sm:$0xff]
  %v2231 = vld [vmem:[%s2 + $0x60] sm:$0xff]
  %v2232 = vld [vmem:[%s2 + $0x68] sm:$0xff]
  %v2233 = vld [vmem:[%s2 + $0x70] sm:$0xff]
  %v2234 = vld [vmem:[%s2 + $0x78] sm:$0xff]
  %v2235 = vld [vmem:[%s2 + $0x80] sm:$0xff]
  %v2236 = vld [vmem:[%s2 + $0x88] sm:$0xff]
  %v2237 = vld [vmem:[%s2 + $0x90] sm:$0xff]
  %v2238 = vld [vmem:[%s2 + $0x98] sm:$0xff]
  %v2239 = vld [vmem:[%s2 + $0xa0] sm:$0xff]
  %v2240 = vld [vmem:[%s2 + $0xa8] sm:$0xff]
  %v2241 = vld [vmem:[%s2 + $0xb0] sm:$0xff]
  %v2242 = vld [vmem:[%s2 + $0xb8] sm:$0xff]
  %v2243 = vld [vmem:[%s2 + $0xc0] sm:$0xff]
  %v2244 = vld [vmem:[%s2 + $0xc8] sm:$0xff]
  %v2245 = vld [vmem:[%s2 + $0xd0] sm:$0xff]
  %v2246 = vld [vmem:[%s2 + $0xd8] sm:$0xff]
  %v2247 = vld [vmem:[%s2 + $0xe0] sm:$0xff]
  %v2248 = vld [vmem:[%s2 + $0xe8] sm:$0xff]
  %v2249 = vld [vmem:[%s2 + $0xf0] sm:$0xff]
  %v2250 = vld [vmem:[%s2 + $0xf8] sm:$0xff]
  %v2283 = vunpack.c.l.b16 %v2219
  %v2284 = vunpack.c.h.b16 %v2219
  %v2285 = vunpack.c.l.b16 %v2220
  %v2286 = vunpack.c.h.b16 %v2220
  %v2287 = vunpack.c.l.b16 %v2221
  %v2288 = vunpack.c.h.b16 %v2221
  %v2289 = vunpack.c.l.b16 %v2222
  %v2290 = vunpack.c.h.b16 %v2222
  %v2291 = vunpack.c.l.b16 %v2223
  %v2292 = vunpack.c.h.b16 %v2223
  %v2293 = vunpack.c.l.b16 %v2224
  %v2294 = vunpack.c.h.b16 %v2224
  %v2295 = vunpack.c.l.b16 %v2225
  %v2296 = vunpack.c.h.b16 %v2225
  %v2297 = vunpack.c.l.b16 %v2226
  %v2298 = vunpack.c.h.b16 %v2226
  %v2299 = vunpack.c.l.b16 %v2227
  %v2300 = vunpack.c.h.b16 %v2227
  %v2301 = vunpack.c.l.b16 %v2228
  %v2302 = vunpack.c.h.b16 %v2228
  %v2303 = vunpack.c.l.b16 %v2229
  %v2304 = vunpack.c.h.b16 %v2229
  %v2305 = vunpack.c.l.b16 %v2230
  %v2306 = vunpack.c.h.b16 %v2230
  %v2307 = vunpack.c.l.b16 %v2231
  %v2308 = vunpack.c.h.b16 %v2231
  %v2309 = vunpack.c.l.b16 %v2232
  %v2310 = vunpack.c.h.b16 %v2232
  %v2311 = vunpack.c.l.b16 %v2233
  %v2312 = vunpack.c.h.b16 %v2233
  %v2313 = vunpack.c.l.b16 %v2234
  %v2314 = vunpack.c.h.b16 %v2234
  %v2315 = vunpack.c.l.b16 %v2235
  %v2316 = vunpack.c.h.b16 %v2235
  %v2317 = vunpack.c.l.b16 %v2236
  %v2318 = vunpack.c.h.b16 %v2236
  %v2319 = vunpack.c.l.b16 %v2237
  %v2320 = vunpack.c.h.b16 %v2237
  %v2321 = vunpack.c.l.b16 %v2238
  %v2322 = vunpack.c.h.b16 %v2238
  %v2323 = vunpack.c.l.b16 %v2239
  %v2324 = vunpack.c.h.b16 %v2239
  %v2325 = vunpack.c.l.b16 %v2240
  %v2326 = vunpack.c.h.b16 %v2240
  %v2327 = vunpack.c.l.b16 %v2241
  %v2328 = vunpack.c.h.b16 %v2241
  %v2329 = vunpack.c.l.b16 %v2242
  %v2330 = vunpack.c.h.b16 %v2242
  %v2331 = vunpack.c.l.b16 %v2243
  %v2332 = vunpack.c.h.b16 %v2243
  %v2333 = vunpack.c.l.b16 %v2244
  %v2334 = vunpack.c.h.b16 %v2244
  %v2335 = vunpack.c.l.b16 %v2245
  %v2336 = vunpack.c.h.b16 %v2245
  %v2337 = vunpack.c.l.b16 %v2246
  %v2338 = vunpack.c.h.b16 %v2246
  %v2339 = vunpack.c.l.b16 %v2247
  %v2340 = vunpack.c.h.b16 %v2247
  %v2341 = vunpack.c.l.b16 %v2248
  %v2342 = vunpack.c.h.b16 %v2248
  %v2343 = vunpack.c.l.b16 %v2249
  %v2344 = vunpack.c.h.b16 %v2249
  %v2345 = vunpack.c.l.b16 %v2250
  %v2346 = vunpack.c.h.b16 %v2250
  %v2347 = vpack.c.b16 %v2287, %v2283
  %v2348 = vpack.c.b16 %v2288, %v2284
  %v2349 = vpack.c.b16 %v2289, %v2285
  %v2350 = vpack.c.b16 %v2290, %v2286
  %v2351 = vpack.c.b16 %v2295, %v2291
  %v2352 = vpack.c.b16 %v2296, %v2292
  %v2353 = vpack.c.b16 %v2297, %v2293
  %v2354 = vpack.c.b16 %v2298, %v2294
  %v2355 = vpack.c.b16 %v2303, %v2299
  %v2356 = vpack.c.b16 %v2304, %v2300
  %v2357 = vpack.c.b16 %v2305, %v2301
  %v2358 = vpack.c.b16 %v2306, %v2302
  %v2359 = vpack.c.b16 %v2311, %v2307
  %v2360 = vpack.c.b16 %v2312, %v2308
  %v2361 = vpack.c.b16 %v2313, %v2309
  %v2362 = vpack.c.b16 %v2314, %v2310
  %v2363 = vpack.c.b16 %v2319, %v2315
  %v2364 = vpack.c.b16 %v2320, %v2316
  %v2365 = vpack.c.b16 %v2321, %v2317
  %v2366 = vpack.c.b16 %v2322, %v2318
  %v2367 = vpack.c.b16 %v2327, %v2323
  %v2368 = vpack.c.b16 %v2328, %v2324
  %v2369 = vpack.c.b16 %v2329, %v2325
  %v2370 = vpack.c.b16 %v2330, %v2326
  %v2371 = vpack.c.b16 %v2335, %v2331
  %v2372 = vpack.c.b16 %v2336, %v2332
  %v2373 = vpack.c.b16 %v2337, %v2333
  %v2374 = vpack.c.b16 %v2338, %v2334
  %v2375 = vpack.c.b16 %v2343, %v2339
  %v2376 = vpack.c.b16 %v2344, %v2340
  %v2377 = vpack.c.b16 %v2345, %v2341
  %v2378 = vpack.c.b16 %v2346, %v2342
  %2411 = vmatpush.bf16.msra.mxu0 %v2375
  %2412 = vmatpush.bf16.msra.mxu0 %v2371
  %2413 = vmatpush.bf16.msra.mxu0 %v2367
  %2414 = vmatpush.bf16.msra.mxu0 %v2363
  %2415 = vmatpush.bf16.msra.mxu0 %v2359
  %2416 = vmatpush.bf16.msra.mxu0 %v2355
  %2417 = vmatpush.bf16.msra.mxu0 %v2351
  %2418 = vmatpush.bf16.msra.mxu0 %v2347
  %2419 = vmatmul.bf16.gmra.mxu0 %v2209
  %v2420 = vpop.f32.mrf.mxu0
  %v2421 = vadd.f32 0.0, %v2420
  %v2422 = vpop.f32.mrf.mxu0
  %v2423 = vadd.f32 0.0, %v2422
  %2424 = vdwg.mxu0
  %2425 = vmatpush.bf16.msra.mxu0 %v2376
  %2426 = vmatpush.bf16.msra.mxu0 %v2372
  %2427 = vmatpush.bf16.msra.mxu0 %v2368
  %2428 = vmatpush.bf16.msra.mxu0 %v2364
  %2429 = vmatpush.bf16.msra.mxu0 %v2360
  %2430 = vmatpush.bf16.msra.mxu0 %v2356
  %2431 = vmatpush.bf16.msra.mxu0 %v2352
  %2432 = vmatpush.bf16.msra.mxu0 %v2348
  %2433 = vmatmul.bf16.gmra.mxu0 %v2209
  %v2434 = vpop.f32.mrf.mxu0
  %v2435 = vadd.f32 0.0, %v2434
  %v2436 = vpop.f32.mrf.mxu0
  %v2437 = vadd.f32 0.0, %v2436
  %2438 = vdwg.mxu0
  %2439 = vmatpush.bf16.msra.mxu0 %v2377
  %2440 = vmatpush.bf16.msra.mxu0 %v2373
  %2441 = vmatpush.bf16.msra.mxu0 %v2369
  %2442 = vmatpush.bf16.msra.mxu0 %v2365
  %2443 = vmatpush.bf16.msra.mxu0 %v2361
  %2444 = vmatpush.bf16.msra.mxu0 %v2357
  %2445 = vmatpush.bf16.msra.mxu0 %v2353
  %2446 = vmatpush.bf16.msra.mxu0 %v2349
  %2447 = vmatmul.bf16.gmra.mxu0 %v2209
  %v2448 = vpop.f32.mrf.mxu0
  %v2449 = vadd.f32 0.0, %v2448
  %v2450 = vpop.f32.mrf.mxu0
  %v2451 = vadd.f32 0.0, %v2450
  %2452 = vdwg.mxu0
  %2453 = vmatpush.bf16.msra.mxu0 %v2378
  %2454 = vmatpush.bf16.msra.mxu0 %v2374
  %2455 = vmatpush.bf16.msra.mxu0 %v2370
  %2456 = vmatpush.bf16.msra.mxu0 %v2366
  %2457 = vmatpush.bf16.msra.mxu0 %v2362
  %2458 = vmatpush.bf16.msra.mxu0 %v2358
  %2459 = vmatpush.bf16.msra.mxu0 %v2354
  %2460 = vmatpush.bf16.msra.mxu0 %v2350
  %2461 = vmatmul.bf16.gmra.mxu0 %v2209
  %v2462 = vpop.f32.mrf.mxu0
  %v2463 = vadd.f32 0.0, %v2462
  %v2464 = vpop.f32.mrf.mxu0
  %v2465 = vadd.f32 0.0, %v2464
  %2466 = vdwg.mxu0
  %v2467 = vadd.f32 %v2211, %v2421
  %v2468 = vadd.f32 %v2212, %v2435
  %v2469 = vadd.f32 %v2213, %v2449
  %v2470 = vadd.f32 %v2214, %v2463
  %v2471 = vadd.f32 %v2215, %v2423
  %v2472 = vadd.f32 %v2216, %v2437
  %v2473 = vadd.f32 %v2217, %v2451
  %v2474 = vadd.f32 %v2218, %v2465
  %v2475 = vxor.u32 %v2467, 2147483648
  %v2476 = vxor.u32 %v2468, 2147483648
  %v2477 = vxor.u32 %v2469, 2147483648
  %v2478 = vxor.u32 %v2471, 2147483648
  %v2479 = vxor.u32 %v2472, 2147483648
  %v2480 = vxor.u32 %v2473, 2147483648
  %v2481 = vmul.f32 %v2475, 1.442695
  %v2482 = vpow.pop %v2481
  %v2483 = vmul.f32 %v2476, 1.442695
  %v2484 = vpow.pop %v2483
  %v2485 = vmul.f32 %v2477, 1.442695
  %v2486 = vpow.pop %v2485
  %v2487 = vmul.f32 %v2478, 1.442695
  %v2488 = vpow.pop %v2487
  %v2489 = vmul.f32 %v2479, 1.442695
  %v2490 = vpow.pop %v2489
  %v2491 = vmul.f32 %v2480, 1.442695
  %v2492 = vpow.pop %v2491
  %v2493 = vadd.f32 %v2482, 1.0
  %v2494 = vadd.f32 %v2484, 1.0
  %v2495 = vadd.f32 %v2486, 1.0
  %v2496 = vadd.f32 %v2488, 1.0
  %v2497 = vadd.f32 %v2490, 1.0
  %v2498 = vadd.f32 %v2492, 1.0
  %v2499 = vrcp.pop %v2493
  %v2500 = vmul.f32 %v2493, %v2499
  %v2501 = vsub.f32 1.0, %v2500
  %v2502 = vmul.f32 %v2499, %v2501
  %v2503 = vadd.f32 %v2499, %v2502
  %vm2504 = vweird.f32 %v2493
  %vm2505 = vweird.f32 %v2499
  %vm2506 = vmor %vm2504, %vm2505
  %v2507 = vsel %vm2506, %v2499, %v2503
  %v2508 = vand.u32 2147483647, %v2493
  %vm2509 = vcmp.eq.f32.partialorder %v2508, 8.507059e+37
  %v2510 = vand.u32 %v2493, 2147483648
  %v2511 = vor.u32 1.1754944e-38, %v2510
  %v2512 = vsel %vm2509, %v2511, %v2507
  %v2513 = vmul.f32 1.0, %v2512
  %v2514 = vrcp.pop %v2494
  %v2515 = vmul.f32 %v2494, %v2514
  %v2516 = vsub.f32 1.0, %v2515
  %v2517 = vmul.f32 %v2514, %v2516
  %v2518 = vadd.f32 %v2514, %v2517
  %vm2519 = vweird.f32 %v2494
  %vm2520 = vweird.f32 %v2514
  %vm2521 = vmor %vm2519, %vm2520
  %v2522 = vsel %vm2521, %v2514, %v2518
  %v2523 = vand.u32 2147483647, %v2494
  %vm2524 = vcmp.eq.f32.partialorder %v2523, 8.507059e+37
  %v2525 = vand.u32 %v2494, 2147483648
  %v2526 = vor.u32 1.1754944e-38, %v2525
  %v2527 = vsel %vm2524, %v2526, %v2522
  %v2528 = vmul.f32 1.0, %v2527
  %v2529 = vrcp.pop %v2495
  %v2530 = vmul.f32 %v2495, %v2529
  %v2531 = vsub.f32 1.0, %v2530
  %v2532 = vmul.f32 %v2529, %v2531
  %v2533 = vadd.f32 %v2529, %v2532
  %vm2534 = vweird.f32 %v2495
  %vm2535 = vweird.f32 %v2529
  %vm2536 = vmor %vm2534, %vm2535
  %v2537 = vsel %vm2536, %v2529, %v2533
  %v2538 = vand.u32 2147483647, %v2495
  %vm2539 = vcmp.eq.f32.partialorder %v2538, 8.507059e+37
  %v2540 = vand.u32 %v2495, 2147483648
  %v2541 = vor.u32 1.1754944e-38, %v2540
  %v2542 = vsel %vm2539, %v2541, %v2537
  %v2543 = vmul.f32 1.0, %v2542
  %v2544 = vrcp.pop %v2496
  %v2545 = vmul.f32 %v2496, %v2544
  %v2546 = vsub.f32 1.0, %v2545
  %v2547 = vmul.f32 %v2544, %v2546
  %v2548 = vadd.f32 %v2544, %v2547
  %vm2549 = vweird.f32 %v2496
  %vm2550 = vweird.f32 %v2544
  %vm2551 = vmor %vm2549, %vm2550
  %v2552 = vsel %vm2551, %v2544, %v2548
  %v2553 = vand.u32 2147483647, %v2496
  %vm2554 = vcmp.eq.f32.partialorder %v2553, 8.507059e+37
  %v2555 = vand.u32 %v2496, 2147483648
  %v2556 = vor.u32 1.1754944e-38, %v2555
  %v2557 = vsel %vm2554, %v2556, %v2552
  %v2558 = vmul.f32 1.0, %v2557
  %v2559 = vrcp.pop %v2497
  %v2560 = vmul.f32 %v2497, %v2559
  %v2561 = vsub.f32 1.0, %v2560
  %v2562 = vmul.f32 %v2559, %v2561
  %v2563 = vadd.f32 %v2559, %v2562
  %vm2564 = vweird.f32 %v2497
  %vm2565 = vweird.f32 %v2559
  %vm2566 = vmor %vm2564, %vm2565
  %v2567 = vsel %vm2566, %v2559, %v2563
  %v2568 = vand.u32 2147483647, %v2497
  %vm2569 = vcmp.eq.f32.partialorder %v2568, 8.507059e+37
  %v2570 = vand.u32 %v2497, 2147483648
  %v2571 = vor.u32 1.1754944e-38, %v2570
  %v2572 = vsel %vm2569, %v2571, %v2567
  %v2573 = vmul.f32 1.0, %v2572
  %v2574 = vrcp.pop %v2498
  %v2575 = vmul.f32 %v2498, %v2574
  %v2576 = vsub.f32 1.0, %v2575
  %v2577 = vmul.f32 %v2574, %v2576
  %v2578 = vadd.f32 %v2574, %v2577
  %vm2579 = vweird.f32 %v2498
  %vm2580 = vweird.f32 %v2574
  %vm2581 = vmor %vm2579, %vm2580
  %v2582 = vsel %vm2581, %v2574, %v2578
  %v2583 = vand.u32 2147483647, %v2498
  %vm2584 = vcmp.eq.f32.partialorder %v2583, 8.507059e+37
  %v2585 = vand.u32 %v2498, 2147483648
  %v2586 = vor.u32 1.1754944e-38, %v2585
  %v2587 = vsel %vm2584, %v2586, %v2582
  %v2588 = vmul.f32 1.0, %v2587
  %v2589 = vtanh.pop %v2470
  %v2590 = vtanh.pop %v2474
  %v2591 = vmul.f32 %v2528, %v2200
  %v2592 = vmul.f32 %v2573, %v2201
  %v2593 = vmul.f32 %v2513, %v2589
  %v2594 = vmul.f32 %v2558, %v2590
  %v2595 = vadd.f32 %v2591, %v2593
  %v2596 = vadd.f32 %v2592, %v2594
  %v2597 = vtanh.pop %v2595
  %v2598 = vtanh.pop %v2596
  %v2599 = vmul.f32 %v2543, %v2597
  %v2600 = vmul.f32 %v2588, %v2598
  %s2601 = scalar_lea.vmem [#allocation3], 32
  %2602 = vst [vmem:[%s2601] sm:$0xff] %v2599
  %2603 = vst [vmem:[%s2601 + $0x8] sm:$0xff] %v2600
  %v2604 = vpack.c.bf16 %v2600, %v2599
  %s2605 = scalar_lea.vmem [#allocation2], 192
  %v2606 = vld [vmem:[%s2605] sm:$0xff]
  %v2607 = vld [vmem:[%s2605 + $0x8] sm:$0xff]
  %v2608 = vld [vmem:[%s2605 + $0x10] sm:$0xff]
  %v2609 = vld [vmem:[%s2605 + $0x18] sm:$0xff]
  %v2610 = vld [vmem:[%s2605 + $0x20] sm:$0xff]
  %v2611 = vld [vmem:[%s2605 + $0x28] sm:$0xff]
  %v2612 = vld [vmem:[%s2605 + $0x30] sm:$0xff]
  %v2613 = vld [vmem:[%s2605 + $0x38] sm:$0xff]
  %v2614 = vld [vmem:[%s2] sm:$0xff]
  %v2615 = vld [vmem:[%s2 + $0x8] sm:$0xff]
  %v2616 = vld [vmem:[%s2 + $0x10] sm:$0xff]
  %v2617 = vld [vmem:[%s2 + $0x18] sm:$0xff]
  %v2618 = vld [vmem:[%s2 + $0x20] sm:$0xff]
  %v2619 = vld [vmem:[%s2 + $0x28] sm:$0xff]
  %v2620 = vld [vmem:[%s2 + $0x30] sm:$0xff]
  %v2621 = vld [vmem:[%s2 + $0x38] sm:$0xff]
  %v2622 = vld [vmem:[%s2 + $0x40] sm:$0xff]
  %v2623 = vld [vmem:[%s2 + $0x48] sm:$0xff]
  %v2624 = vld [vmem:[%s2 + $0x50] sm:$0xff]
  %v2625 = vld [vmem:[%s2 + $0x58] sm:$0xff]
  %v2626 = vld [vmem:[%s2 + $0x60] sm:$0xff]
  %v2627 = vld [vmem:[%s2 + $0x68] sm:$0xff]
  %v2628 = vld [vmem:[%s2 + $0x70] sm:$0xff]
  %v2629 = vld [vmem:[%s2 + $0x78] sm:$0xff]
  %v2630 = vld [vmem:[%s2 + $0x80] sm:$0xff]
  %v2631 = vld [vmem:[%s2 + $0x88] sm:$0xff]
  %v2632 = vld [vmem:[%s2 + $0x90] sm:$0xff]
  %v2633 = vld [vmem:[%s2 + $0x98] sm:$0xff]
  %v2634 = vld [vmem:[%s2 + $0xa0] sm:$0xff]
  %v2635 = vld [vmem:[%s2 + $0xa8] sm:$0xff]
  %v2636 = vld [vmem:[%s2 + $0xb0] sm:$0xff]
  %v2637 = vld [vmem:[%s2 + $0xb8] sm:$0xff]
  %v2638 = vld [vmem:[%s2 + $0xc0] sm:$0xff]
  %v2639 = vld [vmem:[%s2 + $0xc8] sm:$0xff]
  %v2640 = vld [vmem:[%s2 + $0xd0] sm:$0xff]
  %v2641 = vld [vmem:[%s2 + $0xd8] sm:$0xff]
  %v2642 = vld [vmem:[%s2 + $0xe0] sm:$0xff]
  %v2643 = vld [vmem:[%s2 + $0xe8] sm:$0xff]
  %v2644 = vld [vmem:[%s2 + $0xf0] sm:$0xff]
  %v2645 = vld [vmem:[%s2 + $0xf8] sm:$0xff]
  %v2678 = vunpack.c.l.b16 %v2614
  %v2679 = vunpack.c.h.b16 %v2614
  %v2680 = vunpack.c.l.b16 %v2615
  %v2681 = vunpack.c.h.b16 %v2615
  %v2682 = vunpack.c.l.b16 %v2616
  %v2683 = vunpack.c.h.b16 %v2616
  %v2684 = vunpack.c.l.b16 %v2617
  %v2685 = vunpack.c.h.b16 %v2617
  %v2686 = vunpack.c.l.b16 %v2618
  %v2687 = vunpack.c.h.b16 %v2618
  %v2688 = vunpack.c.l.b16 %v2619
  %v2689 = vunpack.c.h.b16 %v2619
  %v2690 = vunpack.c.l.b16 %v2620
  %v2691 = vunpack.c.h.b16 %v2620
  %v2692 = vunpack.c.l.b16 %v2621
  %v2693 = vunpack.c.h.b16 %v2621
  %v2694 = vunpack.c.l.b16 %v2622
  %v2695 = vunpack.c.h.b16 %v2622
  %v2696 = vunpack.c.l.b16 %v2623
  %v2697 = vunpack.c.h.b16 %v2623
  %v2698 = vunpack.c.l.b16 %v2624
  %v2699 = vunpack.c.h.b16 %v2624
  %v2700 = vunpack.c.l.b16 %v2625
  %v2701 = vunpack.c.h.b16 %v2625
  %v2702 = vunpack.c.l.b16 %v2626
  %v2703 = vunpack.c.h.b16 %v2626
  %v2704 = vunpack.c.l.b16 %v2627
  %v2705 = vunpack.c.h.b16 %v2627
  %v2706 = vunpack.c.l.b16 %v2628
  %v2707 = vunpack.c.h.b16 %v2628
  %v2708 = vunpack.c.l.b16 %v2629
  %v2709 = vunpack.c.h.b16 %v2629
  %v2710 = vunpack.c.l.b16 %v2630
  %v2711 = vunpack.c.h.b16 %v2630
  %v2712 = vunpack.c.l.b16 %v2631
  %v2713 = vunpack.c.h.b16 %v2631
  %v2714 = vunpack.c.l.b16 %v2632
  %v2715 = vunpack.c.h.b16 %v2632
  %v2716 = vunpack.c.l.b16 %v2633
  %v2717 = vunpack.c.h.b16 %v2633
  %v2718 = vunpack.c.l.b16 %v2634
  %v2719 = vunpack.c.h.b16 %v2634
  %v2720 = vunpack.c.l.b16 %v2635
  %v2721 = vunpack.c.h.b16 %v2635
  %v2722 = vunpack.c.l.b16 %v2636
  %v2723 = vunpack.c.h.b16 %v2636
  %v2724 = vunpack.c.l.b16 %v2637
  %v2725 = vunpack.c.h.b16 %v2637
  %v2726 = vunpack.c.l.b16 %v2638
  %v2727 = vunpack.c.h.b16 %v2638
  %v2728 = vunpack.c.l.b16 %v2639
  %v2729 = vunpack.c.h.b16 %v2639
  %v2730 = vunpack.c.l.b16 %v2640
  %v2731 = vunpack.c.h.b16 %v2640
  %v2732 = vunpack.c.l.b16 %v2641
  %v2733 = vunpack.c.h.b16 %v2641
  %v2734 = vunpack.c.l.b16 %v2642
  %v2735 = vunpack.c.h.b16 %v2642
  %v2736 = vunpack.c.l.b16 %v2643
  %v2737 = vunpack.c.h.b16 %v2643
  %v2738 = vunpack.c.l.b16 %v2644
  %v2739 = vunpack.c.h.b16 %v2644
  %v2740 = vunpack.c.l.b16 %v2645
  %v2741 = vunpack.c.h.b16 %v2645
  %v2742 = vpack.c.b16 %v2682, %v2678
  %v2743 = vpack.c.b16 %v2683, %v2679
  %v2744 = vpack.c.b16 %v2684, %v2680
  %v2745 = vpack.c.b16 %v2685, %v2681
  %v2746 = vpack.c.b16 %v2690, %v2686
  %v2747 = vpack.c.b16 %v2691, %v2687
  %v2748 = vpack.c.b16 %v2692, %v2688
  %v2749 = vpack.c.b16 %v2693, %v2689
  %v2750 = vpack.c.b16 %v2698, %v2694
  %v2751 = vpack.c.b16 %v2699, %v2695
  %v2752 = vpack.c.b16 %v2700, %v2696
  %v2753 = vpack.c.b16 %v2701, %v2697
  %v2754 = vpack.c.b16 %v2706, %v2702
  %v2755 = vpack.c.b16 %v2707, %v2703
  %v2756 = vpack.c.b16 %v2708, %v2704
  %v2757 = vpack.c.b16 %v2709, %v2705
  %v2758 = vpack.c.b16 %v2714, %v2710
  %v2759 = vpack.c.b16 %v2715, %v2711
  %v2760 = vpack.c.b16 %v2716, %v2712
  %v2761 = vpack.c.b16 %v2717, %v2713
  %v2762 = vpack.c.b16 %v2722, %v2718
  %v2763 = vpack.c.b16 %v2723, %v2719
  %v2764 = vpack.c.b16 %v2724, %v2720
  %v2765 = vpack.c.b16 %v2725, %v2721
  %v2766 = vpack.c.b16 %v2730, %v2726
  %v2767 = vpack.c.b16 %v2731, %v2727
  %v2768 = vpack.c.b16 %v2732, %v2728
  %v2769 = vpack.c.b16 %v2733, %v2729
  %v2770 = vpack.c.b16 %v2738, %v2734
  %v2771 = vpack.c.b16 %v2739, %v2735
  %v2772 = vpack.c.b16 %v2740, %v2736
  %v2773 = vpack.c.b16 %v2741, %v2737
  %2806 = vmatpush.bf16.msra.mxu0 %v2770
  %2807 = vmatpush.bf16.msra.mxu0 %v2766
  %2808 = vmatpush.bf16.msra.mxu0 %v2762
  %2809 = vmatpush.bf16.msra.mxu0 %v2758
  %2810 = vmatpush.bf16.msra.mxu0 %v2754
  %2811 = vmatpush.bf16.msra.mxu0 %v2750
  %2812 = vmatpush.bf16.msra.mxu0 %v2746
  %2813 = vmatpush.bf16.msra.mxu0 %v2742
  %2814 = vmatmul.bf16.gmra.mxu0 %v2604
  %v2815 = vpop.f32.mrf.mxu0
  %v2816 = vadd.f32 0.0, %v2815
  %v2817 = vpop.f32.mrf.mxu0
  %v2818 = vadd.f32 0.0, %v2817
  %2819 = vdwg.mxu0
  %2820 = vmatpush.bf16.msra.mxu0 %v2771
  %2821 = vmatpush.bf16.msra.mxu0 %v2767
  %2822 = vmatpush.bf16.msra.mxu0 %v2763
  %2823 = vmatpush.bf16.msra.mxu0 %v2759
  %2824 = vmatpush.bf16.msra.mxu0 %v2755
  %2825 = vmatpush.bf16.msra.mxu0 %v2751
  %2826 = vmatpush.bf16.msra.mxu0 %v2747
  %2827 = vmatpush.bf16.msra.mxu0 %v2743
  %2828 = vmatmul.bf16.gmra.mxu0 %v2604
  %v2829 = vpop.f32.mrf.mxu0
  %v2830 = vadd.f32 0.0, %v2829
  %v2831 = vpop.f32.mrf.mxu0
  %v2832 = vadd.f32 0.0, %v2831
  %2833 = vdwg.mxu0
  %2834 = vmatpush.bf16.msra.mxu0 %v2772
  %2835 = vmatpush.bf16.msra.mxu0 %v2768
  %2836 = vmatpush.bf16.msra.mxu0 %v2764
  %2837 = vmatpush.bf16.msra.mxu0 %v2760
  %2838 = vmatpush.bf16.msra.mxu0 %v2756
  %2839 = vmatpush.bf16.msra.mxu0 %v2752
  %2840 = vmatpush.bf16.msra.mxu0 %v2748
  %2841 = vmatpush.bf16.msra.mxu0 %v2744
  %2842 = vmatmul.bf16.gmra.mxu0 %v2604
  %v2843 = vpop.f32.mrf.mxu0
  %v2844 = vadd.f32 0.0, %v2843
  %v2845 = vpop.f32.mrf.mxu0
  %v2846 = vadd.f32 0.0, %v2845
  %2847 = vdwg.mxu0
  %2848 = vmatpush.bf16.msra.mxu0 %v2773
  %2849 = vmatpush.bf16.msra.mxu0 %v2769
  %2850 = vmatpush.bf16.msra.mxu0 %v2765
  %2851 = vmatpush.bf16.msra.mxu0 %v2761
  %2852 = vmatpush.bf16.msra.mxu0 %v2757
  %2853 = vmatpush.bf16.msra.mxu0 %v2753
  %2854 = vmatpush.bf16.msra.mxu0 %v2749
  %2855 = vmatpush.bf16.msra.mxu0 %v2745
  %2856 = vmatmul.bf16.gmra.mxu0 %v2604
  %v2857 = vpop.f32.mrf.mxu0
  %v2858 = vadd.f32 0.0, %v2857
  %v2859 = vpop.f32.mrf.mxu0
  %v2860 = vadd.f32 0.0, %v2859
  %2861 = vdwg.mxu0
  %v2862 = vadd.f32 %v2606, %v2816
  %v2863 = vadd.f32 %v2607, %v2830
  %v2864 = vadd.f32 %v2608, %v2844
  %v2865 = vadd.f32 %v2609, %v2858
  %v2866 = vadd.f32 %v2610, %v2818
  %v2867 = vadd.f32 %v2611, %v2832
  %v2868 = vadd.f32 %v2612, %v2846
  %v2869 = vadd.f32 %v2613, %v2860
  %v2870 = vxor.u32 %v2862, 2147483648
  %v2871 = vxor.u32 %v2863, 2147483648
  %v2872 = vxor.u32 %v2864, 2147483648
  %v2873 = vxor.u32 %v2866, 2147483648
  %v2874 = vxor.u32 %v2867, 2147483648
  %v2875 = vxor.u32 %v2868, 2147483648
  %v2876 = vmul.f32 %v2870, 1.442695
  %v2877 = vpow.pop %v2876
  %v2878 = vmul.f32 %v2871, 1.442695
  %v2879 = vpow.pop %v2878
  %v2880 = vmul.f32 %v2872, 1.442695
  %v2881 = vpow.pop %v2880
  %v2882 = vmul.f32 %v2873, 1.442695
  %v2883 = vpow.pop %v2882
  %v2884 = vmul.f32 %v2874, 1.442695
  %v2885 = vpow.pop %v2884
  %v2886 = vmul.f32 %v2875, 1.442695
  %v2887 = vpow.pop %v2886
  %v2888 = vadd.f32 %v2877, 1.0
  %v2889 = vadd.f32 %v2879, 1.0
  %v2890 = vadd.f32 %v2881, 1.0
  %v2891 = vadd.f32 %v2883, 1.0
  %v2892 = vadd.f32 %v2885, 1.0
  %v2893 = vadd.f32 %v2887, 1.0
  %v2894 = vrcp.pop %v2888
  %v2895 = vmul.f32 %v2888, %v2894
  %v2896 = vsub.f32 1.0, %v2895
  %v2897 = vmul.f32 %v2894, %v2896
  %v2898 = vadd.f32 %v2894, %v2897
  %vm2899 = vweird.f32 %v2888
  %vm2900 = vweird.f32 %v2894
  %vm2901 = vmor %vm2899, %vm2900
  %v2902 = vsel %vm2901, %v2894, %v2898
  %v2903 = vand.u32 2147483647, %v2888
  %vm2904 = vcmp.eq.f32.partialorder %v2903, 8.507059e+37
  %v2905 = vand.u32 %v2888, 2147483648
  %v2906 = vor.u32 1.1754944e-38, %v2905
  %v2907 = vsel %vm2904, %v2906, %v2902
  %v2908 = vmul.f32 1.0, %v2907
  %v2909 = vrcp.pop %v2889
  %v2910 = vmul.f32 %v2889, %v2909
  %v2911 = vsub.f32 1.0, %v2910
  %v2912 = vmul.f32 %v2909, %v2911
  %v2913 = vadd.f32 %v2909, %v2912
  %vm2914 = vweird.f32 %v2889
  %vm2915 = vweird.f32 %v2909
  %vm2916 = vmor %vm2914, %vm2915
  %v2917 = vsel %vm2916, %v2909, %v2913
  %v2918 = vand.u32 2147483647, %v2889
  %vm2919 = vcmp.eq.f32.partialorder %v2918, 8.507059e+37
  %v2920 = vand.u32 %v2889, 2147483648
  %v2921 = vor.u32 1.1754944e-38, %v2920
  %v2922 = vsel %vm2919, %v2921, %v2917
  %v2923 = vmul.f32 1.0, %v2922
  %v2924 = vrcp.pop %v2890
  %v2925 = vmul.f32 %v2890, %v2924
  %v2926 = vsub.f32 1.0, %v2925
  %v2927 = vmul.f32 %v2924, %v2926
  %v2928 = vadd.f32 %v2924, %v2927
  %vm2929 = vweird.f32 %v2890
  %vm2930 = vweird.f32 %v2924
  %vm2931 = vmor %vm2929, %vm2930
  %v2932 = vsel %vm2931, %v2924, %v2928
  %v2933 = vand.u32 2147483647, %v2890
  %vm2934 = vcmp.eq.f32.partialorder %v2933, 8.507059e+37
  %v2935 = vand.u32 %v2890, 2147483648
  %v2936 = vor.u32 1.1754944e-38, %v2935
  %v2937 = vsel %vm2934, %v2936, %v2932
  %v2938 = vmul.f32 1.0, %v2937
  %v2939 = vrcp.pop %v2891
  %v2940 = vmul.f32 %v2891, %v2939
  %v2941 = vsub.f32 1.0, %v2940
  %v2942 = vmul.f32 %v2939, %v2941
  %v2943 = vadd.f32 %v2939, %v2942
  %vm2944 = vweird.f32 %v2891
  %vm2945 = vweird.f32 %v2939
  %vm2946 = vmor %vm2944, %vm2945
  %v2947 = vsel %vm2946, %v2939, %v2943
  %v2948 = vand.u32 2147483647, %v2891
  %vm2949 = vcmp.eq.f32.partialorder %v2948, 8.507059e+37
  %v2950 = vand.u32 %v2891, 2147483648
  %v2951 = vor.u32 1.1754944e-38, %v2950
  %v2952 = vsel %vm2949, %v2951, %v2947
  %v2953 = vmul.f32 1.0, %v2952
  %v2954 = vrcp.pop %v2892
  %v2955 = vmul.f32 %v2892, %v2954
  %v2956 = vsub.f32 1.0, %v2955
  %v2957 = vmul.f32 %v2954, %v2956
  %v2958 = vadd.f32 %v2954, %v2957
  %vm2959 = vweird.f32 %v2892
  %vm2960 = vweird.f32 %v2954
  %vm2961 = vmor %vm2959, %vm2960
  %v2962 = vsel %vm2961, %v2954, %v2958
  %v2963 = vand.u32 2147483647, %v2892
  %vm2964 = vcmp.eq.f32.partialorder %v2963, 8.507059e+37
  %v2965 = vand.u32 %v2892, 2147483648
  %v2966 = vor.u32 1.1754944e-38, %v2965
  %v2967 = vsel %vm2964, %v2966, %v2962
  %v2968 = vmul.f32 1.0, %v2967
  %v2969 = vrcp.pop %v2893
  %v2970 = vmul.f32 %v2893, %v2969
  %v2971 = vsub.f32 1.0, %v2970
  %v2972 = vmul.f32 %v2969, %v2971
  %v2973 = vadd.f32 %v2969, %v2972
  %vm2974 = vweird.f32 %v2893
  %vm2975 = vweird.f32 %v2969
  %vm2976 = vmor %vm2974, %vm2975
  %v2977 = vsel %vm2976, %v2969, %v2973
  %v2978 = vand.u32 2147483647, %v2893
  %vm2979 = vcmp.eq.f32.partialorder %v2978, 8.507059e+37
  %v2980 = vand.u32 %v2893, 2147483648
  %v2981 = vor.u32 1.1754944e-38, %v2980
  %v2982 = vsel %vm2979, %v2981, %v2977
  %v2983 = vmul.f32 1.0, %v2982
  %v2984 = vtanh.pop %v2865
  %v2985 = vtanh.pop %v2869
  %v2986 = vmul.f32 %v2923, %v2595
  %v2987 = vmul.f32 %v2968, %v2596
  %v2988 = vmul.f32 %v2908, %v2984
  %v2989 = vmul.f32 %v2953, %v2985
  %v2990 = vadd.f32 %v2986, %v2988
  %v2991 = vadd.f32 %v2987, %v2989
  %v2992 = vtanh.pop %v2990
  %v2993 = vtanh.pop %v2991
  %v2994 = vmul.f32 %v2938, %v2992
  %v2995 = vmul.f32 %v2983, %v2993
  %s2996 = scalar_lea.vmem [#allocation3], 48
  %2997 = vst [vmem:[%s2996] sm:$0xff] %v2994
  %2998 = vst [vmem:[%s2996 + $0x8] sm:$0xff] %v2995
  %v2999 = vpack.c.bf16 %v2995, %v2994
  %s3000 = scalar_lea.vmem [#allocation2], 256
  %v3001 = vld [vmem:[%s3000] sm:$0xff]
  %v3002 = vld [vmem:[%s3000 + $0x8] sm:$0xff]
  %v3003 = vld [vmem:[%s3000 + $0x10] sm:$0xff]
  %v3004 = vld [vmem:[%s3000 + $0x18] sm:$0xff]
  %v3005 = vld [vmem:[%s3000 + $0x20] sm:$0xff]
  %v3006 = vld [vmem:[%s3000 + $0x28] sm:$0xff]
  %v3007 = vld [vmem:[%s3000 + $0x30] sm:$0xff]
  %v3008 = vld [vmem:[%s3000 + $0x38] sm:$0xff]
  %v3009 = vld [vmem:[%s2] sm:$0xff]
  %v3010 = vld [vmem:[%s2 + $0x8] sm:$0xff]
  %v3011 = vld [vmem:[%s2 + $0x10] sm:$0xff]
  %v3012 = vld [vmem:[%s2 + $0x18] sm:$0xff]
  %v3013 = vld [vmem:[%s2 + $0x20] sm:$0xff]
  %v3014 = vld [vmem:[%s2 + $0x28] sm:$0xff]
  %v3015 = vld [vmem:[%s2 + $0x30] sm:$0xff]
  %v3016 = vld [vmem:[%s2 + $0x38] sm:$0xff]
  %v3017 = vld [vmem:[%s2 + $0x40] sm:$0xff]
  %v3018 = vld [vmem:[%s2 + $0x48] sm:$0xff]
  %v3019 = vld [vmem:[%s2 + $0x50] sm:$0xff]
  %v3020 = vld [vmem:[%s2 + $0x58] sm:$0xff]
  %v3021 = vld [vmem:[%s2 + $0x60] sm:$0xff]
  %v3022 = vld [vmem:[%s2 + $0x68] sm:$0xff]
  %v3023 = vld [vmem:[%s2 + $0x70] sm:$0xff]
  %v3024 = vld [vmem:[%s2 + $0x78] sm:$0xff]
  %v3025 = vld [vmem:[%s2 + $0x80] sm:$0xff]
  %v3026 = vld [vmem:[%s2 + $0x88] sm:$0xff]
  %v3027 = vld [vmem:[%s2 + $0x90] sm:$0xff]
  %v3028 = vld [vmem:[%s2 + $0x98] sm:$0xff]
  %v3029 = vld [vmem:[%s2 + $0xa0] sm:$0xff]
  %v3030 = vld [vmem:[%s2 + $0xa8] sm:$0xff]
  %v3031 = vld [vmem:[%s2 + $0xb0] sm:$0xff]
  %v3032 = vld [vmem:[%s2 + $0xb8] sm:$0xff]
  %v3033 = vld [vmem:[%s2 + $0xc0] sm:$0xff]
  %v3034 = vld [vmem:[%s2 + $0xc8] sm:$0xff]
  %v3035 = vld [vmem:[%s2 + $0xd0] sm:$0xff]
  %v3036 = vld [vmem:[%s2 + $0xd8] sm:$0xff]
  %v3037 = vld [vmem:[%s2 + $0xe0] sm:$0xff]
  %v3038 = vld [vmem:[%s2 + $0xe8] sm:$0xff]
  %v3039 = vld [vmem:[%s2 + $0xf0] sm:$0xff]
  %v3040 = vld [vmem:[%s2 + $0xf8] sm:$0xff]
  %v3073 = vunpack.c.l.b16 %v3009
  %v3074 = vunpack.c.h.b16 %v3009
  %v3075 = vunpack.c.l.b16 %v3010
  %v3076 = vunpack.c.h.b16 %v3010
  %v3077 = vunpack.c.l.b16 %v3011
  %v3078 = vunpack.c.h.b16 %v3011
  %v3079 = vunpack.c.l.b16 %v3012
  %v3080 = vunpack.c.h.b16 %v3012
  %v3081 = vunpack.c.l.b16 %v3013
  %v3082 = vunpack.c.h.b16 %v3013
  %v3083 = vunpack.c.l.b16 %v3014
  %v3084 = vunpack.c.h.b16 %v3014
  %v3085 = vunpack.c.l.b16 %v3015
  %v3086 = vunpack.c.h.b16 %v3015
  %v3087 = vunpack.c.l.b16 %v3016
  %v3088 = vunpack.c.h.b16 %v3016
  %v3089 = vunpack.c.l.b16 %v3017
  %v3090 = vunpack.c.h.b16 %v3017
  %v3091 = vunpack.c.l.b16 %v3018
  %v3092 = vunpack.c.h.b16 %v3018
  %v3093 = vunpack.c.l.b16 %v3019
  %v3094 = vunpack.c.h.b16 %v3019
  %v3095 = vunpack.c.l.b16 %v3020
  %v3096 = vunpack.c.h.b16 %v3020
  %v3097 = vunpack.c.l.b16 %v3021
  %v3098 = vunpack.c.h.b16 %v3021
  %v3099 = vunpack.c.l.b16 %v3022
  %v3100 = vunpack.c.h.b16 %v3022
  %v3101 = vunpack.c.l.b16 %v3023
  %v3102 = vunpack.c.h.b16 %v3023
  %v3103 = vunpack.c.l.b16 %v3024
  %v3104 = vunpack.c.h.b16 %v3024
  %v3105 = vunpack.c.l.b16 %v3025
  %v3106 = vunpack.c.h.b16 %v3025
  %v3107 = vunpack.c.l.b16 %v3026
  %v3108 = vunpack.c.h.b16 %v3026
  %v3109 = vunpack.c.l.b16 %v3027
  %v3110 = vunpack.c.h.b16 %v3027
  %v3111 = vunpack.c.l.b16 %v3028
  %v3112 = vunpack.c.h.b16 %v3028
  %v3113 = vunpack.c.l.b16 %v3029
  %v3114 = vunpack.c.h.b16 %v3029
  %v3115 = vunpack.c.l.b16 %v3030
  %v3116 = vunpack.c.h.b16 %v3030
  %v3117 = vunpack.c.l.b16 %v3031
  %v3118 = vunpack.c.h.b16 %v3031
  %v3119 = vunpack.c.l.b16 %v3032
  %v3120 = vunpack.c.h.b16 %v3032
  %v3121 = vunpack.c.l.b16 %v3033
  %v3122 = vunpack.c.h.b16 %v3033
  %v3123 = vunpack.c.l.b16 %v3034
  %v3124 = vunpack.c.h.b16 %v3034
  %v3125 = vunpack.c.l.b16 %v3035
  %v3126 = vunpack.c.h.b16 %v3035
  %v3127 = vunpack.c.l.b16 %v3036
  %v3128 = vunpack.c.h.b16 %v3036
  %v3129 = vunpack.c.l.b16 %v3037
  %v3130 = vunpack.c.h.b16 %v3037
  %v3131 = vunpack.c.l.b16 %v3038
  %v3132 = vunpack.c.h.b16 %v3038
  %v3133 = vunpack.c.l.b16 %v3039
  %v3134 = vunpack.c.h.b16 %v3039
  %v3135 = vunpack.c.l.b16 %v3040
  %v3136 = vunpack.c.h.b16 %v3040
  %v3137 = vpack.c.b16 %v3077, %v3073
  %v3138 = vpack.c.b16 %v3078, %v3074
  %v3139 = vpack.c.b16 %v3079, %v3075
  %v3140 = vpack.c.b16 %v3080, %v3076
  %v3141 = vpack.c.b16 %v3085, %v3081
  %v3142 = vpack.c.b16 %v3086, %v3082
  %v3143 = vpack.c.b16 %v3087, %v3083
  %v3144 = vpack.c.b16 %v3088, %v3084
  %v3145 = vpack.c.b16 %v3093, %v3089
  %v3146 = vpack.c.b16 %v3094, %v3090
  %v3147 = vpack.c.b16 %v3095, %v3091
  %v3148 = vpack.c.b16 %v3096, %v3092
  %v3149 = vpack.c.b16 %v3101, %v3097
  %v3150 = vpack.c.b16 %v3102, %v3098
  %v3151 = vpack.c.b16 %v3103, %v3099
  %v3152 = vpack.c.b16 %v3104, %v3100
  %v3153 = vpack.c.b16 %v3109, %v3105
  %v3154 = vpack.c.b16 %v3110, %v3106
  %v3155 = vpack.c.b16 %v3111, %v3107
  %v3156 = vpack.c.b16 %v3112, %v3108
  %v3157 = vpack.c.b16 %v3117, %v3113
  %v3158 = vpack.c.b16 %v3118, %v3114
  %v3159 = vpack.c.b16 %v3119, %v3115
  %v3160 = vpack.c.b16 %v3120, %v3116
  %v3161 = vpack.c.b16 %v3125, %v3121
  %v3162 = vpack.c.b16 %v3126, %v3122
  %v3163 = vpack.c.b16 %v3127, %v3123
  %v3164 = vpack.c.b16 %v3128, %v3124
  %v3165 = vpack.c.b16 %v3133, %v3129
  %v3166 = vpack.c.b16 %v3134, %v3130
  %v3167 = vpack.c.b16 %v3135, %v3131
  %v3168 = vpack.c.b16 %v3136, %v3132
  %3201 = vmatpush.bf16.msra.mxu0 %v3165
  %3202 = vmatpush.bf16.msra.mxu0 %v3161
  %3203 = vmatpush.bf16.msra.mxu0 %v3157
  %3204 = vmatpush.bf16.msra.mxu0 %v3153
  %3205 = vmatpush.bf16.msra.mxu0 %v3149
  %3206 = vmatpush.bf16.msra.mxu0 %v3145
  %3207 = vmatpush.bf16.msra.mxu0 %v3141
  %3208 = vmatpush.bf16.msra.mxu0 %v3137
  %3209 = vmatmul.bf16.gmra.mxu0 %v2999
  %v3210 = vpop.f32.mrf.mxu0
  %v3211 = vadd.f32 0.0, %v3210
  %v3212 = vpop.f32.mrf.mxu0
  %v3213 = vadd.f32 0.0, %v3212
  %3214 = vdwg.mxu0
  %3215 = vmatpush.bf16.msra.mxu0 %v3166
  %3216 = vmatpush.bf16.msra.mxu0 %v3162
  %3217 = vmatpush.bf16.msra.mxu0 %v3158
  %3218 = vmatpush.bf16.msra.mxu0 %v3154
  %3219 = vmatpush.bf16.msra.mxu0 %v3150
  %3220 = vmatpush.bf16.msra.mxu0 %v3146
  %3221 = vmatpush.bf16.msra.mxu0 %v3142
  %3222 = vmatpush.bf16.msra.mxu0 %v3138
  %3223 = vmatmul.bf16.gmra.mxu0 %v2999
  %v3224 = vpop.f32.mrf.mxu0
  %v3225 = vadd.f32 0.0, %v3224
  %v3226 = vpop.f32.mrf.mxu0
  %v3227 = vadd.f32 0.0, %v3226
  %3228 = vdwg.mxu0
  %3229 = vmatpush.bf16.msra.mxu0 %v3167
  %3230 = vmatpush.bf16.msra.mxu0 %v3163
  %3231 = vmatpush.bf16.msra.mxu0 %v3159
  %3232 = vmatpush.bf16.msra.mxu0 %v3155
  %3233 = vmatpush.bf16.msra.mxu0 %v3151
  %3234 = vmatpush.bf16.msra.mxu0 %v3147
  %3235 = vmatpush.bf16.msra.mxu0 %v3143
  %3236 = vmatpush.bf16.msra.mxu0 %v3139
  %3237 = vmatmul.bf16.gmra.mxu0 %v2999
  %v3238 = vpop.f32.mrf.mxu0
  %v3239 = vadd.f32 0.0, %v3238
  %v3240 = vpop.f32.mrf.mxu0
  %v3241 = vadd.f32 0.0, %v3240
  %3242 = vdwg.mxu0
  %3243 = vmatpush.bf16.msra.mxu0 %v3168
  %3244 = vmatpush.bf16.msra.mxu0 %v3164
  %3245 = vmatpush.bf16.msra.mxu0 %v3160
  %3246 = vmatpush.bf16.msra.mxu0 %v3156
  %3247 = vmatpush.bf16.msra.mxu0 %v3152
  %3248 = vmatpush.bf16.msra.mxu0 %v3148
  %3249 = vmatpush.bf16.msra.mxu0 %v3144
  %3250 = vmatpush.bf16.msra.mxu0 %v3140
  %3251 = vmatmul.bf16.gmra.mxu0 %v2999
  %v3252 = vpop.f32.mrf.mxu0
  %v3253 = vadd.f32 0.0, %v3252
  %v3254 = vpop.f32.mrf.mxu0
  %v3255 = vadd.f32 0.0, %v3254
  %3256 = vdwg.mxu0
  %v3257 = vadd.f32 %v3001, %v3211
  %v3258 = vadd.f32 %v3002, %v3225
  %v3259 = vadd.f32 %v3003, %v3239
  %v3260 = vadd.f32 %v3004, %v3253
  %v3261 = vadd.f32 %v3005, %v3213
  %v3262 = vadd.f32 %v3006, %v3227
  %v3263 = vadd.f32 %v3007, %v3241
  %v3264 = vadd.f32 %v3008, %v3255
  %v3265 = vxor.u32 %v3257, 2147483648
  %v3266 = vxor.u32 %v3258, 2147483648
  %v3267 = vxor.u32 %v3259, 2147483648
  %v3268 = vxor.u32 %v3261, 2147483648
  %v3269 = vxor.u32 %v3262, 2147483648
  %v3270 = vxor.u32 %v3263, 2147483648
  %v3271 = vmul.f32 %v3265, 1.442695
  %v3272 = vpow.pop %v3271
  %v3273 = vmul.f32 %v3266, 1.442695
  %v3274 = vpow.pop %v3273
  %v3275 = vmul.f32 %v3267, 1.442695
  %v3276 = vpow.pop %v3275
  %v3277 = vmul.f32 %v3268, 1.442695
  %v3278 = vpow.pop %v3277
  %v3279 = vmul.f32 %v3269, 1.442695
  %v3280 = vpow.pop %v3279
  %v3281 = vmul.f32 %v3270, 1.442695
  %v3282 = vpow.pop %v3281
  %v3283 = vadd.f32 %v3272, 1.0
  %v3284 = vadd.f32 %v3274, 1.0
  %v3285 = vadd.f32 %v3276, 1.0
  %v3286 = vadd.f32 %v3278, 1.0
  %v3287 = vadd.f32 %v3280, 1.0
  %v3288 = vadd.f32 %v3282, 1.0
  %v3289 = vrcp.pop %v3283
  %v3290 = vmul.f32 %v3283, %v3289
  %v3291 = vsub.f32 1.0, %v3290
  %v3292 = vmul.f32 %v3289, %v3291
  %v3293 = vadd.f32 %v3289, %v3292
  %vm3294 = vweird.f32 %v3283
  %vm3295 = vweird.f32 %v3289
  %vm3296 = vmor %vm3294, %vm3295
  %v3297 = vsel %vm3296, %v3289, %v3293
  %v3298 = vand.u32 2147483647, %v3283
  %vm3299 = vcmp.eq.f32.partialorder %v3298, 8.507059e+37
  %v3300 = vand.u32 %v3283, 2147483648
  %v3301 = vor.u32 1.1754944e-38, %v3300
  %v3302 = vsel %vm3299, %v3301, %v3297
  %v3303 = vmul.f32 1.0, %v3302
  %v3304 = vrcp.pop %v3284
  %v3305 = vmul.f32 %v3284, %v3304
  %v3306 = vsub.f32 1.0, %v3305
  %v3307 = vmul.f32 %v3304, %v3306
  %v3308 = vadd.f32 %v3304, %v3307
  %vm3309 = vweird.f32 %v3284
  %vm3310 = vweird.f32 %v3304
  %vm3311 = vmor %vm3309, %vm3310
  %v3312 = vsel %vm3311, %v3304, %v3308
  %v3313 = vand.u32 2147483647, %v3284
  %vm3314 = vcmp.eq.f32.partialorder %v3313, 8.507059e+37
  %v3315 = vand.u32 %v3284, 2147483648
  %v3316 = vor.u32 1.1754944e-38, %v3315
  %v3317 = vsel %vm3314, %v3316, %v3312
  %v3318 = vmul.f32 1.0, %v3317
  %v3319 = vrcp.pop %v3285
  %v3320 = vmul.f32 %v3285, %v3319
  %v3321 = vsub.f32 1.0, %v3320
  %v3322 = vmul.f32 %v3319, %v3321
  %v3323 = vadd.f32 %v3319, %v3322
  %vm3324 = vweird.f32 %v3285
  %vm3325 = vweird.f32 %v3319
  %vm3326 = vmor %vm3324, %vm3325
  %v3327 = vsel %vm3326, %v3319, %v3323
  %v3328 = vand.u32 2147483647, %v3285
  %vm3329 = vcmp.eq.f32.partialorder %v3328, 8.507059e+37
  %v3330 = vand.u32 %v3285, 2147483648
  %v3331 = vor.u32 1.1754944e-38, %v3330
  %v3332 = vsel %vm3329, %v3331, %v3327
  %v3333 = vmul.f32 1.0, %v3332
  %v3334 = vrcp.pop %v3286
  %v3335 = vmul.f32 %v3286, %v3334
  %v3336 = vsub.f32 1.0, %v3335
  %v3337 = vmul.f32 %v3334, %v3336
  %v3338 = vadd.f32 %v3334, %v3337
  %vm3339 = vweird.f32 %v3286
  %vm3340 = vweird.f32 %v3334
  %vm3341 = vmor %vm3339, %vm3340
  %v3342 = vsel %vm3341, %v3334, %v3338
  %v3343 = vand.u32 2147483647, %v3286
  %vm3344 = vcmp.eq.f32.partialorder %v3343, 8.507059e+37
  %v3345 = vand.u32 %v3286, 2147483648
  %v3346 = vor.u32 1.1754944e-38, %v3345
  %v3347 = vsel %vm3344, %v3346, %v3342
  %v3348 = vmul.f32 1.0, %v3347
  %v3349 = vrcp.pop %v3287
  %v3350 = vmul.f32 %v3287, %v3349
  %v3351 = vsub.f32 1.0, %v3350
  %v3352 = vmul.f32 %v3349, %v3351
  %v3353 = vadd.f32 %v3349, %v3352
  %vm3354 = vweird.f32 %v3287
  %vm3355 = vweird.f32 %v3349
  %vm3356 = vmor %vm3354, %vm3355
  %v3357 = vsel %vm3356, %v3349, %v3353
  %v3358 = vand.u32 2147483647, %v3287
  %vm3359 = vcmp.eq.f32.partialorder %v3358, 8.507059e+37
  %v3360 = vand.u32 %v3287, 2147483648
  %v3361 = vor.u32 1.1754944e-38, %v3360
  %v3362 = vsel %vm3359, %v3361, %v3357
  %v3363 = vmul.f32 1.0, %v3362
  %v3364 = vrcp.pop %v3288
  %v3365 = vmul.f32 %v3288, %v3364
  %v3366 = vsub.f32 1.0, %v3365
  %v3367 = vmul.f32 %v3364, %v3366
  %v3368 = vadd.f32 %v3364, %v3367
  %vm3369 = vweird.f32 %v3288
  %vm3370 = vweird.f32 %v3364
  %vm3371 = vmor %vm3369, %vm3370
  %v3372 = vsel %vm3371, %v3364, %v3368
  %v3373 = vand.u32 2147483647, %v3288
  %vm3374 = vcmp.eq.f32.partialorder %v3373, 8.507059e+37
  %v3375 = vand.u32 %v3288, 2147483648
  %v3376 = vor.u32 1.1754944e-38, %v3375
  %v3377 = vsel %vm3374, %v3376, %v3372
  %v3378 = vmul.f32 1.0, %v3377
  %v3379 = vtanh.pop %v3260
  %v3380 = vtanh.pop %v3264
  %v3381 = vmul.f32 %v3318, %v2990
  %v3382 = vmul.f32 %v3363, %v2991
  %v3383 = vmul.f32 %v3303, %v3379
  %v3384 = vmul.f32 %v3348, %v3380
  %v3385 = vadd.f32 %v3381, %v3383
  %v3386 = vadd.f32 %v3382, %v3384
  %v3387 = vtanh.pop %v3385
  %v3388 = vtanh.pop %v3386
  %v3389 = vmul.f32 %v3333, %v3387
  %v3390 = vmul.f32 %v3378, %v3388
  %s3391 = scalar_lea.vmem [#allocation3], 64
  %3392 = vst [vmem:[%s3391] sm:$0xff] %v3389
  %3393 = vst [vmem:[%s3391 + $0x8] sm:$0xff] %v3390
  %v3394 = vpack.c.bf16 %v3390, %v3389
  %s3395 = scalar_lea.vmem [#allocation2], 320
  %v3396 = vld [vmem:[%s3395] sm:$0xff]
  %v3397 = vld [vmem:[%s3395 + $0x8] sm:$0xff]
  %v3398 = vld [vmem:[%s3395 + $0x10] sm:$0xff]
  %v3399 = vld [vmem:[%s3395 + $0x18] sm:$0xff]
  %v3400 = vld [vmem:[%s3395 + $0x20] sm:$0xff]
  %v3401 = vld [vmem:[%s3395 + $0x28] sm:$0xff]
  %v3402 = vld [vmem:[%s3395 + $0x30] sm:$0xff]
  %v3403 = vld [vmem:[%s3395 + $0x38] sm:$0xff]
  %v3404 = vld [vmem:[%s2] sm:$0xff]
  %v3405 = vld [vmem:[%s2 + $0x8] sm:$0xff]
  %v3406 = vld [vmem:[%s2 + $0x10] sm:$0xff]
  %v3407 = vld [vmem:[%s2 + $0x18] sm:$0xff]
  %v3408 = vld [vmem:[%s2 + $0x20] sm:$0xff]
  %v3409 = vld [vmem:[%s2 + $0x28] sm:$0xff]
  %v3410 = vld [vmem:[%s2 + $0x30] sm:$0xff]
  %v3411 = vld [vmem:[%s2 + $0x38] sm:$0xff]
  %v3412 = vld [vmem:[%s2 + $0x40] sm:$0xff]
  %v3413 = vld [vmem:[%s2 + $0x48] sm:$0xff]
  %v3414 = vld [vmem:[%s2 + $0x50] sm:$0xff]
  %v3415 = vld [vmem:[%s2 + $0x58] sm:$0xff]
  %v3416 = vld [vmem:[%s2 + $0x60] sm:$0xff]
  %v3417 = vld [vmem:[%s2 + $0x68] sm:$0xff]
  %v3418 = vld [vmem:[%s2 + $0x70] sm:$0xff]
  %v3419 = vld [vmem:[%s2 + $0x78] sm:$0xff]
  %v3420 = vld [vmem:[%s2 + $0x80] sm:$0xff]
  %v3421 = vld [vmem:[%s2 + $0x88] sm:$0xff]
  %v3422 = vld [vmem:[%s2 + $0x90] sm:$0xff]
  %v3423 = vld [vmem:[%s2 + $0x98] sm:$0xff]
  %v3424 = vld [vmem:[%s2 + $0xa0] sm:$0xff]
  %v3425 = vld [vmem:[%s2 + $0xa8] sm:$0xff]
  %v3426 = vld [vmem:[%s2 + $0xb0] sm:$0xff]
  %v3427 = vld [vmem:[%s2 + $0xb8] sm:$0xff]
  %v3428 = vld [vmem:[%s2 + $0xc0] sm:$0xff]
  %v3429 = vld [vmem:[%s2 + $0xc8] sm:$0xff]
  %v3430 = vld [vmem:[%s2 + $0xd0] sm:$0xff]
  %v3431 = vld [vmem:[%s2 + $0xd8] sm:$0xff]
  %v3432 = vld [vmem:[%s2 + $0xe0] sm:$0xff]
  %v3433 = vld [vmem:[%s2 + $0xe8] sm:$0xff]
  %v3434 = vld [vmem:[%s2 + $0xf0] sm:$0xff]
  %v3435 = vld [vmem:[%s2 + $0xf8] sm:$0xff]
  %v3468 = vunpack.c.l.b16 %v3404
  %v3469 = vunpack.c.h.b16 %v3404
  %v3470 = vunpack.c.l.b16 %v3405
  %v3471 = vunpack.c.h.b16 %v3405
  %v3472 = vunpack.c.l.b16 %v3406
  %v3473 = vunpack.c.h.b16 %v3406
  %v3474 = vunpack.c.l.b16 %v3407
  %v3475 = vunpack.c.h.b16 %v3407
  %v3476 = vunpack.c.l.b16 %v3408
  %v3477 = vunpack.c.h.b16 %v3408
  %v3478 = vunpack.c.l.b16 %v3409
  %v3479 = vunpack.c.h.b16 %v3409
  %v3480 = vunpack.c.l.b16 %v3410
  %v3481 = vunpack.c.h.b16 %v3410
  %v3482 = vunpack.c.l.b16 %v3411
  %v3483 = vunpack.c.h.b16 %v3411
  %v3484 = vunpack.c.l.b16 %v3412
  %v3485 = vunpack.c.h.b16 %v3412
  %v3486 = vunpack.c.l.b16 %v3413
  %v3487 = vunpack.c.h.b16 %v3413
  %v3488 = vunpack.c.l.b16 %v3414
  %v3489 = vunpack.c.h.b16 %v3414
  %v3490 = vunpack.c.l.b16 %v3415
  %v3491 = vunpack.c.h.b16 %v3415
  %v3492 = vunpack.c.l.b16 %v3416
  %v3493 = vunpack.c.h.b16 %v3416
  %v3494 = vunpack.c.l.b16 %v3417
  %v3495 = vunpack.c.h.b16 %v3417
  %v3496 = vunpack.c.l.b16 %v3418
  %v3497 = vunpack.c.h.b16 %v3418
  %v3498 = vunpack.c.l.b16 %v3419
  %v3499 = vunpack.c.h.b16 %v3419
  %v3500 = vunpack.c.l.b16 %v3420
  %v3501 = vunpack.c.h.b16 %v3420
  %v3502 = vunpack.c.l.b16 %v3421
  %v3503 = vunpack.c.h.b16 %v3421
  %v3504 = vunpack.c.l.b16 %v3422
  %v3505 = vunpack.c.h.b16 %v3422
  %v3506 = vunpack.c.l.b16 %v3423
  %v3507 = vunpack.c.h.b16 %v3423
  %v3508 = vunpack.c.l.b16 %v3424
  %v3509 = vunpack.c.h.b16 %v3424
  %v3510 = vunpack.c.l.b16 %v3425
  %v3511 = vunpack.c.h.b16 %v3425
  %v3512 = vunpack.c.l.b16 %v3426
  %v3513 = vunpack.c.h.b16 %v3426
  %v3514 = vunpack.c.l.b16 %v3427
  %v3515 = vunpack.c.h.b16 %v3427
  %v3516 = vunpack.c.l.b16 %v3428
  %v3517 = vunpack.c.h.b16 %v3428
  %v3518 = vunpack.c.l.b16 %v3429
  %v3519 = vunpack.c.h.b16 %v3429
  %v3520 = vunpack.c.l.b16 %v3430
  %v3521 = vunpack.c.h.b16 %v3430
  %v3522 = vunpack.c.l.b16 %v3431
  %v3523 = vunpack.c.h.b16 %v3431
  %v3524 = vunpack.c.l.b16 %v3432
  %v3525 = vunpack.c.h.b16 %v3432
  %v3526 = vunpack.c.l.b16 %v3433
  %v3527 = vunpack.c.h.b16 %v3433
  %v3528 = vunpack.c.l.b16 %v3434
  %v3529 = vunpack.c.h.b16 %v3434
  %v3530 = vunpack.c.l.b16 %v3435
  %v3531 = vunpack.c.h.b16 %v3435
  %v3532 = vpack.c.b16 %v3472, %v3468
  %v3533 = vpack.c.b16 %v3473, %v3469
  %v3534 = vpack.c.b16 %v3474, %v3470
  %v3535 = vpack.c.b16 %v3475, %v3471
  %v3536 = vpack.c.b16 %v3480, %v3476
  %v3537 = vpack.c.b16 %v3481, %v3477
  %v3538 = vpack.c.b16 %v3482, %v3478
  %v3539 = vpack.c.b16 %v3483, %v3479
  %v3540 = vpack.c.b16 %v3488, %v3484
  %v3541 = vpack.c.b16 %v3489, %v3485
  %v3542 = vpack.c.b16 %v3490, %v3486
  %v3543 = vpack.c.b16 %v3491, %v3487
  %v3544 = vpack.c.b16 %v3496, %v3492
  %v3545 = vpack.c.b16 %v3497, %v3493
  %v3546 = vpack.c.b16 %v3498, %v3494
  %v3547 = vpack.c.b16 %v3499, %v3495
  %v3548 = vpack.c.b16 %v3504, %v3500
  %v3549 = vpack.c.b16 %v3505, %v3501
  %v3550 = vpack.c.b16 %v3506, %v3502
  %v3551 = vpack.c.b16 %v3507, %v3503
  %v3552 = vpack.c.b16 %v3512, %v3508
  %v3553 = vpack.c.b16 %v3513, %v3509
  %v3554 = vpack.c.b16 %v3514, %v3510
  %v3555 = vpack.c.b16 %v3515, %v3511
  %v3556 = vpack.c.b16 %v3520, %v3516
  %v3557 = vpack.c.b16 %v3521, %v3517
  %v3558 = vpack.c.b16 %v3522, %v3518
  %v3559 = vpack.c.b16 %v3523, %v3519
  %v3560 = vpack.c.b16 %v3528, %v3524
  %v3561 = vpack.c.b16 %v3529, %v3525
  %v3562 = vpack.c.b16 %v3530, %v3526
  %v3563 = vpack.c.b16 %v3531, %v3527
  %3596 = vmatpush.bf16.msra.mxu0 %v3560
  %3597 = vmatpush.bf16.msra.mxu0 %v3556
  %3598 = vmatpush.bf16.msra.mxu0 %v3552
  %3599 = vmatpush.bf16.msra.mxu0 %v3548
  %3600 = vmatpush.bf16.msra.mxu0 %v3544
  %3601 = vmatpush.bf16.msra.mxu0 %v3540
  %3602 = vmatpush.bf16.msra.mxu0 %v3536
  %3603 = vmatpush.bf16.msra.mxu0 %v3532
  %3604 = vmatmul.bf16.gmra.mxu0 %v3394
  %v3605 = vpop.f32.mrf.mxu0
  %v3606 = vadd.f32 0.0, %v3605
  %v3607 = vpop.f32.mrf.mxu0
  %v3608 = vadd.f32 0.0, %v3607
  %3609 = vdwg.mxu0
  %3610 = vmatpush.bf16.msra.mxu0 %v3561
  %3611 = vmatpush.bf16.msra.mxu0 %v3557
  %3612 = vmatpush.bf16.msra.mxu0 %v3553
  %3613 = vmatpush.bf16.msra.mxu0 %v3549
  %3614 = vmatpush.bf16.msra.mxu0 %v3545
  %3615 = vmatpush.bf16.msra.mxu0 %v3541
  %3616 = vmatpush.bf16.msra.mxu0 %v3537
  %3617 = vmatpush.bf16.msra.mxu0 %v3533
  %3618 = vmatmul.bf16.gmra.mxu0 %v3394
  %v3619 = vpop.f32.mrf.mxu0
  %v3620 = vadd.f32 0.0, %v3619
  %v3621 = vpop.f32.mrf.mxu0
  %v3622 = vadd.f32 0.0, %v3621
  %3623 = vdwg.mxu0
  %3624 = vmatpush.bf16.msra.mxu0 %v3562
  %3625 = vmatpush.bf16.msra.mxu0 %v3558
  %3626 = vmatpush.bf16.msra.mxu0 %v3554
  %3627 = vmatpush.bf16.msra.mxu0 %v3550
  %3628 = vmatpush.bf16.msra.mxu0 %v3546
  %3629 = vmatpush.bf16.msra.mxu0 %v3542
  %3630 = vmatpush.bf16.msra.mxu0 %v3538
  %3631 = vmatpush.bf16.msra.mxu0 %v3534
  %3632 = vmatmul.bf16.gmra.mxu0 %v3394
  %v3633 = vpop.f32.mrf.mxu0
  %v3634 = vadd.f32 0.0, %v3633
  %v3635 = vpop.f32.mrf.mxu0
  %v3636 = vadd.f32 0.0, %v3635
  %3637 = vdwg.mxu0
  %3638 = vmatpush.bf16.msra.mxu0 %v3563
  %3639 = vmatpush.bf16.msra.mxu0 %v3559
  %3640 = vmatpush.bf16.msra.mxu0 %v3555
  %3641 = vmatpush.bf16.msra.mxu0 %v3551
  %3642 = vmatpush.bf16.msra.mxu0 %v3547
  %3643 = vmatpush.bf16.msra.mxu0 %v3543
  %3644 = vmatpush.bf16.msra.mxu0 %v3539
  %3645 = vmatpush.bf16.msra.mxu0 %v3535
  %3646 = vmatmul.bf16.gmra.mxu0 %v3394
  %v3647 = vpop.f32.mrf.mxu0
  %v3648 = vadd.f32 0.0, %v3647
  %v3649 = vpop.f32.mrf.mxu0
  %v3650 = vadd.f32 0.0, %v3649
  %3651 = vdwg.mxu0
  %v3652 = vadd.f32 %v3396, %v3606
  %v3653 = vadd.f32 %v3397, %v3620
  %v3654 = vadd.f32 %v3398, %v3634
  %v3655 = vadd.f32 %v3399, %v3648
  %v3656 = vadd.f32 %v3400, %v3608
  %v3657 = vadd.f32 %v3401, %v3622
  %v3658 = vadd.f32 %v3402, %v3636
  %v3659 = vadd.f32 %v3403, %v3650
  %v3660 = vxor.u32 %v3652, 2147483648
  %v3661 = vxor.u32 %v3653, 2147483648
  %v3662 = vxor.u32 %v3654, 2147483648
  %v3663 = vxor.u32 %v3656, 2147483648
  %v3664 = vxor.u32 %v3657, 2147483648
  %v3665 = vxor.u32 %v3658, 2147483648
  %v3666 = vmul.f32 %v3660, 1.442695
  %v3667 = vpow.pop %v3666
  %v3668 = vmul.f32 %v3661, 1.442695
  %v3669 = vpow.pop %v3668
  %v3670 = vmul.f32 %v3662, 1.442695
  %v3671 = vpow.pop %v3670
  %v3672 = vmul.f32 %v3663, 1.442695
  %v3673 = vpow.pop %v3672
  %v3674 = vmul.f32 %v3664, 1.442695
  %v3675 = vpow.pop %v3674
  %v3676 = vmul.f32 %v3665, 1.442695
  %v3677 = vpow.pop %v3676
  %v3678 = vadd.f32 %v3667, 1.0
  %v3679 = vadd.f32 %v3669, 1.0
  %v3680 = vadd.f32 %v3671, 1.0
  %v3681 = vadd.f32 %v3673, 1.0
  %v3682 = vadd.f32 %v3675, 1.0
  %v3683 = vadd.f32 %v3677, 1.0
  %v3684 = vrcp.pop %v3678
  %v3685 = vmul.f32 %v3678, %v3684
  %v3686 = vsub.f32 1.0, %v3685
  %v3687 = vmul.f32 %v3684, %v3686
  %v3688 = vadd.f32 %v3684, %v3687
  %vm3689 = vweird.f32 %v3678
  %vm3690 = vweird.f32 %v3684
  %vm3691 = vmor %vm3689, %vm3690
  %v3692 = vsel %vm3691, %v3684, %v3688
  %v3693 = vand.u32 2147483647, %v3678
  %vm3694 = vcmp.eq.f32.partialorder %v3693, 8.507059e+37
  %v3695 = vand.u32 %v3678, 2147483648
  %v3696 = vor.u32 1.1754944e-38, %v3695
  %v3697 = vsel %vm3694, %v3696, %v3692
  %v3698 = vmul.f32 1.0, %v3697
  %v3699 = vrcp.pop %v3679
  %v3700 = vmul.f32 %v3679, %v3699
  %v3701 = vsub.f32 1.0, %v3700
  %v3702 = vmul.f32 %v3699, %v3701
  %v3703 = vadd.f32 %v3699, %v3702
  %vm3704 = vweird.f32 %v3679
  %vm3705 = vweird.f32 %v3699
  %vm3706 = vmor %vm3704, %vm3705
  %v3707 = vsel %vm3706, %v3699, %v3703
  %v3708 = vand.u32 2147483647, %v3679
  %vm3709 = vcmp.eq.f32.partialorder %v3708, 8.507059e+37
  %v3710 = vand.u32 %v3679, 2147483648
  %v3711 = vor.u32 1.1754944e-38, %v3710
  %v3712 = vsel %vm3709, %v3711, %v3707
  %v3713 = vmul.f32 1.0, %v3712
  %v3714 = vrcp.pop %v3680
  %v3715 = vmul.f32 %v3680, %v3714
  %v3716 = vsub.f32 1.0, %v3715
  %v3717 = vmul.f32 %v3714, %v3716
  %v3718 = vadd.f32 %v3714, %v3717
  %vm3719 = vweird.f32 %v3680
  %vm3720 = vweird.f32 %v3714
  %vm3721 = vmor %vm3719, %vm3720
  %v3722 = vsel %vm3721, %v3714, %v3718
  %v3723 = vand.u32 2147483647, %v3680
  %vm3724 = vcmp.eq.f32.partialorder %v3723, 8.507059e+37
  %v3725 = vand.u32 %v3680, 2147483648
  %v3726 = vor.u32 1.1754944e-38, %v3725
  %v3727 = vsel %vm3724, %v3726, %v3722
  %v3728 = vmul.f32 1.0, %v3727
  %v3729 = vrcp.pop %v3681
  %v3730 = vmul.f32 %v3681, %v3729
  %v3731 = vsub.f32 1.0, %v3730
  %v3732 = vmul.f32 %v3729, %v3731
  %v3733 = vadd.f32 %v3729, %v3732
  %vm3734 = vweird.f32 %v3681
  %vm3735 = vweird.f32 %v3729
  %vm3736 = vmor %vm3734, %vm3735
  %v3737 = vsel %vm3736, %v3729, %v3733
  %v3738 = vand.u32 2147483647, %v3681
  %vm3739 = vcmp.eq.f32.partialorder %v3738, 8.507059e+37
  %v3740 = vand.u32 %v3681, 2147483648
  %v3741 = vor.u32 1.1754944e-38, %v3740
  %v3742 = vsel %vm3739, %v3741, %v3737
  %v3743 = vmul.f32 1.0, %v3742
  %v3744 = vrcp.pop %v3682
  %v3745 = vmul.f32 %v3682, %v3744
  %v3746 = vsub.f32 1.0, %v3745
  %v3747 = vmul.f32 %v3744, %v3746
  %v3748 = vadd.f32 %v3744, %v3747
  %vm3749 = vweird.f32 %v3682
  %vm3750 = vweird.f32 %v3744
  %vm3751 = vmor %vm3749, %vm3750
  %v3752 = vsel %vm3751, %v3744, %v3748
  %v3753 = vand.u32 2147483647, %v3682
  %vm3754 = vcmp.eq.f32.partialorder %v3753, 8.507059e+37
  %v3755 = vand.u32 %v3682, 2147483648
  %v3756 = vor.u32 1.1754944e-38, %v3755
  %v3757 = vsel %vm3754, %v3756, %v3752
  %v3758 = vmul.f32 1.0, %v3757
  %v3759 = vrcp.pop %v3683
  %v3760 = vmul.f32 %v3683, %v3759
  %v3761 = vsub.f32 1.0, %v3760
  %v3762 = vmul.f32 %v3759, %v3761
  %v3763 = vadd.f32 %v3759, %v3762
  %vm3764 = vweird.f32 %v3683
  %vm3765 = vweird.f32 %v3759
  %vm3766 = vmor %vm3764, %vm3765
  %v3767 = vsel %vm3766, %v3759, %v3763
  %v3768 = vand.u32 2147483647, %v3683
  %vm3769 = vcmp.eq.f32.partialorder %v3768, 8.507059e+37
  %v3770 = vand.u32 %v3683, 2147483648
  %v3771 = vor.u32 1.1754944e-38, %v3770
  %v3772 = vsel %vm3769, %v3771, %v3767
  %v3773 = vmul.f32 1.0, %v3772
  %v3774 = vtanh.pop %v3655
  %v3775 = vtanh.pop %v3659
  %v3776 = vmul.f32 %v3713, %v3385
  %v3777 = vmul.f32 %v3758, %v3386
  %v3778 = vmul.f32 %v3698, %v3774
  %v3779 = vmul.f32 %v3743, %v3775
  %v3780 = vadd.f32 %v3776, %v3778
  %v3781 = vadd.f32 %v3777, %v3779
  %v3782 = vtanh.pop %v3780
  %v3783 = vtanh.pop %v3781
  %v3784 = vmul.f32 %v3728, %v3782
  %v3785 = vmul.f32 %v3773, %v3783
  %s3786 = scalar_lea.vmem [#allocation3], 80
  %3787 = vst [vmem:[%s3786] sm:$0xff] %v3784
  %3788 = vst [vmem:[%s3786 + $0x8] sm:$0xff] %v3785
  %v3789 = vpack.c.bf16 %v3785, %v3784
  %s3790 = scalar_lea.vmem [#allocation2], 384
  %v3791 = vld [vmem:[%s3790] sm:$0xff]
  %v3792 = vld [vmem:[%s3790 + $0x8] sm:$0xff]
  %v3793 = vld [vmem:[%s3790 + $0x10] sm:$0xff]
  %v3794 = vld [vmem:[%s3790 + $0x18] sm:$0xff]
  %v3795 = vld [vmem:[%s3790 + $0x20] sm:$0xff]
  %v3796 = vld [vmem:[%s3790 + $0x28] sm:$0xff]
  %v3797 = vld [vmem:[%s3790 + $0x30] sm:$0xff]
  %v3798 = vld [vmem:[%s3790 + $0x38] sm:$0xff]
  %v3799 = vld [vmem:[%s2] sm:$0xff]
  %v3800 = vld [vmem:[%s2 + $0x8] sm:$0xff]
  %v3801 = vld [vmem:[%s2 + $0x10] sm:$0xff]
  %v3802 = vld [vmem:[%s2 + $0x18] sm:$0xff]
  %v3803 = vld [vmem:[%s2 + $0x20] sm:$0xff]
  %v3804 = vld [vmem:[%s2 + $0x28] sm:$0xff]
  %v3805 = vld [vmem:[%s2 + $0x30] sm:$0xff]
  %v3806 = vld [vmem:[%s2 + $0x38] sm:$0xff]
  %v3807 = vld [vmem:[%s2 + $0x40] sm:$0xff]
  %v3808 = vld [vmem:[%s2 + $0x48] sm:$0xff]
  %v3809 = vld [vmem:[%s2 + $0x50] sm:$0xff]
  %v3810 = vld [vmem:[%s2 + $0x58] sm:$0xff]
  %v3811 = vld [vmem:[%s2 + $0x60] sm:$0xff]
  %v3812 = vld [vmem:[%s2 + $0x68] sm:$0xff]
  %v3813 = vld [vmem:[%s2 + $0x70] sm:$0xff]
  %v3814 = vld [vmem:[%s2 + $0x78] sm:$0xff]
  %v3815 = vld [vmem:[%s2 + $0x80] sm:$0xff]
  %v3816 = vld [vmem:[%s2 + $0x88] sm:$0xff]
  %v3817 = vld [vmem:[%s2 + $0x90] sm:$0xff]
  %v3818 = vld [vmem:[%s2 + $0x98] sm:$0xff]
  %v3819 = vld [vmem:[%s2 + $0xa0] sm:$0xff]
  %v3820 = vld [vmem:[%s2 + $0xa8] sm:$0xff]
  %v3821 = vld [vmem:[%s2 + $0xb0] sm:$0xff]
  %v3822 = vld [vmem:[%s2 + $0xb8] sm:$0xff]
  %v3823 = vld [vmem:[%s2 + $0xc0] sm:$0xff]
  %v3824 = vld [vmem:[%s2 + $0xc8] sm:$0xff]
  %v3825 = vld [vmem:[%s2 + $0xd0] sm:$0xff]
  %v3826 = vld [vmem:[%s2 + $0xd8] sm:$0xff]
  %v3827 = vld [vmem:[%s2 + $0xe0] sm:$0xff]
  %v3828 = vld [vmem:[%s2 + $0xe8] sm:$0xff]
  %v3829 = vld [vmem:[%s2 + $0xf0] sm:$0xff]
  %v3830 = vld [vmem:[%s2 + $0xf8] sm:$0xff]
  %v3863 = vunpack.c.l.b16 %v3799
  %v3864 = vunpack.c.h.b16 %v3799
  %v3865 = vunpack.c.l.b16 %v3800
  %v3866 = vunpack.c.h.b16 %v3800
  %v3867 = vunpack.c.l.b16 %v3801
  %v3868 = vunpack.c.h.b16 %v3801
  %v3869 = vunpack.c.l.b16 %v3802
  %v3870 = vunpack.c.h.b16 %v3802
  %v3871 = vunpack.c.l.b16 %v3803
  %v3872 = vunpack.c.h.b16 %v3803
  %v3873 = vunpack.c.l.b16 %v3804
  %v3874 = vunpack.c.h.b16 %v3804
  %v3875 = vunpack.c.l.b16 %v3805
  %v3876 = vunpack.c.h.b16 %v3805
  %v3877 = vunpack.c.l.b16 %v3806
  %v3878 = vunpack.c.h.b16 %v3806
  %v3879 = vunpack.c.l.b16 %v3807
  %v3880 = vunpack.c.h.b16 %v3807
  %v3881 = vunpack.c.l.b16 %v3808
  %v3882 = vunpack.c.h.b16 %v3808
  %v3883 = vunpack.c.l.b16 %v3809
  %v3884 = vunpack.c.h.b16 %v3809
  %v3885 = vunpack.c.l.b16 %v3810
  %v3886 = vunpack.c.h.b16 %v3810
  %v3887 = vunpack.c.l.b16 %v3811
  %v3888 = vunpack.c.h.b16 %v3811
  %v3889 = vunpack.c.l.b16 %v3812
  %v3890 = vunpack.c.h.b16 %v3812
  %v3891 = vunpack.c.l.b16 %v3813
  %v3892 = vunpack.c.h.b16 %v3813
  %v3893 = vunpack.c.l.b16 %v3814
  %v3894 = vunpack.c.h.b16 %v3814
  %v3895 = vunpack.c.l.b16 %v3815
  %v3896 = vunpack.c.h.b16 %v3815
  %v3897 = vunpack.c.l.b16 %v3816
  %v3898 = vunpack.c.h.b16 %v3816
  %v3899 = vunpack.c.l.b16 %v3817
  %v3900 = vunpack.c.h.b16 %v3817
  %v3901 = vunpack.c.l.b16 %v3818
  %v3902 = vunpack.c.h.b16 %v3818
  %v3903 = vunpack.c.l.b16 %v3819
  %v3904 = vunpack.c.h.b16 %v3819
  %v3905 = vunpack.c.l.b16 %v3820
  %v3906 = vunpack.c.h.b16 %v3820
  %v3907 = vunpack.c.l.b16 %v3821
  %v3908 = vunpack.c.h.b16 %v3821
  %v3909 = vunpack.c.l.b16 %v3822
  %v3910 = vunpack.c.h.b16 %v3822
  %v3911 = vunpack.c.l.b16 %v3823
  %v3912 = vunpack.c.h.b16 %v3823
  %v3913 = vunpack.c.l.b16 %v3824
  %v3914 = vunpack.c.h.b16 %v3824
  %v3915 = vunpack.c.l.b16 %v3825
  %v3916 = vunpack.c.h.b16 %v3825
  %v3917 = vunpack.c.l.b16 %v3826
  %v3918 = vunpack.c.h.b16 %v3826
  %v3919 = vunpack.c.l.b16 %v3827
  %v3920 = vunpack.c.h.b16 %v3827
  %v3921 = vunpack.c.l.b16 %v3828
  %v3922 = vunpack.c.h.b16 %v3828
  %v3923 = vunpack.c.l.b16 %v3829
  %v3924 = vunpack.c.h.b16 %v3829
  %v3925 = vunpack.c.l.b16 %v3830
  %v3926 = vunpack.c.h.b16 %v3830
  %v3927 = vpack.c.b16 %v3867, %v3863
  %v3928 = vpack.c.b16 %v3868, %v3864
  %v3929 = vpack.c.b16 %v3869, %v3865
  %v3930 = vpack.c.b16 %v3870, %v3866
  %v3931 = vpack.c.b16 %v3875, %v3871
  %v3932 = vpack.c.b16 %v3876, %v3872
  %v3933 = vpack.c.b16 %v3877, %v3873
  %v3934 = vpack.c.b16 %v3878, %v3874
  %v3935 = vpack.c.b16 %v3883, %v3879
  %v3936 = vpack.c.b16 %v3884, %v3880
  %v3937 = vpack.c.b16 %v3885, %v3881
  %v3938 = vpack.c.b16 %v3886, %v3882
  %v3939 = vpack.c.b16 %v3891, %v3887
  %v3940 = vpack.c.b16 %v3892, %v3888
  %v3941 = vpack.c.b16 %v3893, %v3889
  %v3942 = vpack.c.b16 %v3894, %v3890
  %v3943 = vpack.c.b16 %v3899, %v3895
  %v3944 = vpack.c.b16 %v3900, %v3896
  %v3945 = vpack.c.b16 %v3901, %v3897
  %v3946 = vpack.c.b16 %v3902, %v3898
  %v3947 = vpack.c.b16 %v3907, %v3903
  %v3948 = vpack.c.b16 %v3908, %v3904
  %v3949 = vpack.c.b16 %v3909, %v3905
  %v3950 = vpack.c.b16 %v3910, %v3906
  %v3951 = vpack.c.b16 %v3915, %v3911
  %v3952 = vpack.c.b16 %v3916, %v3912
  %v3953 = vpack.c.b16 %v3917, %v3913
  %v3954 = vpack.c.b16 %v3918, %v3914
  %v3955 = vpack.c.b16 %v3923, %v3919
  %v3956 = vpack.c.b16 %v3924, %v3920
  %v3957 = vpack.c.b16 %v3925, %v3921
  %v3958 = vpack.c.b16 %v3926, %v3922
  %3991 = vmatpush.bf16.msra.mxu0 %v3955
  %3992 = vmatpush.bf16.msra.mxu0 %v3951
  %3993 = vmatpush.bf16.msra.mxu0 %v3947
  %3994 = vmatpush.bf16.msra.mxu0 %v3943
  %3995 = vmatpush.bf16.msra.mxu0 %v3939
  %3996 = vmatpush.bf16.msra.mxu0 %v3935
  %3997 = vmatpush.bf16.msra.mxu0 %v3931
  %3998 = vmatpush.bf16.msra.mxu0 %v3927
  %3999 = vmatmul.bf16.gmra.mxu0 %v3789
  %v4000 = vpop.f32.mrf.mxu0
  %v4001 = vadd.f32 0.0, %v4000
  %v4002 = vpop.f32.mrf.mxu0
  %v4003 = vadd.f32 0.0, %v4002
  %4004 = vdwg.mxu0
  %4005 = vmatpush.bf16.msra.mxu0 %v3956
  %4006 = vmatpush.bf16.msra.mxu0 %v3952
  %4007 = vmatpush.bf16.msra.mxu0 %v3948
  %4008 = vmatpush.bf16.msra.mxu0 %v3944
  %4009 = vmatpush.bf16.msra.mxu0 %v3940
  %4010 = vmatpush.bf16.msra.mxu0 %v3936
  %4011 = vmatpush.bf16.msra.mxu0 %v3932
  %4012 = vmatpush.bf16.msra.mxu0 %v3928
  %4013 = vmatmul.bf16.gmra.mxu0 %v3789
  %v4014 = vpop.f32.mrf.mxu0
  %v4015 = vadd.f32 0.0, %v4014
  %v4016 = vpop.f32.mrf.mxu0
  %v4017 = vadd.f32 0.0, %v4016
  %4018 = vdwg.mxu0
  %4019 = vmatpush.bf16.msra.mxu0 %v3957
  %4020 = vmatpush.bf16.msra.mxu0 %v3953
  %4021 = vmatpush.bf16.msra.mxu0 %v3949
  %4022 = vmatpush.bf16.msra.mxu0 %v3945
  %4023 = vmatpush.bf16.msra.mxu0 %v3941
  %4024 = vmatpush.bf16.msra.mxu0 %v3937
  %4025 = vmatpush.bf16.msra.mxu0 %v3933
  %4026 = vmatpush.bf16.msra.mxu0 %v3929
  %4027 = vmatmul.bf16.gmra.mxu0 %v3789
  %v4028 = vpop.f32.mrf.mxu0
  %v4029 = vadd.f32 0.0, %v4028
  %v4030 = vpop.f32.mrf.mxu0
  %v4031 = vadd.f32 0.0, %v4030
  %4032 = vdwg.mxu0
  %4033 = vmatpush.bf16.msra.mxu0 %v3958
  %4034 = vmatpush.bf16.msra.mxu0 %v3954
  %4035 = vmatpush.bf16.msra.mxu0 %v3950
  %4036 = vmatpush.bf16.msra.mxu0 %v3946
  %4037 = vmatpush.bf16.msra.mxu0 %v3942
  %4038 = vmatpush.bf16.msra.mxu0 %v3938
  %4039 = vmatpush.bf16.msra.mxu0 %v3934
  %4040 = vmatpush.bf16.msra.mxu0 %v3930
  %4041 = vmatmul.bf16.gmra.mxu0 %v3789
  %v4042 = vpop.f32.mrf.mxu0
  %v4043 = vadd.f32 0.0, %v4042
  %v4044 = vpop.f32.mrf.mxu0
  %v4045 = vadd.f32 0.0, %v4044
  %4046 = vdwg.mxu0
  %v4047 = vadd.f32 %v3791, %v4001
  %v4048 = vadd.f32 %v3792, %v4015
  %v4049 = vadd.f32 %v3793, %v4029
  %v4050 = vadd.f32 %v3794, %v4043
  %v4051 = vadd.f32 %v3795, %v4003
  %v4052 = vadd.f32 %v3796, %v4017
  %v4053 = vadd.f32 %v3797, %v4031
  %v4054 = vadd.f32 %v3798, %v4045
  %v4055 = vxor.u32 %v4047, 2147483648
  %v4056 = vxor.u32 %v4048, 2147483648
  %v4057 = vxor.u32 %v4049, 2147483648
  %v4058 = vxor.u32 %v4051, 2147483648
  %v4059 = vxor.u32 %v4052, 2147483648
  %v4060 = vxor.u32 %v4053, 2147483648
  %v4061 = vmul.f32 %v4055, 1.442695
  %v4062 = vpow.pop %v4061
  %v4063 = vmul.f32 %v4056, 1.442695
  %v4064 = vpow.pop %v4063
  %v4065 = vmul.f32 %v4057, 1.442695
  %v4066 = vpow.pop %v4065
  %v4067 = vmul.f32 %v4058, 1.442695
  %v4068 = vpow.pop %v4067
  %v4069 = vmul.f32 %v4059, 1.442695
  %v4070 = vpow.pop %v4069
  %v4071 = vmul.f32 %v4060, 1.442695
  %v4072 = vpow.pop %v4071
  %v4073 = vadd.f32 %v4062, 1.0
  %v4074 = vadd.f32 %v4064, 1.0
  %v4075 = vadd.f32 %v4066, 1.0
  %v4076 = vadd.f32 %v4068, 1.0
  %v4077 = vadd.f32 %v4070, 1.0
  %v4078 = vadd.f32 %v4072, 1.0
  %v4079 = vrcp.pop %v4073
  %v4080 = vmul.f32 %v4073, %v4079
  %v4081 = vsub.f32 1.0, %v4080
  %v4082 = vmul.f32 %v4079, %v4081
  %v4083 = vadd.f32 %v4079, %v4082
  %vm4084 = vweird.f32 %v4073
  %vm4085 = vweird.f32 %v4079
  %vm4086 = vmor %vm4084, %vm4085
  %v4087 = vsel %vm4086, %v4079, %v4083
  %v4088 = vand.u32 2147483647, %v4073
  %vm4089 = vcmp.eq.f32.partialorder %v4088, 8.507059e+37
  %v4090 = vand.u32 %v4073, 2147483648
  %v4091 = vor.u32 1.1754944e-38, %v4090
  %v4092 = vsel %vm4089, %v4091, %v4087
  %v4093 = vmul.f32 1.0, %v4092
  %v4094 = vrcp.pop %v4074
  %v4095 = vmul.f32 %v4074, %v4094
  %v4096 = vsub.f32 1.0, %v4095
  %v4097 = vmul.f32 %v4094, %v4096
  %v4098 = vadd.f32 %v4094, %v4097
  %vm4099 = vweird.f32 %v4074
  %vm4100 = vweird.f32 %v4094
  %vm4101 = vmor %vm4099, %vm4100
  %v4102 = vsel %vm4101, %v4094, %v4098
  %v4103 = vand.u32 2147483647, %v4074
  %vm4104 = vcmp.eq.f32.partialorder %v4103, 8.507059e+37
  %v4105 = vand.u32 %v4074, 2147483648
  %v4106 = vor.u32 1.1754944e-38, %v4105
  %v4107 = vsel %vm4104, %v4106, %v4102
  %v4108 = vmul.f32 1.0, %v4107
  %v4109 = vrcp.pop %v4075
  %v4110 = vmul.f32 %v4075, %v4109
  %v4111 = vsub.f32 1.0, %v4110
  %v4112 = vmul.f32 %v4109, %v4111
  %v4113 = vadd.f32 %v4109, %v4112
  %vm4114 = vweird.f32 %v4075
  %vm4115 = vweird.f32 %v4109
  %vm4116 = vmor %vm4114, %vm4115
  %v4117 = vsel %vm4116, %v4109, %v4113
  %v4118 = vand.u32 2147483647, %v4075
  %vm4119 = vcmp.eq.f32.partialorder %v4118, 8.507059e+37
  %v4120 = vand.u32 %v4075, 2147483648
  %v4121 = vor.u32 1.1754944e-38, %v4120
  %v4122 = vsel %vm4119, %v4121, %v4117
  %v4123 = vmul.f32 1.0, %v4122
  %v4124 = vrcp.pop %v4076
  %v4125 = vmul.f32 %v4076, %v4124
  %v4126 = vsub.f32 1.0, %v4125
  %v4127 = vmul.f32 %v4124, %v4126
  %v4128 = vadd.f32 %v4124, %v4127
  %vm4129 = vweird.f32 %v4076
  %vm4130 = vweird.f32 %v4124
  %vm4131 = vmor %vm4129, %vm4130
  %v4132 = vsel %vm4131, %v4124, %v4128
  %v4133 = vand.u32 2147483647, %v4076
  %vm4134 = vcmp.eq.f32.partialorder %v4133, 8.507059e+37
  %v4135 = vand.u32 %v4076, 2147483648
  %v4136 = vor.u32 1.1754944e-38, %v4135
  %v4137 = vsel %vm4134, %v4136, %v4132
  %v4138 = vmul.f32 1.0, %v4137
  %v4139 = vrcp.pop %v4077
  %v4140 = vmul.f32 %v4077, %v4139
  %v4141 = vsub.f32 1.0, %v4140
  %v4142 = vmul.f32 %v4139, %v4141
  %v4143 = vadd.f32 %v4139, %v4142
  %vm4144 = vweird.f32 %v4077
  %vm4145 = vweird.f32 %v4139
  %vm4146 = vmor %vm4144, %vm4145
  %v4147 = vsel %vm4146, %v4139, %v4143
  %v4148 = vand.u32 2147483647, %v4077
  %vm4149 = vcmp.eq.f32.partialorder %v4148, 8.507059e+37
  %v4150 = vand.u32 %v4077, 2147483648
  %v4151 = vor.u32 1.1754944e-38, %v4150
  %v4152 = vsel %vm4149, %v4151, %v4147
  %v4153 = vmul.f32 1.0, %v4152
  %v4154 = vrcp.pop %v4078
  %v4155 = vmul.f32 %v4078, %v4154
  %v4156 = vsub.f32 1.0, %v4155
  %v4157 = vmul.f32 %v4154, %v4156
  %v4158 = vadd.f32 %v4154, %v4157
  %vm4159 = vweird.f32 %v4078
  %vm4160 = vweird.f32 %v4154
  %vm4161 = vmor %vm4159, %vm4160
  %v4162 = vsel %vm4161, %v4154, %v4158
  %v4163 = vand.u32 2147483647, %v4078
  %vm4164 = vcmp.eq.f32.partialorder %v4163, 8.507059e+37
  %v4165 = vand.u32 %v4078, 2147483648
  %v4166 = vor.u32 1.1754944e-38, %v4165
  %v4167 = vsel %vm4164, %v4166, %v4162
  %v4168 = vmul.f32 1.0, %v4167
  %v4169 = vtanh.pop %v4050
  %v4170 = vtanh.pop %v4054
  %v4171 = vmul.f32 %v4108, %v3780
  %v4172 = vmul.f32 %v4153, %v3781
  %v4173 = vmul.f32 %v4093, %v4169
  %v4174 = vmul.f32 %v4138, %v4170
  %v4175 = vadd.f32 %v4171, %v4173
  %v4176 = vadd.f32 %v4172, %v4174
  %v4177 = vtanh.pop %v4175
  %v4178 = vtanh.pop %v4176
  %v4179 = vmul.f32 %v4123, %v4177
  %v4180 = vmul.f32 %v4168, %v4178
  %s4181 = scalar_lea.vmem [#allocation3], 96
  %4182 = vst [vmem:[%s4181] sm:$0xff] %v4179
  %4183 = vst [vmem:[%s4181 + $0x8] sm:$0xff] %v4180
  %v4184 = vpack.c.bf16 %v4180, %v4179
  %s4185 = scalar_lea.vmem [#allocation2], 448
  %v4186 = vld [vmem:[%s4185] sm:$0xff]
  %v4187 = vld [vmem:[%s4185 + $0x8] sm:$0xff]
  %v4188 = vld [vmem:[%s4185 + $0x10] sm:$0xff]
  %v4189 = vld [vmem:[%s4185 + $0x18] sm:$0xff]
  %v4190 = vld [vmem:[%s4185 + $0x20] sm:$0xff]
  %v4191 = vld [vmem:[%s4185 + $0x28] sm:$0xff]
  %v4192 = vld [vmem:[%s4185 + $0x30] sm:$0xff]
  %v4193 = vld [vmem:[%s4185 + $0x38] sm:$0xff]
  %v4194 = vld [vmem:[%s2] sm:$0xff]
  %v4195 = vld [vmem:[%s2 + $0x8] sm:$0xff]
  %v4196 = vld [vmem:[%s2 + $0x10] sm:$0xff]
  %v4197 = vld [vmem:[%s2 + $0x18] sm:$0xff]
  %v4198 = vld [vmem:[%s2 + $0x20] sm:$0xff]
  %v4199 = vld [vmem:[%s2 + $0x28] sm:$0xff]
  %v4200 = vld [vmem:[%s2 + $0x30] sm:$0xff]
  %v4201 = vld [vmem:[%s2 + $0x38] sm:$0xff]
  %v4202 = vld [vmem:[%s2 + $0x40] sm:$0xff]
  %v4203 = vld [vmem:[%s2 + $0x48] sm:$0xff]
  %v4204 = vld [vmem:[%s2 + $0x50] sm:$0xff]
  %v4205 = vld [vmem:[%s2 + $0x58] sm:$0xff]
  %v4206 = vld [vmem:[%s2 + $0x60] sm:$0xff]
  %v4207 = vld [vmem:[%s2 + $0x68] sm:$0xff]
  %v4208 = vld [vmem:[%s2 + $0x70] sm:$0xff]
  %v4209 = vld [vmem:[%s2 + $0x78] sm:$0xff]
  %v4210 = vld [vmem:[%s2 + $0x80] sm:$0xff]
  %v4211 = vld [vmem:[%s2 + $0x88] sm:$0xff]
  %v4212 = vld [vmem:[%s2 + $0x90] sm:$0xff]
  %v4213 = vld [vmem:[%s2 + $0x98] sm:$0xff]
  %v4214 = vld [vmem:[%s2 + $0xa0] sm:$0xff]
  %v4215 = vld [vmem:[%s2 + $0xa8] sm:$0xff]
  %v4216 = vld [vmem:[%s2 + $0xb0] sm:$0xff]
  %v4217 = vld [vmem:[%s2 + $0xb8] sm:$0xff]
  %v4218 = vld [vmem:[%s2 + $0xc0] sm:$0xff]
  %v4219 = vld [vmem:[%s2 + $0xc8] sm:$0xff]
  %v4220 = vld [vmem:[%s2 + $0xd0] sm:$0xff]
  %v4221 = vld [vmem:[%s2 + $0xd8] sm:$0xff]
  %v4222 = vld [vmem:[%s2 + $0xe0] sm:$0xff]
  %v4223 = vld [vmem:[%s2 + $0xe8] sm:$0xff]
  %v4224 = vld [vmem:[%s2 + $0xf0] sm:$0xff]
  %v4225 = vld [vmem:[%s2 + $0xf8] sm:$0xff]
  %v4258 = vunpack.c.l.b16 %v4194
  %v4259 = vunpack.c.h.b16 %v4194
  %v4260 = vunpack.c.l.b16 %v4195
  %v4261 = vunpack.c.h.b16 %v4195
  %v4262 = vunpack.c.l.b16 %v4196
  %v4263 = vunpack.c.h.b16 %v4196
  %v4264 = vunpack.c.l.b16 %v4197
  %v4265 = vunpack.c.h.b16 %v4197
  %v4266 = vunpack.c.l.b16 %v4198
  %v4267 = vunpack.c.h.b16 %v4198
  %v4268 = vunpack.c.l.b16 %v4199
  %v4269 = vunpack.c.h.b16 %v4199
  %v4270 = vunpack.c.l.b16 %v4200
  %v4271 = vunpack.c.h.b16 %v4200
  %v4272 = vunpack.c.l.b16 %v4201
  %v4273 = vunpack.c.h.b16 %v4201
  %v4274 = vunpack.c.l.b16 %v4202
  %v4275 = vunpack.c.h.b16 %v4202
  %v4276 = vunpack.c.l.b16 %v4203
  %v4277 = vunpack.c.h.b16 %v4203
  %v4278 = vunpack.c.l.b16 %v4204
  %v4279 = vunpack.c.h.b16 %v4204
  %v4280 = vunpack.c.l.b16 %v4205
  %v4281 = vunpack.c.h.b16 %v4205
  %v4282 = vunpack.c.l.b16 %v4206
  %v4283 = vunpack.c.h.b16 %v4206
  %v4284 = vunpack.c.l.b16 %v4207
  %v4285 = vunpack.c.h.b16 %v4207
  %v4286 = vunpack.c.l.b16 %v4208
  %v4287 = vunpack.c.h.b16 %v4208
  %v4288 = vunpack.c.l.b16 %v4209
  %v4289 = vunpack.c.h.b16 %v4209
  %v4290 = vunpack.c.l.b16 %v4210
  %v4291 = vunpack.c.h.b16 %v4210
  %v4292 = vunpack.c.l.b16 %v4211
  %v4293 = vunpack.c.h.b16 %v4211
  %v4294 = vunpack.c.l.b16 %v4212
  %v4295 = vunpack.c.h.b16 %v4212
  %v4296 = vunpack.c.l.b16 %v4213
  %v4297 = vunpack.c.h.b16 %v4213
  %v4298 = vunpack.c.l.b16 %v4214
  %v4299 = vunpack.c.h.b16 %v4214
  %v4300 = vunpack.c.l.b16 %v4215
  %v4301 = vunpack.c.h.b16 %v4215
  %v4302 = vunpack.c.l.b16 %v4216
  %v4303 = vunpack.c.h.b16 %v4216
  %v4304 = vunpack.c.l.b16 %v4217
  %v4305 = vunpack.c.h.b16 %v4217
  %v4306 = vunpack.c.l.b16 %v4218
  %v4307 = vunpack.c.h.b16 %v4218
  %v4308 = vunpack.c.l.b16 %v4219
  %v4309 = vunpack.c.h.b16 %v4219
  %v4310 = vunpack.c.l.b16 %v4220
  %v4311 = vunpack.c.h.b16 %v4220
  %v4312 = vunpack.c.l.b16 %v4221
  %v4313 = vunpack.c.h.b16 %v4221
  %v4314 = vunpack.c.l.b16 %v4222
  %v4315 = vunpack.c.h.b16 %v4222
  %v4316 = vunpack.c.l.b16 %v4223
  %v4317 = vunpack.c.h.b16 %v4223
  %v4318 = vunpack.c.l.b16 %v4224
  %v4319 = vunpack.c.h.b16 %v4224
  %v4320 = vunpack.c.l.b16 %v4225
  %v4321 = vunpack.c.h.b16 %v4225
  %v4322 = vpack.c.b16 %v4262, %v4258
  %v4323 = vpack.c.b16 %v4263, %v4259
  %v4324 = vpack.c.b16 %v4264, %v4260
  %v4325 = vpack.c.b16 %v4265, %v4261
  %v4326 = vpack.c.b16 %v4270, %v4266
  %v4327 = vpack.c.b16 %v4271, %v4267
  %v4328 = vpack.c.b16 %v4272, %v4268
  %v4329 = vpack.c.b16 %v4273, %v4269
  %v4330 = vpack.c.b16 %v4278, %v4274
  %v4331 = vpack.c.b16 %v4279, %v4275
  %v4332 = vpack.c.b16 %v4280, %v4276
  %v4333 = vpack.c.b16 %v4281, %v4277
  %v4334 = vpack.c.b16 %v4286, %v4282
  %v4335 = vpack.c.b16 %v4287, %v4283
  %v4336 = vpack.c.b16 %v4288, %v4284
  %v4337 = vpack.c.b16 %v4289, %v4285
  %v4338 = vpack.c.b16 %v4294, %v4290
  %v4339 = vpack.c.b16 %v4295, %v4291
  %v4340 = vpack.c.b16 %v4296, %v4292
  %v4341 = vpack.c.b16 %v4297, %v4293
  %v4342 = vpack.c.b16 %v4302, %v4298
  %v4343 = vpack.c.b16 %v4303, %v4299
  %v4344 = vpack.c.b16 %v4304, %v4300
  %v4345 = vpack.c.b16 %v4305, %v4301
  %v4346 = vpack.c.b16 %v4310, %v4306
  %v4347 = vpack.c.b16 %v4311, %v4307
  %v4348 = vpack.c.b16 %v4312, %v4308
  %v4349 = vpack.c.b16 %v4313, %v4309
  %v4350 = vpack.c.b16 %v4318, %v4314
  %v4351 = vpack.c.b16 %v4319, %v4315
  %v4352 = vpack.c.b16 %v4320, %v4316
  %v4353 = vpack.c.b16 %v4321, %v4317
  %4386 = vmatpush.bf16.msra.mxu0 %v4350
  %4387 = vmatpush.bf16.msra.mxu0 %v4346
  %4388 = vmatpush.bf16.msra.mxu0 %v4342
  %4389 = vmatpush.bf16.msra.mxu0 %v4338
  %4390 = vmatpush.bf16.msra.mxu0 %v4334
  %4391 = vmatpush.bf16.msra.mxu0 %v4330
  %4392 = vmatpush.bf16.msra.mxu0 %v4326
  %4393 = vmatpush.bf16.msra.mxu0 %v4322
  %4394 = vmatmul.bf16.gmra.mxu0 %v4184
  %v4395 = vpop.f32.mrf.mxu0
  %v4396 = vadd.f32 0.0, %v4395
  %v4397 = vpop.f32.mrf.mxu0
  %v4398 = vadd.f32 0.0, %v4397
  %4399 = vdwg.mxu0
  %4400 = vmatpush.bf16.msra.mxu0 %v4351
  %4401 = vmatpush.bf16.msra.mxu0 %v4347
  %4402 = vmatpush.bf16.msra.mxu0 %v4343
  %4403 = vmatpush.bf16.msra.mxu0 %v4339
  %4404 = vmatpush.bf16.msra.mxu0 %v4335
  %4405 = vmatpush.bf16.msra.mxu0 %v4331
  %4406 = vmatpush.bf16.msra.mxu0 %v4327
  %4407 = vmatpush.bf16.msra.mxu0 %v4323
  %4408 = vmatmul.bf16.gmra.mxu0 %v4184
  %v4409 = vpop.f32.mrf.mxu0
  %v4410 = vadd.f32 0.0, %v4409
  %v4411 = vpop.f32.mrf.mxu0
  %v4412 = vadd.f32 0.0, %v4411
  %4413 = vdwg.mxu0
  %4414 = vmatpush.bf16.msra.mxu0 %v4352
  %4415 = vmatpush.bf16.msra.mxu0 %v4348
  %4416 = vmatpush.bf16.msra.mxu0 %v4344
  %4417 = vmatpush.bf16.msra.mxu0 %v4340
  %4418 = vmatpush.bf16.msra.mxu0 %v4336
  %4419 = vmatpush.bf16.msra.mxu0 %v4332
  %4420 = vmatpush.bf16.msra.mxu0 %v4328
  %4421 = vmatpush.bf16.msra.mxu0 %v4324
  %4422 = vmatmul.bf16.gmra.mxu0 %v4184
  %v4423 = vpop.f32.mrf.mxu0
  %v4424 = vadd.f32 0.0, %v4423
  %v4425 = vpop.f32.mrf.mxu0
  %v4426 = vadd.f32 0.0, %v4425
  %4427 = vdwg.mxu0
  %4428 = vmatpush.bf16.msra.mxu0 %v4353
  %4429 = vmatpush.bf16.msra.mxu0 %v4349
  %4430 = vmatpush.bf16.msra.mxu0 %v4345
  %4431 = vmatpush.bf16.msra.mxu0 %v4341
  %4432 = vmatpush.bf16.msra.mxu0 %v4337
  %4433 = vmatpush.bf16.msra.mxu0 %v4333
  %4434 = vmatpush.bf16.msra.mxu0 %v4329
  %4435 = vmatpush.bf16.msra.mxu0 %v4325
  %4436 = vmatmul.bf16.gmra.mxu0 %v4184
  %v4437 = vpop.f32.mrf.mxu0
  %v4438 = vadd.f32 0.0, %v4437
  %v4439 = vpop.f32.mrf.mxu0
  %v4440 = vadd.f32 0.0, %v4439
  %4441 = vdwg.mxu0
  %v4442 = vadd.f32 %v4186, %v4396
  %v4443 = vadd.f32 %v4187, %v4410
  %v4444 = vadd.f32 %v4188, %v4424
  %v4445 = vadd.f32 %v4189, %v4438
  %v4446 = vadd.f32 %v4190, %v4398
  %v4447 = vadd.f32 %v4191, %v4412
  %v4448 = vadd.f32 %v4192, %v4426
  %v4449 = vadd.f32 %v4193, %v4440
  %v4450 = vxor.u32 %v4442, 2147483648
  %v4451 = vxor.u32 %v4443, 2147483648
  %v4452 = vxor.u32 %v4444, 2147483648
  %v4453 = vxor.u32 %v4446, 2147483648
  %v4454 = vxor.u32 %v4447, 2147483648
  %v4455 = vxor.u32 %v4448, 2147483648
  %v4456 = vmul.f32 %v4450, 1.442695
  %v4457 = vpow.pop %v4456
  %v4458 = vmul.f32 %v4451, 1.442695
  %v4459 = vpow.pop %v4458
  %v4460 = vmul.f32 %v4452, 1.442695
  %v4461 = vpow.pop %v4460
  %v4462 = vmul.f32 %v4453, 1.442695
  %v4463 = vpow.pop %v4462
  %v4464 = vmul.f32 %v4454, 1.442695
  %v4465 = vpow.pop %v4464
  %v4466 = vmul.f32 %v4455, 1.442695
  %v4467 = vpow.pop %v4466
  %v4468 = vadd.f32 %v4457, 1.0
  %v4469 = vadd.f32 %v4459, 1.0
  %v4470 = vadd.f32 %v4461, 1.0
  %v4471 = vadd.f32 %v4463, 1.0
  %v4472 = vadd.f32 %v4465, 1.0
  %v4473 = vadd.f32 %v4467, 1.0
  %v4474 = vrcp.pop %v4468
  %v4475 = vmul.f32 %v4468, %v4474
  %v4476 = vsub.f32 1.0, %v4475
  %v4477 = vmul.f32 %v4474, %v4476
  %v4478 = vadd.f32 %v4474, %v4477
  %vm4479 = vweird.f32 %v4468
  %vm4480 = vweird.f32 %v4474
  %vm4481 = vmor %vm4479, %vm4480
  %v4482 = vsel %vm4481, %v4474, %v4478
  %v4483 = vand.u32 2147483647, %v4468
  %vm4484 = vcmp.eq.f32.partialorder %v4483, 8.507059e+37
  %v4485 = vand.u32 %v4468, 2147483648
  %v4486 = vor.u32 1.1754944e-38, %v4485
  %v4487 = vsel %vm4484, %v4486, %v4482
  %v4488 = vmul.f32 1.0, %v4487
  %v4489 = vrcp.pop %v4469
  %v4490 = vmul.f32 %v4469, %v4489
  %v4491 = vsub.f32 1.0, %v4490
  %v4492 = vmul.f32 %v4489, %v4491
  %v4493 = vadd.f32 %v4489, %v4492
  %vm4494 = vweird.f32 %v4469
  %vm4495 = vweird.f32 %v4489
  %vm4496 = vmor %vm4494, %vm4495
  %v4497 = vsel %vm4496, %v4489, %v4493
  %v4498 = vand.u32 2147483647, %v4469
  %vm4499 = vcmp.eq.f32.partialorder %v4498, 8.507059e+37
  %v4500 = vand.u32 %v4469, 2147483648
  %v4501 = vor.u32 1.1754944e-38, %v4500
  %v4502 = vsel %vm4499, %v4501, %v4497
  %v4503 = vmul.f32 1.0, %v4502
  %v4504 = vrcp.pop %v4470
  %v4505 = vmul.f32 %v4470, %v4504
  %v4506 = vsub.f32 1.0, %v4505
  %v4507 = vmul.f32 %v4504, %v4506
  %v4508 = vadd.f32 %v4504, %v4507
  %vm4509 = vweird.f32 %v4470
  %vm4510 = vweird.f32 %v4504
  %vm4511 = vmor %vm4509, %vm4510
  %v4512 = vsel %vm4511, %v4504, %v4508
  %v4513 = vand.u32 2147483647, %v4470
  %vm4514 = vcmp.eq.f32.partialorder %v4513, 8.507059e+37
  %v4515 = vand.u32 %v4470, 2147483648
  %v4516 = vor.u32 1.1754944e-38, %v4515
  %v4517 = vsel %vm4514, %v4516, %v4512
  %v4518 = vmul.f32 1.0, %v4517
  %v4519 = vrcp.pop %v4471
  %v4520 = vmul.f32 %v4471, %v4519
  %v4521 = vsub.f32 1.0, %v4520
  %v4522 = vmul.f32 %v4519, %v4521
  %v4523 = vadd.f32 %v4519, %v4522
  %vm4524 = vweird.f32 %v4471
  %vm4525 = vweird.f32 %v4519
  %vm4526 = vmor %vm4524, %vm4525
  %v4527 = vsel %vm4526, %v4519, %v4523
  %v4528 = vand.u32 2147483647, %v4471
  %vm4529 = vcmp.eq.f32.partialorder %v4528, 8.507059e+37
  %v4530 = vand.u32 %v4471, 2147483648
  %v4531 = vor.u32 1.1754944e-38, %v4530
  %v4532 = vsel %vm4529, %v4531, %v4527
  %v4533 = vmul.f32 1.0, %v4532
  %v4534 = vrcp.pop %v4472
  %v4535 = vmul.f32 %v4472, %v4534
  %v4536 = vsub.f32 1.0, %v4535
  %v4537 = vmul.f32 %v4534, %v4536
  %v4538 = vadd.f32 %v4534, %v4537
  %vm4539 = vweird.f32 %v4472
  %vm4540 = vweird.f32 %v4534
  %vm4541 = vmor %vm4539, %vm4540
  %v4542 = vsel %vm4541, %v4534, %v4538
  %v4543 = vand.u32 2147483647, %v4472
  %vm4544 = vcmp.eq.f32.partialorder %v4543, 8.507059e+37
  %v4545 = vand.u32 %v4472, 2147483648
  %v4546 = vor.u32 1.1754944e-38, %v4545
  %v4547 = vsel %vm4544, %v4546, %v4542
  %v4548 = vmul.f32 1.0, %v4547
  %v4549 = vrcp.pop %v4473
  %v4550 = vmul.f32 %v4473, %v4549
  %v4551 = vsub.f32 1.0, %v4550
  %v4552 = vmul.f32 %v4549, %v4551
  %v4553 = vadd.f32 %v4549, %v4552
  %vm4554 = vweird.f32 %v4473
  %vm4555 = vweird.f32 %v4549
  %vm4556 = vmor %vm4554, %vm4555
  %v4557 = vsel %vm4556, %v4549, %v4553
  %v4558 = vand.u32 2147483647, %v4473
  %vm4559 = vcmp.eq.f32.partialorder %v4558, 8.507059e+37
  %v4560 = vand.u32 %v4473, 2147483648
  %v4561 = vor.u32 1.1754944e-38, %v4560
  %v4562 = vsel %vm4559, %v4561, %v4557
  %v4563 = vmul.f32 1.0, %v4562
  %v4564 = vtanh.pop %v4445
  %v4565 = vtanh.pop %v4449
  %v4566 = vmul.f32 %v4503, %v4175
  %v4567 = vmul.f32 %v4548, %v4176
  %v4568 = vmul.f32 %v4488, %v4564
  %v4569 = vmul.f32 %v4533, %v4565
  %v4570 = vadd.f32 %v4566, %v4568
  %v4571 = vadd.f32 %v4567, %v4569
  %v4572 = vtanh.pop %v4570
  %v4573 = vtanh.pop %v4571
  %v4574 = vmul.f32 %v4518, %v4572
  %v4575 = vmul.f32 %v4563, %v4573
  %s4576 = scalar_lea.vmem [#allocation3], 112
  %4577 = vst [vmem:[%s4576] sm:$0xff] %v4574
  %4578 = vst [vmem:[%s4576 + $0x8] sm:$0xff] %v4575
  %v4579 = vld [vmem:[#allocation3] sm:$0xff]
  %v4580 = vld [vmem:[#allocation3 + $0x8] sm:$0xff]
  %v4581 = vld [vmem:[#allocation3 + $0x10] sm:$0xff]
  %v4582 = vld [vmem:[#allocation3 + $0x18] sm:$0xff]
  %v4583 = vld [vmem:[#allocation3 + $0x20] sm:$0xff]
  %v4584 = vld [vmem:[#allocation3 + $0x28] sm:$0xff]
  %v4585 = vld [vmem:[#allocation3 + $0x30] sm:$0xff]
  %v4586 = vld [vmem:[#allocation3 + $0x38] sm:$0xff]
  %v4587 = vld [vmem:[#allocation3 + $0x40] sm:$0xff]
  %v4588 = vld [vmem:[#allocation3 + $0x48] sm:$0xff]
  %v4589 = vld [vmem:[#allocation3 + $0x50] sm:$0xff]
  %v4590 = vld [vmem:[#allocation3 + $0x58] sm:$0xff]
  %v4591 = vld [vmem:[#allocation3 + $0x60] sm:$0xff]
  %v4592 = vld [vmem:[#allocation3 + $0x68] sm:$0xff]
  %v4593 = vld [vmem:[#allocation3 + $0x70] sm:$0xff]
  %v4594 = vld [vmem:[#allocation3 + $0x78] sm:$0xff]
  %v4595 = vpack.c.bf16 %v4580, %v4579
  %v4596 = vpack.c.bf16 %v4582, %v4581
  %v4597 = vpack.c.bf16 %v4584, %v4583
  %v4598 = vpack.c.bf16 %v4586, %v4585
  %v4599 = vpack.c.bf16 %v4588, %v4587
  %v4600 = vpack.c.bf16 %v4590, %v4589
  %v4601 = vpack.c.bf16 %v4592, %v4591
  %v4602 = vpack.c.bf16 %v4594, %v4593
  %v4603 = vld [vmem:[%s4] sm:$0xf]
  %v4604 = vld [vmem:[%s4 + $0x4] sm:$0xf]
  %v4605 = vld [vmem:[%s4 + $0x8] sm:$0xf]
  %v4606 = vld [vmem:[%s4 + $0xc] sm:$0xf]
  %v4607 = vld [vmem:[%s4 + $0x10] sm:$0xf]
  %v4608 = vld [vmem:[%s4 + $0x14] sm:$0xf]
  %v4609 = vld [vmem:[%s4 + $0x18] sm:$0xf]
  %v4610 = vld [vmem:[%s4 + $0x1c] sm:$0xf]
  %v4611 = vld [vmem:[%s4 + $0x20] sm:$0xf]
  %v4612 = vld [vmem:[%s4 + $0x24] sm:$0xf]
  %v4613 = vld [vmem:[%s4 + $0x28] sm:$0xf]
  %v4614 = vld [vmem:[%s4 + $0x2c] sm:$0xf]
  %v4615 = vld [vmem:[%s4 + $0x30] sm:$0xf]
  %v4616 = vld [vmem:[%s4 + $0x34] sm:$0xf]
  %v4617 = vld [vmem:[%s4 + $0x38] sm:$0xf]
  %v4618 = vld [vmem:[%s4 + $0x3c] sm:$0xf]
  %v4619 = vld [vmem:[%s5] sm:$0x1]
  %v4621 = vperm.slane %v4619, 0
  %v4639 = vunpack.c.l.b16 %v4603
  %v4640 = vunpack.c.l.b16 %v4604
  %v4641 = vunpack.c.l.b16 %v4605
  %v4642 = vunpack.c.l.b16 %v4606
  %v4643 = vunpack.c.l.b16 %v4607
  %v4644 = vunpack.c.l.b16 %v4608
  %v4645 = vunpack.c.l.b16 %v4609
  %v4646 = vunpack.c.l.b16 %v4610
  %v4647 = vunpack.c.l.b16 %v4611
  %v4648 = vunpack.c.l.b16 %v4612
  %v4649 = vunpack.c.l.b16 %v4613
  %v4650 = vunpack.c.l.b16 %v4614
  %v4651 = vunpack.c.l.b16 %v4615
  %v4652 = vunpack.c.l.b16 %v4616
  %v4653 = vunpack.c.l.b16 %v4617
  %v4654 = vunpack.c.l.b16 %v4618
  %v4655 = vpack.c.b16 %v4640, %v4639
  %v4656 = vpack.c.b16 %v4642, %v4641
  %v4657 = vpack.c.b16 %v4644, %v4643
  %v4658 = vpack.c.b16 %v4646, %v4645
  %v4659 = vpack.c.b16 %v4648, %v4647
  %v4660 = vpack.c.b16 %v4650, %v4649
  %v4661 = vpack.c.b16 %v4652, %v4651
  %v4662 = vpack.c.b16 %v4654, %v4653
  %4671 = vmatpush.bf16.msra.mxu0 %v4662
  %4672 = vmatpush.bf16.msra.mxu0 %v4661
  %4673 = vmatpush.bf16.msra.mxu0 %v4660
  %4674 = vmatpush.bf16.msra.mxu0 %v4659
  %4675 = vmatpush.bf16.msra.mxu0 %v4658
  %4676 = vmatpush.bf16.msra.mxu0 %v4657
  %4677 = vmatpush.bf16.msra.mxu0 %v4656
  %4678 = vmatpush.bf16.msra.mxu0 %v4655
  %4679 = vmatmul.bf16.gmra.mxu0 %v4595
  %v4680 = vpop.f32.mrf.mxu0
  %v4681 = vadd.f32 %v4621, %v4680
  %v4682 = vpop.f32.mrf.mxu0
  %v4683 = vadd.f32 %v4621, %v4682
  %4684 = vmatmul.bf16.gmra.mxu0 %v4596
  %v4685 = vpop.f32.mrf.mxu0
  %v4686 = vadd.f32 %v4621, %v4685
  %v4687 = vpop.f32.mrf.mxu0
  %v4688 = vadd.f32 %v4621, %v4687
  %4689 = vmatmul.bf16.gmra.mxu0 %v4597
  %v4690 = vpop.f32.mrf.mxu0
  %v4691 = vadd.f32 %v4621, %v4690
  %v4692 = vpop.f32.mrf.mxu0
  %v4693 = vadd.f32 %v4621, %v4692
  %4694 = vmatmul.bf16.gmra.mxu0 %v4598
  %v4695 = vpop.f32.mrf.mxu0
  %v4696 = vadd.f32 %v4621, %v4695
  %v4697 = vpop.f32.mrf.mxu0
  %v4698 = vadd.f32 %v4621, %v4697
  %4699 = vmatmul.bf16.gmra.mxu0 %v4599
  %v4700 = vpop.f32.mrf.mxu0
  %v4701 = vadd.f32 %v4621, %v4700
  %v4702 = vpop.f32.mrf.mxu0
  %v4703 = vadd.f32 %v4621, %v4702
  %4704 = vmatmul.bf16.gmra.mxu0 %v4600
  %v4705 = vpop.f32.mrf.mxu0
  %v4706 = vadd.f32 %v4621, %v4705
  %v4707 = vpop.f32.mrf.mxu0
  %v4708 = vadd.f32 %v4621, %v4707
  %4709 = vmatmul.bf16.gmra.mxu0 %v4601
  %v4710 = vpop.f32.mrf.mxu0
  %v4711 = vadd.f32 %v4621, %v4710
  %v4712 = vpop.f32.mrf.mxu0
  %v4713 = vadd.f32 %v4621, %v4712
  %4714 = vmatmul.bf16.gmra.mxu0 %v4602
  %v4715 = vpop.f32.mrf.mxu0
  %v4716 = vadd.f32 %v4621, %v4715
  %v4717 = vpop.f32.mrf.mxu0
  %v4718 = vadd.f32 %v4621, %v4717
  %4719 = vdwg.mxu0
  %v4720 = vlaneseq
  %v4721 = vand.u32 %v4720, 127
  %vm4722 = vcmp.lt.s32.totalorder %v4721, 4
  %v4723 = vsel %vm4722, 1, 0
  %vm4724 = vcmp.eq.s32.totalorder %v4723, 1
  %v4725 = vsel %vm4724, %v4681, -1e+30
  %v4726 = vsel %vm4724, %v4683, -1e+30
  %v4727 = vsel %vm4724, %v4686, -1e+30
  %v4728 = vsel %vm4724, %v4688, -1e+30
  %v4729 = vsel %vm4724, %v4691, -1e+30
  %v4730 = vsel %vm4724, %v4693, -1e+30
  %v4731 = vsel %vm4724, %v4696, -1e+30
  %v4732 = vsel %vm4724, %v4698, -1e+30
  %v4733 = vsel %vm4724, %v4701, -1e+30
  %v4734 = vsel %vm4724, %v4703, -1e+30
  %v4735 = vsel %vm4724, %v4706, -1e+30
  %v4736 = vsel %vm4724, %v4708, -1e+30
  %v4737 = vsel %vm4724, %v4711, -1e+30
  %v4738 = vsel %vm4724, %v4713, -1e+30
  %v4739 = vsel %vm4724, %v4716, -1e+30
  %v4740 = vsel %vm4724, %v4718, -1e+30
  %4741 = vmax.xlane.f32.xlu0 %v4725
  %v4742 = vpop.xlane.xlu0 %4741
  %4743 = vmax.xlane.f32.xlu0 %v4726
  %v4744 = vpop.xlane.xlu0 %4743
  %4745 = vmax.xlane.f32.xlu0 %v4727
  %v4746 = vpop.xlane.xlu0 %4745
  %4747 = vmax.xlane.f32.xlu0 %v4728
  %v4748 = vpop.xlane.xlu0 %4747
  %4749 = vmax.xlane.f32.xlu0 %v4729
  %v4750 = vpop.xlane.xlu0 %4749
  %4751 = vmax.xlane.f32.xlu0 %v4730
  %v4752 = vpop.xlane.xlu0 %4751
  %4753 = vmax.xlane.f32.xlu0 %v4731
  %v4754 = vpop.xlane.xlu0 %4753
  %4755 = vmax.xlane.f32.xlu0 %v4732
  %v4756 = vpop.xlane.xlu0 %4755
  %4757 = vmax.xlane.f32.xlu0 %v4733
  %v4758 = vpop.xlane.xlu0 %4757
  %4759 = vmax.xlane.f32.xlu0 %v4734
  %v4760 = vpop.xlane.xlu0 %4759
  %4761 = vmax.xlane.f32.xlu0 %v4735
  %v4762 = vpop.xlane.xlu0 %4761
  %4763 = vmax.xlane.f32.xlu0 %v4736
  %v4764 = vpop.xlane.xlu0 %4763
  %4765 = vmax.xlane.f32.xlu0 %v4737
  %v4766 = vpop.xlane.xlu0 %4765
  %4767 = vmax.xlane.f32.xlu0 %v4738
  %v4768 = vpop.xlane.xlu0 %4767
  %4769 = vmax.xlane.f32.xlu0 %v4739
  %v4770 = vpop.xlane.xlu0 %4769
  %4771 = vmax.xlane.f32.xlu0 %v4740
  %v4772 = vpop.xlane.xlu0 %4771
  %v4773 = vsub.f32 %v4725, %v4742
  %v4774 = vsub.f32 %v4726, %v4744
  %v4775 = vsub.f32 %v4727, %v4746
  %v4776 = vsub.f32 %v4728, %v4748
  %v4777 = vsub.f32 %v4729, %v4750
  %v4778 = vsub.f32 %v4730, %v4752
  %v4779 = vsub.f32 %v4731, %v4754
  %v4780 = vsub.f32 %v4732, %v4756
  %v4781 = vsub.f32 %v4733, %v4758
  %v4782 = vsub.f32 %v4734, %v4760
  %v4783 = vsub.f32 %v4735, %v4762
  %v4784 = vsub.f32 %v4736, %v4764
  %v4785 = vsub.f32 %v4737, %v4766
  %v4786 = vsub.f32 %v4738, %v4768
  %v4787 = vsub.f32 %v4739, %v4770
  %v4788 = vsub.f32 %v4740, %v4772
  %v4789 = vmul.f32 %v4773, 1.442695
  %v4790 = vpow.pop %v4789
  %v4791 = vmul.f32 %v4774, 1.442695
  %v4792 = vpow.pop %v4791
  %v4793 = vmul.f32 %v4775, 1.442695
  %v4794 = vpow.pop %v4793
  %v4795 = vmul.f32 %v4776, 1.442695
  %v4796 = vpow.pop %v4795
  %v4797 = vmul.f32 %v4777, 1.442695
  %v4798 = vpow.pop %v4797
  %v4799 = vmul.f32 %v4778, 1.442695
  %v4800 = vpow.pop %v4799
  %v4801 = vmul.f32 %v4779, 1.442695
  %v4802 = vpow.pop %v4801
  %v4803 = vmul.f32 %v4780, 1.442695
  %v4804 = vpow.pop %v4803
  %v4805 = vmul.f32 %v4781, 1.442695
  %v4806 = vpow.pop %v4805
  %v4807 = vmul.f32 %v4782, 1.442695
  %v4808 = vpow.pop %v4807
  %v4809 = vmul.f32 %v4783, 1.442695
  %v4810 = vpow.pop %v4809
  %v4811 = vmul.f32 %v4784, 1.442695
  %v4812 = vpow.pop %v4811
  %v4813 = vmul.f32 %v4785, 1.442695
  %v4814 = vpow.pop %v4813
  %v4815 = vmul.f32 %v4786, 1.442695
  %v4816 = vpow.pop %v4815
  %v4817 = vmul.f32 %v4787, 1.442695
  %v4818 = vpow.pop %v4817
  %v4819 = vmul.f32 %v4788, 1.442695
  %v4820 = vpow.pop %v4819
  %4821 = vadd.xlane.f32.xlu0 %v4790
  %v4822 = vpop.xlane.xlu0 %4821
  %4823 = vadd.xlane.f32.xlu0 %v4792
  %v4824 = vpop.xlane.xlu0 %4823
  %4825 = vadd.xlane.f32.xlu0 %v4794
  %v4826 = vpop.xlane.xlu0 %4825
  %4827 = vadd.xlane.f32.xlu0 %v4796
  %v4828 = vpop.xlane.xlu0 %4827
  %4829 = vadd.xlane.f32.xlu0 %v4798
  %v4830 = vpop.xlane.xlu0 %4829
  %4831 = vadd.xlane.f32.xlu0 %v4800
  %v4832 = vpop.xlane.xlu0 %4831
  %4833 = vadd.xlane.f32.xlu0 %v4802
  %v4834 = vpop.xlane.xlu0 %4833
  %4835 = vadd.xlane.f32.xlu0 %v4804
  %v4836 = vpop.xlane.xlu0 %4835
  %4837 = vadd.xlane.f32.xlu0 %v4806
  %v4838 = vpop.xlane.xlu0 %4837
  %4839 = vadd.xlane.f32.xlu0 %v4808
  %v4840 = vpop.xlane.xlu0 %4839
  %4841 = vadd.xlane.f32.xlu0 %v4810
  %v4842 = vpop.xlane.xlu0 %4841
  %4843 = vadd.xlane.f32.xlu0 %v4812
  %v4844 = vpop.xlane.xlu0 %4843
  %4845 = vadd.xlane.f32.xlu0 %v4814
  %v4846 = vpop.xlane.xlu0 %4845
  %4847 = vadd.xlane.f32.xlu0 %v4816
  %v4848 = vpop.xlane.xlu0 %4847
  %4849 = vadd.xlane.f32.xlu0 %v4818
  %v4850 = vpop.xlane.xlu0 %4849
  %4851 = vadd.xlane.f32.xlu0 %v4820
  %v4852 = vpop.xlane.xlu0 %4851
  %v4853 = vlog2.pop %v4822
  %v4854 = vmul.f32 %v4853, 0.6931472
  %v4855 = vlog2.pop %v4824
  %v4856 = vmul.f32 %v4855, 0.6931472
  %v4857 = vlog2.pop %v4826
  %v4858 = vmul.f32 %v4857, 0.6931472
  %v4859 = vlog2.pop %v4828
  %v4860 = vmul.f32 %v4859, 0.6931472
  %v4861 = vlog2.pop %v4830
  %v4862 = vmul.f32 %v4861, 0.6931472
  %v4863 = vlog2.pop %v4832
  %v4864 = vmul.f32 %v4863, 0.6931472
  %v4865 = vlog2.pop %v4834
  %v4866 = vmul.f32 %v4865, 0.6931472
  %v4867 = vlog2.pop %v4836
  %v4868 = vmul.f32 %v4867, 0.6931472
  %v4869 = vlog2.pop %v4838
  %v4870 = vmul.f32 %v4869, 0.6931472
  %v4871 = vlog2.pop %v4840
  %v4872 = vmul.f32 %v4871, 0.6931472
  %v4873 = vlog2.pop %v4842
  %v4874 = vmul.f32 %v4873, 0.6931472
  %v4875 = vlog2.pop %v4844
  %v4876 = vmul.f32 %v4875, 0.6931472
  %v4877 = vlog2.pop %v4846
  %v4878 = vmul.f32 %v4877, 0.6931472
  %v4879 = vlog2.pop %v4848
  %v4880 = vmul.f32 %v4879, 0.6931472
  %v4881 = vlog2.pop %v4850
  %v4882 = vmul.f32 %v4881, 0.6931472
  %v4883 = vlog2.pop %v4852
  %v4884 = vmul.f32 %v4883, 0.6931472
  %v4885 = vsub.f32 %v4773, %v4854
  %v4886 = vsub.f32 %v4774, %v4856
  %v4887 = vsub.f32 %v4775, %v4858
  %v4888 = vsub.f32 %v4776, %v4860
  %v4889 = vsub.f32 %v4777, %v4862
  %v4890 = vsub.f32 %v4778, %v4864
  %v4891 = vsub.f32 %v4779, %v4866
  %v4892 = vsub.f32 %v4780, %v4868
  %v4893 = vsub.f32 %v4781, %v4870
  %v4894 = vsub.f32 %v4782, %v4872
  %v4895 = vsub.f32 %v4783, %v4874
  %v4896 = vsub.f32 %v4784, %v4876
  %v4897 = vsub.f32 %v4785, %v4878
  %v4898 = vsub.f32 %v4786, %v4880
  %v4899 = vsub.f32 %v4787, %v4882
  %v4900 = vsub.f32 %v4788, %v4884
  %4901 = vst [vmem:[%s6] sm:$0xff] %v4885
  %4902 = vst [vmem:[%s6 + $0x8] sm:$0xff] %v4886
  %4903 = vst [vmem:[%s6 + $0x10] sm:$0xff] %v4887
  %4904 = vst [vmem:[%s6 + $0x18] sm:$0xff] %v4888
  %4905 = vst [vmem:[%s6 + $0x20] sm:$0xff] %v4889
  %4906 = vst [vmem:[%s6 + $0x28] sm:$0xff] %v4890
  %4907 = vst [vmem:[%s6 + $0x30] sm:$0xff] %v4891
  %4908 = vst [vmem:[%s6 + $0x38] sm:$0xff] %v4892
  %4909 = vst [vmem:[%s6 + $0x40] sm:$0xff] %v4893
  %4910 = vst [vmem:[%s6 + $0x48] sm:$0xff] %v4894
  %4911 = vst [vmem:[%s6 + $0x50] sm:$0xff] %v4895
  %4912 = vst [vmem:[%s6 + $0x58] sm:$0xff] %v4896
  %4913 = vst [vmem:[%s6 + $0x60] sm:$0xff] %v4897
  %4914 = vst [vmem:[%s6 + $0x68] sm:$0xff] %v4898
  %4915 = vst [vmem:[%s6 + $0x70] sm:$0xff] %v4899
  %4916 = vst [vmem:[%s6 + $0x78] sm:$0xff] %v4900
  // Predicated region
  $region26: #{lstm_seq_cls_forward.1} parent=0 // pred_check
    _
  $region27: #{lstm_seq_cls_forward.1} parent=0 // pred_check_branch
    %4918 = sbr.rel (0) target = $region29
  $region28: #{lstm_seq_cls_forward.1} parent=0 // pred_region
    _
  $region29: #{lstm_seq_cls_forward.1} parent=0 // pred_fallthru
    _
  // Predicated region
  $region30: #{lstm_seq_cls_forward.1} parent=0 // pred_check
    _
  $region31: #{lstm_seq_cls_forward.1} parent=0 // pred_check_branch
    %4920 = sbr.rel (0) target = $region33
  $region32: #{lstm_seq_cls_forward.1} parent=0 // pred_region
    _
  $region33: #{lstm_seq_cls_forward.1} parent=0 // pred_fallthru
    _

</llo_original>
